<compile_context>
chip_gen: v5e
topology: v5e:2x2
jax: 0.10.0
libtpu: 0.0.40
codegen_flags: <defaults>
</compile_context>

<pallas_src>
import functools

import numpy as np

import jax
import jax.numpy as jnp
from jax.experimental import pallas as pl
from jax.experimental.pallas import tpu as pltpu

_C1, _C2, _C3 = 16, 32, 46      # Conv3dBlock output channels
_NEG_SLOPE = 0.2                # nn.LeakyReLU(0.2)


def _round_up(x, m):
    return (x + m - 1) // m * m


# ---------------------------------------------------------------------------
# Fused kernel: conv1 -> pool1 -> conv2 -> pool2 -> conv3 (one sample / step)
# ---------------------------------------------------------------------------
def _metric_kernel(dims,
                   x_ref, a1_ref, a2_ref, a3_ref,
                   sr1_ref, sle1_ref, slo1_ref,
                   sr2_ref, sle2_ref, slo2_ref,
                   b1_ref, b2_ref, b3_ref,
                   o1_ref, o2_ref, o3_ref,
                   p1_ref, lhs2_ref, p2_ref, lhs3_ref):
    (S, PW1, PW2, L1, L2, R2P, O3R, PC1, PC2) = dims
    f32, bf16 = jnp.float32, jnp.bfloat16

    def mm(a, b):                       # bf16 x bf16 -> f32 on the MXU
        return jnp.dot(a, b, preferred_element_type=f32)

    def lrelu(v):                       # LeakyReLU(0.2), slope in (0,1)
        return jnp.maximum(v, _NEG_SLOPE * v)

    # ---------------- conv1 (taps folded into K) + BN + LeakyReLU ----------
    y1 = lrelu(mm(x_ref[0], a1_ref[...]) + b1_ref[...])        # (288, 256) f32
    o1_ref[0] = y1                                              # one full store

    # ---------------- maxpool1: row max (VPU) + 1 row-compaction matmul,
    #                  then even/odd lane-selection matmuls + max ------------
    rmax1 = jnp.maximum(
        jnp.maximum(o1_ref[0, 0:L1, :], o1_ref[0, 1:L1 + 1, :]),
        jnp.maximum(o1_ref[0, S:S + L1, :], o1_ref[0, S + 1:S + 1 + L1, :]))
    z1 = mm(sr1_ref[...], rmax1.astype(bf16))                   # (72, 256) f32
    z1b = z1.astype(bf16)
    p1 = jnp.maximum(mm(z1b, sle1_ref[...]), mm(z1b, slo1_ref[...]))  # (72,128)
    p1_ref[...] = p1.astype(bf16)                               # pooled-1, bf16

    # ---------------- conv2: all 9 taps folded into one K=1152 matmul ------
    for kd in range(3):
        for kh in range(3):
            t = kd * 3 + kh
            off = kd * PW1 + kh
            lhs2_ref[:, t * PC1:(t + 1) * PC1] = p1_ref[off:off + R2P, :]
    y2 = lrelu(mm(lhs2_ref[...], a2_ref[...]) + b2_ref[...])    # (48, 192) f32
    o2_ref[0] = y2                                              # one full store

    # ---------------- maxpool2 ----------------------------------------------
    rmax2 = jnp.maximum(
        jnp.maximum(o2_ref[0, 0:L2, :], o2_ref[0, 1:L2 + 1, :]),
        jnp.maximum(o2_ref[0, PW1:PW1 + L2, :],
                    o2_ref[0, PW1 + 1:PW1 + 1 + L2, :]))
    z2 = mm(sr2_ref[...], rmax2.astype(bf16))                   # (16, 192) f32
    z2b = z2.astype(bf16)
    p2 = jnp.maximum(mm(z2b, sle2_ref[...]), mm(z2b, slo2_ref[...]))  # (16,128)
    p2_ref[...] = p2.astype(bf16)                               # pooled-2, bf16

    # ---------------- conv3: all 9 taps folded into one K=1152 matmul ------
    for kd in range(3):
        for kh in range(3):
            t = kd * 3 + kh
            off = kd * PW2 + kh
            lhs3_ref[:, t * PC2:(t + 1) * PC2] = p2_ref[off:off + O3R, :]
    y3 = lrelu(mm(lhs3_ref[...], a3_ref[...]) + b3_ref[...])    # (3, 46) f32
    o3_ref[0] = y3


# ---------------------------------------------------------------------------
# Wrapper-side constant preparation (tiny; weights only)
# ---------------------------------------------------------------------------
def _prep_conv(w, scale, bias, w_out, pad_k=None):
    """Weight with all 9 (kd,kh) taps stacked along K, kw + channel mixing and
    the BatchNorm scale folded in.  Returns (A  (9*K_tap, w_out*cout) bf16,
    b (1, w_out*cout) f32)."""
    cout, cin, k = int(w.shape[0]), int(w.shape[1]), int(w.shape[2])
    w_in = w_out + k - 1
    we = (w * scale[:, None, None, None, None]).astype(jnp.float32)
    we = jnp.transpose(we, (2, 3, 4, 1, 0))              # (kd, kh, kw, cin, cout)
    sel = np.zeros((k, w_in, w_out), np.float32)
    for kw in range(k):
        for wo in range(w_out):
            sel[kw, wo + kw, wo] = 1.0
    a = jnp.einsum("kio,dekuc->deiuoc", jnp.asarray(sel), we)
    a = a.reshape(k * k, w_in * cin, w_out * cout)
    k_tap = w_in * cin
    if pad_k is not None and pad_k > k_tap:
        a = jnp.pad(a, ((0, 0), (0, pad_k - k_tap), (0, 0)))
        k_tap = pad_k
    a = a.reshape(k * k * k_tap, w_out * cout).astype(jnp.bfloat16)
    b = jnp.tile(bias.astype(jnp.float32), w_out).reshape(1, w_out * cout)
    return a, b


def _row_sel(n_out, row_stride, k_rows, out_rows):
    """0/1 row-compaction: picks row 2*d*row_stride + 2*h for output d*n_out+h."""
    m = np.zeros((out_rows, k_rows), np.float32)
    for d in range(n_out):
        for h in range(n_out):
            m[d * n_out + h, 2 * d * row_stride + 2 * h] = 1.0
    return jnp.asarray(m, jnp.bfloat16)


def _lane_sel(w_out, c, in_lanes, out_lanes):
    """0/1 even/odd w-block selection matrices (lane compaction of the pool)."""
    e = np.zeros((in_lanes, out_lanes), np.float32)
    o = np.zeros((in_lanes, out_lanes), np.float32)
    for w in range(w_out):
        for ch in range(c):
            e[(2 * w) * c + ch, w * c + ch] = 1.0
            o[(2 * w + 1) * c + ch, w * c + ch] = 1.0
    return jnp.asarray(e, jnp.bfloat16), jnp.asarray(o, jnp.bfloat16)


# ---------------------------------------------------------------------------
# Metric forward
# ---------------------------------------------------------------------------
@jax.jit
def metric_forward(x_ncdhw, params):
    """x_ncdhw: (N, 1, D, H, W) float32 NCDHW.  Returns (x_1, x_2, x) NCDHW."""
    N, Cin, D, H, W = x_ncdhw.shape
    assert Cin == 1 and D == H == W, "cubic single-channel input expected"
    S = D
    CW1, PW1 = S - 2, (S - 2) // 2
    CW2, PW2 = PW1 - 2, (PW1 - 2) // 2
    CW3 = PW2 - 2
    assert CW3 >= 1 and CW1 % 2 == 0 and CW2 % 2 == 0

    R1 = (CW1 - 1) * (S + 1) + 1            # conv1 rows actually needed (286)
    RP1 = CW1 * S                           # conv1 rows computed/stored (288)
    L1 = 2 * (PW1 - 1) * (S + 1) + 1        # rows entering pool1 compaction (267)
    R2P = CW2 * PW1                         # conv2 rows computed/stored (48)
    P1R = _round_up(max(PW1 * PW1, 2 * PW1 + 2 + R2P), 8)   # pooled-1 rows (72)
    L2 = 2 * (PW2 - 1) * (PW1 + 1) + 1      # rows entering pool2 compaction (37)
    O3R = CW3 * PW2                         # conv3 rows computed/stored (3)
    P2R = _round_up(max(PW2 * PW2, 2 * PW2 + 2 + O3R), 8)   # pooled-2 rows (16)
    PC1 = PW1 * _C1                         # pooled-1 lane width (128)
    PC2 = _round_up(PW2 * _C2, 128)         # pooled-2 lane width, padded (128)

    # conv1 LHS: rows = (d,h) output index, lanes = tap-major (kd,kh) x w.
    # (cheap XLA-side im2col; lane-dense bf16 input, fills the MXU K depth.)
    x_flat = x_ncdhw.reshape(N, S * S, S).astype(jnp.float32)
    taps = [x_flat[:, kd * S + kh: kd * S + kh + R1, :]
            for kd in range(3) for kh in range(3)]
    x_im2 = jnp.concatenate(taps, axis=-1)                       # (N, R1, 9*S)
    x_im2 = jnp.pad(x_im2, ((0, 0), (0, RP1 - R1), (0, 0)))      # (N, RP1, 9*S)
    x_im2 = x_im2.astype(jnp.bfloat16)

    a1, b1 = _prep_conv(params["w1"], params["s1"], params["b1"], CW1)
    a2, b2 = _prep_conv(params["w2"], params["s2"], params["b2"], CW2, pad_k=PC1)
    a3, b3 = _prep_conv(params["w3"], params["s3"], params["b3"], CW3, pad_k=PC2)

    SR1 = _row_sel(PW1, S, L1, P1R)                  # (72, 267)
    SLe1, SLo1 = _lane_sel(PW1, _C1, CW1 * _C1, PC1)  # (256, 128) x2
    SR2 = _row_sel(PW2, PW1, L2, P2R)                # (16, 37)
    SLe2, SLo2 = _lane_sel(PW2, _C2, CW2 * _C2, PC2)  # (192, 128) x2

    dims = (S, PW1, PW2, L1, L2, R2P, O3R, PC1, PC2)
    kernel = functools.partial(_metric_kernel, dims)

    out_shapes = (
        jax.ShapeDtypeStruct((N, RP1, CW1 * _C1), jnp.float32),
        jax.ShapeDtypeStruct((N, R2P, CW2 * _C2), jnp.float32),
        jax.ShapeDtypeStruct((N, O3R, CW3 * _C3), jnp.float32),
    )

    def per_n(shape):
        return pl.BlockSpec((1,) + tuple(shape[1:]),
                            lambda n: (n,) + (0,) * (len(shape) - 1))

    def const(shape):
        return pl.BlockSpec(tuple(shape), lambda n: (0, 0))

    o1, o2, o3 = pl.pallas_call(
        kernel,
        out_shape=out_shapes,
        grid=(N,),
        in_specs=[
            per_n(x_im2.shape),
            const(a1.shape), const(a2.shape), const(a3.shape),
            const(SR1.shape), const(SLe1.shape), const(SLo1.shape),
            const(SR2.shape), const(SLe2.shape), const(SLo2.shape),
            const(b1.shape), const(b2.shape), const(b3.shape),
        ],
        out_specs=tuple(per_n(s.shape) for s in out_shapes),
        scratch_shapes=[
            pltpu.VMEM((P1R, PC1), jnp.bfloat16),        # pooled-1 (bf16, once)
            pltpu.VMEM((R2P, 9 * PC1), jnp.bfloat16),    # conv2 folded-K LHS
            pltpu.VMEM((P2R, PC2), jnp.bfloat16),        # pooled-2 (bf16, once)
            pltpu.VMEM((O3R, 9 * PC2), jnp.bfloat16),    # conv3 folded-K LHS
        ],
        compiler_params=pltpu.CompilerParams(
            dimension_semantics=("parallel",)),
    )(x_im2, a1, a2, a3, SR1, SLe1, SLo1, SR2, SLe2, SLo2, b1, b2, b3)

    # rows = d*(old_w_extent) + h  -> reshape, drop the invalid h rows, NCDHW.
    x_1 = jnp.transpose(
        o1.reshape(N, CW1, S, CW1, _C1)[:, :, :CW1], (0, 4, 1, 2, 3))
    x_2 = jnp.transpose(
        o2.reshape(N, CW2, PW1, CW2, _C2)[:, :, :CW2], (0, 4, 1, 2, 3))
    x_3 = jnp.transpose(
        o3.reshape(N, CW3, PW2, CW3, _C3)[:, :, :CW3], (0, 4, 1, 2, 3))
    return x_1, x_2, x_3


def make_conv_bn_params(key, cin, cout, k=3, eps=1e-5):
    k1, k2, k3, k4 = jax.random.split(key, 4)
    w = 0.1 * jax.random.normal(k1, (cout, cin, k, k, k), jnp.float32)
    b_conv = 0.1 * jax.random.normal(k2, (cout,), jnp.float32)
    gamma = 1.0 + 0.1 * jax.random.normal(k3, (cout,), jnp.float32)
    beta = 0.1 * jax.random.normal(k4, (cout,), jnp.float32)
    running_mean = jnp.zeros((cout,), jnp.float32)       # PyTorch defaults
    running_var = jnp.ones((cout,), jnp.float32)
    scale = gamma / jnp.sqrt(running_var + eps)
    bias = (b_conv - running_mean) * scale + beta
    return w, scale, bias


if __name__ == "__main__":
    key = jax.random.PRNGKey(0)
    kx, kp1, kp2, kp3 = jax.random.split(key, 4)

    # Smallest cube that survives conv(3)/pool(2)/conv(3)/pool(2)/conv(3) is 18.
    N, D = 2, 18
    x = jax.random.normal(kx, (N, 1, D, D, D), jnp.float32)

    w1, s1, b1 = make_conv_bn_params(kp1, 1, _C1)
    w2, s2, b2 = make_conv_bn_params(kp2, _C1, _C2)
    w3, s3, b3 = make_conv_bn_params(kp3, _C2, _C3)
    params = dict(w1=w1, s1=s1, b1=b1,
                  w2=w2, s2=s2, b2=b2,
                  w3=w3, s3=s3, b3=b3)

    x_1, x_2, x_out = metric_forward(x, params)
    jax.block_until_ready((x_1, x_2, x_out))

    assert x_1.shape == (N, _C1, 16, 16, 16), x_1.shape
    assert x_2.shape == (N, _C2, 6, 6, 6), x_2.shape
    assert x_out.shape == (N, _C3, 1, 1, 1), x_out.shape
    print("KERNEL_OK")
</pallas_src>

<mosaic_0001>
module attributes {stable_mosaic.version = 11 : i64} {
  func.func @_metric_kernel(%arg0: i32, %arg1: memref<1x288x162xbf16, #tpu.memory_space<vmem>>, %arg2: memref<162x256xbf16, #tpu.memory_space<vmem>>, %arg3: memref<1152x192xbf16, #tpu.memory_space<vmem>>, %arg4: memref<1152x46xbf16, #tpu.memory_space<vmem>>, %arg5: memref<72x267xbf16, #tpu.memory_space<vmem>>, %arg6: memref<256x128xbf16, #tpu.memory_space<vmem>>, %arg7: memref<256x128xbf16, #tpu.memory_space<vmem>>, %arg8: memref<16x37xbf16, #tpu.memory_space<vmem>>, %arg9: memref<192x128xbf16, #tpu.memory_space<vmem>>, %arg10: memref<192x128xbf16, #tpu.memory_space<vmem>>, %arg11: memref<1x256xf32, #tpu.memory_space<vmem>>, %arg12: memref<1x192xf32, #tpu.memory_space<vmem>>, %arg13: memref<1x46xf32, #tpu.memory_space<vmem>>, %arg14: memref<1x288x256xf32, #tpu.memory_space<vmem>>, %arg15: memref<1x48x192xf32, #tpu.memory_space<vmem>>, %arg16: memref<1x3x46xf32, #tpu.memory_space<vmem>>, %arg17: memref<72x128xbf16, #tpu.memory_space<vmem>>, %arg18: memref<48x1152xbf16, #tpu.memory_space<vmem>>, %arg19: memref<16x128xbf16, #tpu.memory_space<vmem>>, %arg20: memref<3x1152xbf16, #tpu.memory_space<vmem>>) attributes {dimension_semantics = [#tpu.dimension_semantics<parallel>], iteration_bounds = array<i64: 2>, scalar_prefetch = 0 : i64, scratch_operands = 4 : i64, tpu.core_type = #tpu.core_type<tc>, window_params = [{transform_indices = @transform_0, window_bounds = array<i64: 1, 288, 162>}, {pipeline_mode = #tpu.pipeline_mode<synchronous>, transform_indices = @transform_1, window_bounds = array<i64: 162, 256>}, {pipeline_mode = #tpu.pipeline_mode<synchronous>, transform_indices = @transform_2, window_bounds = array<i64: 1152, 192>}, {pipeline_mode = #tpu.pipeline_mode<synchronous>, transform_indices = @transform_3, window_bounds = array<i64: 1152, 46>}, {pipeline_mode = #tpu.pipeline_mode<synchronous>, transform_indices = @transform_4, window_bounds = array<i64: 72, 267>}, {pipeline_mode = #tpu.pipeline_mode<synchronous>, transform_indices = @transform_5, window_bounds = array<i64: 256, 128>}, {pipeline_mode = #tpu.pipeline_mode<synchronous>, transform_indices = @transform_6, window_bounds = array<i64: 256, 128>}, {pipeline_mode = #tpu.pipeline_mode<synchronous>, transform_indices = @transform_7, window_bounds = array<i64: 16, 37>}, {pipeline_mode = #tpu.pipeline_mode<synchronous>, transform_indices = @transform_8, window_bounds = array<i64: 192, 128>}, {pipeline_mode = #tpu.pipeline_mode<synchronous>, transform_indices = @transform_9, window_bounds = array<i64: 192, 128>}, {pipeline_mode = #tpu.pipeline_mode<synchronous>, transform_indices = @transform_10, window_bounds = array<i64: 1, 256>}, {pipeline_mode = #tpu.pipeline_mode<synchronous>, transform_indices = @transform_11, window_bounds = array<i64: 1, 192>}, {pipeline_mode = #tpu.pipeline_mode<synchronous>, transform_indices = @transform_12, window_bounds = array<i64: 1, 46>}, {transform_indices = @transform_13, window_bounds = array<i64: 1, 288, 256>}, {transform_indices = @transform_14, window_bounds = array<i64: 1, 48, 192>}, {transform_indices = @transform_15, window_bounds = array<i64: 1, 3, 46>}]} {
    %c0 = arith.constant 0 : index
    %c0_0 = arith.constant 0 : index
    %c0_1 = arith.constant 0 : index
    %0 = vector.load %arg1[%c0, %c0_0, %c0_1] : memref<1x288x162xbf16, #tpu.memory_space<vmem>>, vector<1x288x162xbf16>
    %1 = vector.shape_cast %0 : vector<1x288x162xbf16> to vector<288x162xbf16>
    %c0_2 = arith.constant 0 : index
    %c0_3 = arith.constant 0 : index
    %2 = vector.load %arg2[%c0_2, %c0_3] : memref<162x256xbf16, #tpu.memory_space<vmem>>, vector<162x256xbf16>
    %cst = arith.constant dense<0.000000e+00> : vector<288x256xf32>
    %3 = tpu.matmul %1, %2, %cst {dimension_numbers = #tpu.dot_dimension_numbers<[1], [0], [0], [1], [0, 0, 1, 1], [], []>} : vector<288x162xbf16>, vector<162x256xbf16>, vector<288x256xf32> -> vector<288x256xf32>
    %c0_4 = arith.constant 0 : index
    %c0_5 = arith.constant 0 : index
    %4 = vector.load %arg11[%c0_4, %c0_5] : memref<1x256xf32, #tpu.memory_space<vmem>>, vector<1x256xf32>
    %5 = vector.broadcast %4 : vector<1x256xf32> to vector<288x256xf32>
    %6 = arith.addf %3, %5 : vector<288x256xf32>
    %cst_6 = arith.constant 2.000000e-01 : f32
    %7 = vector.broadcast %cst_6 : f32 to vector<288x256xf32>
    %8 = arith.mulf %7, %6 : vector<288x256xf32>
    %9 = arith.maximumf %6, %8 : vector<288x256xf32>
    %c0_7 = arith.constant 0 : index
    %c0_8 = arith.constant 0 : index
    %c0_9 = arith.constant 0 : index
    %10 = vector.load %arg14[%c0_7, %c0_8, %c0_9] : memref<1x288x256xf32, #tpu.memory_space<vmem>>, vector<1x288x256xf32>
    %11 = vector.shape_cast %10 : vector<1x288x256xf32> to vector<288x256xf32>
    %12 = vector.shape_cast %9 : vector<288x256xf32> to vector<1x288x256xf32>
    tpu.vector_store %arg14[%c0_7, %c0_8, %c0_9], %12 {strides = array<i32>} : memref<1x288x256xf32, #tpu.memory_space<vmem>>, vector<1x288x256xf32>,
    %c0_10 = arith.constant 0 : index
    %c0_11 = arith.constant 0 : index
    %c0_12 = arith.constant 0 : index
    %13 = vector.load %arg14[%c0_10, %c0_11, %c0_12] : memref<1x288x256xf32, #tpu.memory_space<vmem>>, vector<1x267x256xf32>
    %14 = vector.shape_cast %13 : vector<1x267x256xf32> to vector<267x256xf32>
    %c0_13 = arith.constant 0 : index
    %c1 = arith.constant 1 : index
    %c0_14 = arith.constant 0 : index
    %15 = vector.load %arg14[%c0_13, %c1, %c0_14] : memref<1x288x256xf32, #tpu.memory_space<vmem>>, vector<1x267x256xf32>
    %16 = vector.shape_cast %15 : vector<1x267x256xf32> to vector<267x256xf32>
    %17 = arith.maximumf %14, %16 : vector<267x256xf32>
    %c0_15 = arith.constant 0 : index
    %c18 = arith.constant 18 : index
    %c0_16 = arith.constant 0 : index
    %18 = vector.load %arg14[%c0_15, %c18, %c0_16] : memref<1x288x256xf32, #tpu.memory_space<vmem>>, vector<1x267x256xf32>
    %19 = vector.shape_cast %18 : vector<1x267x256xf32> to vector<267x256xf32>
    %c0_17 = arith.constant 0 : index
    %c19 = arith.constant 19 : index
    %c0_18 = arith.constant 0 : index
    %20 = vector.load %arg14[%c0_17, %c19, %c0_18] : memref<1x288x256xf32, #tpu.memory_space<vmem>>, vector<1x267x256xf32>
    %21 = vector.shape_cast %20 : vector<1x267x256xf32> to vector<267x256xf32>
    %22 = arith.maximumf %19, %21 : vector<267x256xf32>
    %23 = arith.maximumf %17, %22 : vector<267x256xf32>
    %c0_19 = arith.constant 0 : index
    %c0_20 = arith.constant 0 : index
    %24 = vector.load %arg5[%c0_19, %c0_20] : memref<72x267xbf16, #tpu.memory_space<vmem>>, vector<72x267xbf16>
    %25 = arith.truncf %23 : vector<267x256xf32> to vector<267x256xbf16>
    %cst_21 = arith.constant dense<0.000000e+00> : vector<72x256xf32>
    %26 = tpu.matmul %24, %25, %cst_21 {dimension_numbers = #tpu.dot_dimension_numbers<[1], [0], [0], [1], [0, 0, 1, 1], [], []>} : vector<72x267xbf16>, vector<267x256xbf16>, vector<72x256xf32> -> vector<72x256xf32>
    %27 = arith.truncf %26 : vector<72x256xf32> to vector<72x256xbf16>
    %c0_22 = arith.constant 0 : index
    %c0_23 = arith.constant 0 : index
    %28 = vector.load %arg6[%c0_22, %c0_23] : memref<256x128xbf16, #tpu.memory_space<vmem>>, vector<256x128xbf16>
    %cst_24 = arith.constant dense<0.000000e+00> : vector<72x128xf32>
    %29 = tpu.matmul %27, %28, %cst_24 {dimension_numbers = #tpu.dot_dimension_numbers<[1], [0], [0], [1], [0, 0, 1, 1], [], []>} : vector<72x256xbf16>, vector<256x128xbf16>, vector<72x128xf32> -> vector<72x128xf32>
    %c0_25 = arith.constant 0 : index
    %c0_26 = arith.constant 0 : index
    %30 = vector.load %arg7[%c0_25, %c0_26] : memref<256x128xbf16, #tpu.memory_space<vmem>>, vector<256x128xbf16>
    %cst_27 = arith.constant dense<0.000000e+00> : vector<72x128xf32>
    %31 = tpu.matmul %27, %30, %cst_27 {dimension_numbers = #tpu.dot_dimension_numbers<[1], [0], [0], [1], [0, 0, 1, 1], [], []>} : vector<72x256xbf16>, vector<256x128xbf16>, vector<72x128xf32> -> vector<72x128xf32>
    %32 = arith.maximumf %29, %31 : vector<72x128xf32>
    %33 = arith.truncf %32 : vector<72x128xf32> to vector<72x128xbf16>
    %c0_28 = arith.constant 0 : index
    %c0_29 = arith.constant 0 : index
    %34 = vector.load %arg17[%c0_28, %c0_29] : memref<72x128xbf16, #tpu.memory_space<vmem>>, vector<72x128xbf16>
    tpu.vector_store %arg17[%c0_28, %c0_29], %33 {strides = array<i32>} : memref<72x128xbf16, #tpu.memory_space<vmem>>, vector<72x128xbf16>,
    %c0_30 = arith.constant 0 : index
    %c0_31 = arith.constant 0 : index
    %35 = vector.load %arg17[%c0_30, %c0_31] : memref<72x128xbf16, #tpu.memory_space<vmem>>, vector<48x128xbf16>
    %c0_32 = arith.constant 0 : index
    %c0_33 = arith.constant 0 : index
    %36 = vector.load %arg18[%c0_32, %c0_33] : memref<48x1152xbf16, #tpu.memory_space<vmem>>, vector<48x128xbf16>
    tpu.vector_store %arg18[%c0_32, %c0_33], %35 {strides = array<i32>} : memref<48x1152xbf16, #tpu.memory_space<vmem>>, vector<48x128xbf16>,
    %c1_34 = arith.constant 1 : index
    %c0_35 = arith.constant 0 : index
    %37 = vector.load %arg17[%c1_34, %c0_35] : memref<72x128xbf16, #tpu.memory_space<vmem>>, vector<48x128xbf16>
    %c0_36 = arith.constant 0 : index
    %c128 = arith.constant 128 : index
    %38 = vector.load %arg18[%c0_36, %c128] : memref<48x1152xbf16, #tpu.memory_space<vmem>>, vector<48x128xbf16>
    tpu.vector_store %arg18[%c0_36, %c128], %37 {strides = array<i32>} : memref<48x1152xbf16, #tpu.memory_space<vmem>>, vector<48x128xbf16>,
    %c2 = arith.constant 2 : index
    %c0_37 = arith.constant 0 : index
    %39 = vector.load %arg17[%c2, %c0_37] : memref<72x128xbf16, #tpu.memory_space<vmem>>, vector<48x128xbf16>
    %c0_38 = arith.constant 0 : index
    %c256 = arith.constant 256 : index
    %40 = vector.load %arg18[%c0_38, %c256] : memref<48x1152xbf16, #tpu.memory_space<vmem>>, vector<48x128xbf16>
    tpu.vector_store %arg18[%c0_38, %c256], %39 {strides = array<i32>} : memref<48x1152xbf16, #tpu.memory_space<vmem>>, vector<48x128xbf16>,
    %c8 = arith.constant 8 : index
    %c0_39 = arith.constant 0 : index
    %41 = vector.load %arg17[%c8, %c0_39] : memref<72x128xbf16, #tpu.memory_space<vmem>>, vector<48x128xbf16>
    %c0_40 = arith.constant 0 : index
    %c384 = arith.constant 384 : index
    %42 = vector.load %arg18[%c0_40, %c384] : memref<48x1152xbf16, #tpu.memory_space<vmem>>, vector<48x128xbf16>
    tpu.vector_store %arg18[%c0_40, %c384], %41 {strides = array<i32>} : memref<48x1152xbf16, #tpu.memory_space<vmem>>, vector<48x128xbf16>,
    %c9 = arith.constant 9 : index
    %c0_41 = arith.constant 0 : index
    %43 = vector.load %arg17[%c9, %c0_41] : memref<72x128xbf16, #tpu.memory_space<vmem>>, vector<48x128xbf16>
    %c0_42 = arith.constant 0 : index
    %c512 = arith.constant 512 : index
    %44 = vector.load %arg18[%c0_42, %c512] : memref<48x1152xbf16, #tpu.memory_space<vmem>>, vector<48x128xbf16>
    tpu.vector_store %arg18[%c0_42, %c512], %43 {strides = array<i32>} : memref<48x1152xbf16, #tpu.memory_space<vmem>>, vector<48x128xbf16>,
    %c10 = arith.constant 10 : index
    %c0_43 = arith.constant 0 : index
    %45 = vector.load %arg17[%c10, %c0_43] : memref<72x128xbf16, #tpu.memory_space<vmem>>, vector<48x128xbf16>
    %c0_44 = arith.constant 0 : index
    %c640 = arith.constant 640 : index
    %46 = vector.load %arg18[%c0_44, %c640] : memref<48x1152xbf16, #tpu.memory_space<vmem>>, vector<48x128xbf16>
    tpu.vector_store %arg18[%c0_44, %c640], %45 {strides = array<i32>} : memref<48x1152xbf16, #tpu.memory_space<vmem>>, vector<48x128xbf16>,
    %c16 = arith.constant 16 : index
    %c0_45 = arith.constant 0 : index
    %47 = vector.load %arg17[%c16, %c0_45] : memref<72x128xbf16, #tpu.memory_space<vmem>>, vector<48x128xbf16>
    %c0_46 = arith.constant 0 : index
    %c768 = arith.constant 768 : index
    %48 = vector.load %arg18[%c0_46, %c768] : memref<48x1152xbf16, #tpu.memory_space<vmem>>, vector<48x128xbf16>
    tpu.vector_store %arg18[%c0_46, %c768], %47 {strides = array<i32>} : memref<48x1152xbf16, #tpu.memory_space<vmem>>, vector<48x128xbf16>,
    %c17 = arith.constant 17 : index
    %c0_47 = arith.constant 0 : index
    %49 = vector.load %arg17[%c17, %c0_47] : memref<72x128xbf16, #tpu.memory_space<vmem>>, vector<48x128xbf16>
    %c0_48 = arith.constant 0 : index
    %c896 = arith.constant 896 : index
    %50 = vector.load %arg18[%c0_48, %c896] : memref<48x1152xbf16, #tpu.memory_space<vmem>>, vector<48x128xbf16>
    tpu.vector_store %arg18[%c0_48, %c896], %49 {strides = array<i32>} : memref<48x1152xbf16, #tpu.memory_space<vmem>>, vector<48x128xbf16>,
    %c18_49 = arith.constant 18 : index
    %c0_50 = arith.constant 0 : index
    %51 = vector.load %arg17[%c18_49, %c0_50] : memref<72x128xbf16, #tpu.memory_space<vmem>>, vector<48x128xbf16>
    %c0_51 = arith.constant 0 : index
    %c1024 = arith.constant 1024 : index
    %52 = vector.load %arg18[%c0_51, %c1024] : memref<48x1152xbf16, #tpu.memory_space<vmem>>, vector<48x128xbf16>
    tpu.vector_store %arg18[%c0_51, %c1024], %51 {strides = array<i32>} : memref<48x1152xbf16, #tpu.memory_space<vmem>>, vector<48x128xbf16>,
    %c0_52 = arith.constant 0 : index
    %c0_53 = arith.constant 0 : index
    %53 = vector.load %arg18[%c0_52, %c0_53] : memref<48x1152xbf16, #tpu.memory_space<vmem>>, vector<48x1152xbf16>
    %c0_54 = arith.constant 0 : index
    %c0_55 = arith.constant 0 : index
    %54 = vector.load %arg3[%c0_54, %c0_55] : memref<1152x192xbf16, #tpu.memory_space<vmem>>, vector<1152x192xbf16>
    %cst_56 = arith.constant dense<0.000000e+00> : vector<48x192xf32>
    %55 = tpu.matmul %53, %54, %cst_56 {dimension_numbers = #tpu.dot_dimension_numbers<[1], [0], [0], [1], [0, 0, 1, 1], [], []>} : vector<48x1152xbf16>, vector<1152x192xbf16>, vector<48x192xf32> -> vector<48x192xf32>
    %c0_57 = arith.constant 0 : index
    %c0_58 = arith.constant 0 : index
    %56 = vector.load %arg12[%c0_57, %c0_58] : memref<1x192xf32, #tpu.memory_space<vmem>>, vector<1x192xf32>
    %57 = vector.broadcast %56 : vector<1x192xf32> to vector<48x192xf32>
    %58 = arith.addf %55, %57 : vector<48x192xf32>
    %cst_59 = arith.constant 2.000000e-01 : f32
    %59 = vector.broadcast %cst_59 : f32 to vector<48x192xf32>
    %60 = arith.mulf %59, %58 : vector<48x192xf32>
    %61 = arith.maximumf %58, %60 : vector<48x192xf32>
    %c0_60 = arith.constant 0 : index
    %c0_61 = arith.constant 0 : index
    %c0_62 = arith.constant 0 : index
    %62 = vector.load %arg15[%c0_60, %c0_61, %c0_62] : memref<1x48x192xf32, #tpu.memory_space<vmem>>, vector<1x48x192xf32>
    %63 = vector.shape_cast %62 : vector<1x48x192xf32> to vector<48x192xf32>
    %64 = vector.shape_cast %61 : vector<48x192xf32> to vector<1x48x192xf32>
    tpu.vector_store %arg15[%c0_60, %c0_61, %c0_62], %64 {strides = array<i32>} : memref<1x48x192xf32, #tpu.memory_space<vmem>>, vector<1x48x192xf32>,
    %c0_63 = arith.constant 0 : index
    %c0_64 = arith.constant 0 : index
    %c0_65 = arith.constant 0 : index
    %65 = vector.load %arg15[%c0_63, %c0_64, %c0_65] : memref<1x48x192xf32, #tpu.memory_space<vmem>>, vector<1x37x192xf32>
    %66 = vector.shape_cast %65 : vector<1x37x192xf32> to vector<37x192xf32>
    %c0_66 = arith.constant 0 : index
    %c1_67 = arith.constant 1 : index
    %c0_68 = arith.constant 0 : index
    %67 = vector.load %arg15[%c0_66, %c1_67, %c0_68] : memref<1x48x192xf32, #tpu.memory_space<vmem>>, vector<1x37x192xf32>
    %68 = vector.shape_cast %67 : vector<1x37x192xf32> to vector<37x192xf32>
    %69 = arith.maximumf %66, %68 : vector<37x192xf32>
    %c0_69 = arith.constant 0 : index
    %c8_70 = arith.constant 8 : index
    %c0_71 = arith.constant 0 : index
    %70 = vector.load %arg15[%c0_69, %c8_70, %c0_71] : memref<1x48x192xf32, #tpu.memory_space<vmem>>, vector<1x37x192xf32>
    %71 = vector.shape_cast %70 : vector<1x37x192xf32> to vector<37x192xf32>
    %c0_72 = arith.constant 0 : index
    %c9_73 = arith.constant 9 : index
    %c0_74 = arith.constant 0 : index
    %72 = vector.load %arg15[%c0_72, %c9_73, %c0_74] : memref<1x48x192xf32, #tpu.memory_space<vmem>>, vector<1x37x192xf32>
    %73 = vector.shape_cast %72 : vector<1x37x192xf32> to vector<37x192xf32>
    %74 = arith.maximumf %71, %73 : vector<37x192xf32>
    %75 = arith.maximumf %69, %74 : vector<37x192xf32>
    %c0_75 = arith.constant 0 : index
    %c0_76 = arith.constant 0 : index
    %76 = vector.load %arg8[%c0_75, %c0_76] : memref<16x37xbf16, #tpu.memory_space<vmem>>, vector<16x37xbf16>
    %77 = arith.truncf %75 : vector<37x192xf32> to vector<37x192xbf16>
    %cst_77 = arith.constant dense<0.000000e+00> : vector<16x192xf32>
    %78 = tpu.matmul %76, %77, %cst_77 {dimension_numbers = #tpu.dot_dimension_numbers<[1], [0], [0], [1], [0, 0, 1, 1], [], []>} : vector<16x37xbf16>, vector<37x192xbf16>, vector<16x192xf32> -> vector<16x192xf32>
    %79 = arith.truncf %78 : vector<16x192xf32> to vector<16x192xbf16>
    %c0_78 = arith.constant 0 : index
    %c0_79 = arith.constant 0 : index
    %80 = vector.load %arg9[%c0_78, %c0_79] : memref<192x128xbf16, #tpu.memory_space<vmem>>, vector<192x128xbf16>
    %cst_80 = arith.constant dense<0.000000e+00> : vector<16x128xf32>
    %81 = tpu.matmul %79, %80, %cst_80 {dimension_numbers = #tpu.dot_dimension_numbers<[1], [0], [0], [1], [0, 0, 1, 1], [], []>} : vector<16x192xbf16>, vector<192x128xbf16>, vector<16x128xf32> -> vector<16x128xf32>
    %c0_81 = arith.constant 0 : index
    %c0_82 = arith.constant 0 : index
    %82 = vector.load %arg10[%c0_81, %c0_82] : memref<192x128xbf16, #tpu.memory_space<vmem>>, vector<192x128xbf16>
    %cst_83 = arith.constant dense<0.000000e+00> : vector<16x128xf32>
    %83 = tpu.matmul %79, %82, %cst_83 {dimension_numbers = #tpu.dot_dimension_numbers<[1], [0], [0], [1], [0, 0, 1, 1], [], []>} : vector<16x192xbf16>, vector<192x128xbf16>, vector<16x128xf32> -> vector<16x128xf32>
    %84 = arith.maximumf %81, %83 : vector<16x128xf32>
    %85 = arith.truncf %84 : vector<16x128xf32> to vector<16x128xbf16>
    %c0_84 = arith.constant 0 : index
    %c0_85 = arith.constant 0 : index
    %86 = vector.load %arg19[%c0_84, %c0_85] : memref<16x128xbf16, #tpu.memory_space<vmem>>, vector<16x128xbf16>
    tpu.vector_store %arg19[%c0_84, %c0_85], %85 {strides = array<i32>} : memref<16x128xbf16, #tpu.memory_space<vmem>>, vector<16x128xbf16>,
    %c0_86 = arith.constant 0 : index
    %c0_87 = arith.constant 0 : index
    %87 = vector.load %arg19[%c0_86, %c0_87] : memref<16x128xbf16, #tpu.memory_space<vmem>>, vector<3x128xbf16>
    %c0_88 = arith.constant 0 : index
    %c0_89 = arith.constant 0 : index
    %88 = vector.load %arg20[%c0_88, %c0_89] : memref<3x1152xbf16, #tpu.memory_space<vmem>>, vector<3x128xbf16>
    tpu.vector_store %arg20[%c0_88, %c0_89], %87 {strides = array<i32>} : memref<3x1152xbf16, #tpu.memory_space<vmem>>, vector<3x128xbf16>,
    %c1_90 = arith.constant 1 : index
    %c0_91 = arith.constant 0 : index
    %89 = vector.load %arg19[%c1_90, %c0_91] : memref<16x128xbf16, #tpu.memory_space<vmem>>, vector<3x128xbf16>
    %c0_92 = arith.constant 0 : index
    %c128_93 = arith.constant 128 : index
    %90 = vector.load %arg20[%c0_92, %c128_93] : memref<3x1152xbf16, #tpu.memory_space<vmem>>, vector<3x128xbf16>
    tpu.vector_store %arg20[%c0_92, %c128_93], %89 {strides = array<i32>} : memref<3x1152xbf16, #tpu.memory_space<vmem>>, vector<3x128xbf16>,
    %c2_94 = arith.constant 2 : index
    %c0_95 = arith.constant 0 : index
    %91 = vector.load %arg19[%c2_94, %c0_95] : memref<16x128xbf16, #tpu.memory_space<vmem>>, vector<3x128xbf16>
    %c0_96 = arith.constant 0 : index
    %c256_97 = arith.constant 256 : index
    %92 = vector.load %arg20[%c0_96, %c256_97] : memref<3x1152xbf16, #tpu.memory_space<vmem>>, vector<3x128xbf16>
    tpu.vector_store %arg20[%c0_96, %c256_97], %91 {strides = array<i32>} : memref<3x1152xbf16, #tpu.memory_space<vmem>>, vector<3x128xbf16>,
    %c3 = arith.constant 3 : index
    %c0_98 = arith.constant 0 : index
    %93 = vector.load %arg19[%c3, %c0_98] : memref<16x128xbf16, #tpu.memory_space<vmem>>, vector<3x128xbf16>
    %c0_99 = arith.constant 0 : index
    %c384_100 = arith.constant 384 : index
    %94 = vector.load %arg20[%c0_99, %c384_100] : memref<3x1152xbf16, #tpu.memory_space<vmem>>, vector<3x128xbf16>
    tpu.vector_store %arg20[%c0_99, %c384_100], %93 {strides = array<i32>} : memref<3x1152xbf16, #tpu.memory_space<vmem>>, vector<3x128xbf16>,
    %c4 = arith.constant 4 : index
    %c0_101 = arith.constant 0 : index
    %95 = vector.load %arg19[%c4, %c0_101] : memref<16x128xbf16, #tpu.memory_space<vmem>>, vector<3x128xbf16>
    %c0_102 = arith.constant 0 : index
    %c512_103 = arith.constant 512 : index
    %96 = vector.load %arg20[%c0_102, %c512_103] : memref<3x1152xbf16, #tpu.memory_space<vmem>>, vector<3x128xbf16>
    tpu.vector_store %arg20[%c0_102, %c512_103], %95 {strides = array<i32>} : memref<3x1152xbf16, #tpu.memory_space<vmem>>, vector<3x128xbf16>,
    %c5 = arith.constant 5 : index
    %c0_104 = arith.constant 0 : index
    %97 = vector.load %arg19[%c5, %c0_104] : memref<16x128xbf16, #tpu.memory_space<vmem>>, vector<3x128xbf16>
    %c0_105 = arith.constant 0 : index
    %c640_106 = arith.constant 640 : index
    %98 = vector.load %arg20[%c0_105, %c640_106] : memref<3x1152xbf16, #tpu.memory_space<vmem>>, vector<3x128xbf16>
    tpu.vector_store %arg20[%c0_105, %c640_106], %97 {strides = array<i32>} : memref<3x1152xbf16, #tpu.memory_space<vmem>>, vector<3x128xbf16>,
    %c6 = arith.constant 6 : index
    %c0_107 = arith.constant 0 : index
    %99 = vector.load %arg19[%c6, %c0_107] : memref<16x128xbf16, #tpu.memory_space<vmem>>, vector<3x128xbf16>
    %c0_108 = arith.constant 0 : index
    %c768_109 = arith.constant 768 : index
    %100 = vector.load %arg20[%c0_108, %c768_109] : memref<3x1152xbf16, #tpu.memory_space<vmem>>, vector<3x128xbf16>
    tpu.vector_store %arg20[%c0_108, %c768_109], %99 {strides = array<i32>} : memref<3x1152xbf16, #tpu.memory_space<vmem>>, vector<3x128xbf16>,
    %c7 = arith.constant 7 : index
    %c0_110 = arith.constant 0 : index
    %101 = vector.load %arg19[%c7, %c0_110] : memref<16x128xbf16, #tpu.memory_space<vmem>>, vector<3x128xbf16>
    %c0_111 = arith.constant 0 : index
    %c896_112 = arith.constant 896 : index
    %102 = vector.load %arg20[%c0_111, %c896_112] : memref<3x1152xbf16, #tpu.memory_space<vmem>>, vector<3x128xbf16>
    tpu.vector_store %arg20[%c0_111, %c896_112], %101 {strides = array<i32>} : memref<3x1152xbf16, #tpu.memory_space<vmem>>, vector<3x128xbf16>,
    %c8_113 = arith.constant 8 : index
    %c0_114 = arith.constant 0 : index
    %103 = vector.load %arg19[%c8_113, %c0_114] : memref<16x128xbf16, #tpu.memory_space<vmem>>, vector<3x128xbf16>
    %c0_115 = arith.constant 0 : index
    %c1024_116 = arith.constant 1024 : index
    %104 = vector.load %arg20[%c0_115, %c1024_116] : memref<3x1152xbf16, #tpu.memory_space<vmem>>, vector<3x128xbf16>
    tpu.vector_store %arg20[%c0_115, %c1024_116], %103 {strides = array<i32>} : memref<3x1152xbf16, #tpu.memory_space<vmem>>, vector<3x128xbf16>,
    %c0_117 = arith.constant 0 : index
    %c0_118 = arith.constant 0 : index
    %105 = vector.load %arg20[%c0_117, %c0_118] : memref<3x1152xbf16, #tpu.memory_space<vmem>>, vector<3x1152xbf16>
    %c0_119 = arith.constant 0 : index
    %c0_120 = arith.constant 0 : index
    %106 = vector.load %arg4[%c0_119, %c0_120] : memref<1152x46xbf16, #tpu.memory_space<vmem>>, vector<1152x46xbf16>
    %cst_121 = arith.constant dense<0.000000e+00> : vector<3x46xf32>
    %107 = tpu.matmul %105, %106, %cst_121 {dimension_numbers = #tpu.dot_dimension_numbers<[1], [0], [0], [1], [0, 0, 1, 1], [], []>} : vector<3x1152xbf16>, vector<1152x46xbf16>, vector<3x46xf32> -> vector<3x46xf32>
    %c0_122 = arith.constant 0 : index
    %c0_123 = arith.constant 0 : index
    %108 = vector.load %arg13[%c0_122, %c0_123] : memref<1x46xf32, #tpu.memory_space<vmem>>, vector<1x46xf32>
    %109 = vector.broadcast %108 : vector<1x46xf32> to vector<3x46xf32>
    %110 = arith.addf %107, %109 : vector<3x46xf32>
    %cst_124 = arith.constant 2.000000e-01 : f32
    %111 = vector.broadcast %cst_124 : f32 to vector<3x46xf32>
    %112 = arith.mulf %111, %110 : vector<3x46xf32>
    %113 = arith.maximumf %110, %112 : vector<3x46xf32>
    %c0_125 = arith.constant 0 : index
    %c0_126 = arith.constant 0 : index
    %c0_127 = arith.constant 0 : index
    %114 = vector.load %arg16[%c0_125, %c0_126, %c0_127] : memref<1x3x46xf32, #tpu.memory_space<vmem>>, vector<1x3x46xf32>
    %115 = vector.shape_cast %114 : vector<1x3x46xf32> to vector<3x46xf32>
    %116 = vector.shape_cast %113 : vector<3x46xf32> to vector<1x3x46xf32>
    tpu.vector_store %arg16[%c0_125, %c0_126, %c0_127], %116 {strides = array<i32>} : memref<1x3x46xf32, #tpu.memory_space<vmem>>, vector<1x3x46xf32>,
    return
  }
  func.func @transform_0(%arg0: i32) -> (i32, i32, i32) {
    %c0_i32 = arith.constant 0 : i32
    %c0_i32_0 = arith.constant 0 : i32
    %c0_i32_1 = arith.constant 0 : i32
    return %arg0, %c0_i32, %c0_i32_0 : i32, i32, i32
  }
  func.func @transform_1(%arg0: i32) -> (i32, i32) {
    %c0_i32 = arith.constant 0 : i32
    %c0_i32_0 = arith.constant 0 : i32
    %c0_i32_1 = arith.constant 0 : i32
    return %c0_i32, %c0_i32_0 : i32, i32
  }
  func.func @transform_2(%arg0: i32) -> (i32, i32) {
    %c0_i32 = arith.constant 0 : i32
    %c0_i32_0 = arith.constant 0 : i32
    %c0_i32_1 = arith.constant 0 : i32
    return %c0_i32, %c0_i32_0 : i32, i32
  }
  func.func @transform_3(%arg0: i32) -> (i32, i32) {
    %c0_i32 = arith.constant 0 : i32
    %c0_i32_0 = arith.constant 0 : i32
    %c0_i32_1 = arith.constant 0 : i32
    return %c0_i32, %c0_i32_0 : i32, i32
  }
  func.func @transform_4(%arg0: i32) -> (i32, i32) {
    %c0_i32 = arith.constant 0 : i32
    %c0_i32_0 = arith.constant 0 : i32
    %c0_i32_1 = arith.constant 0 : i32
    return %c0_i32, %c0_i32_0 : i32, i32
  }
  func.func @transform_5(%arg0: i32) -> (i32, i32) {
    %c0_i32 = arith.constant 0 : i32
    %c0_i32_0 = arith.constant 0 : i32
    %c0_i32_1 = arith.constant 0 : i32
    return %c0_i32, %c0_i32_0 : i32, i32
  }
  func.func @transform_6(%arg0: i32) -> (i32, i32) {
    %c0_i32 = arith.constant 0 : i32
    %c0_i32_0 = arith.constant 0 : i32
    %c0_i32_1 = arith.constant 0 : i32
    return %c0_i32, %c0_i32_0 : i32, i32
  }
  func.func @transform_7(%arg0: i32) -> (i32, i32) {
    %c0_i32 = arith.constant 0 : i32
    %c0_i32_0 = arith.constant 0 : i32
    %c0_i32_1 = arith.constant 0 : i32
    return %c0_i32, %c0_i32_0 : i32, i32
  }
  func.func @transform_8(%arg0: i32) -> (i32, i32) {
    %c0_i32 = arith.constant 0 : i32
    %c0_i32_0 = arith.constant 0 : i32
    %c0_i32_1 = arith.constant 0 : i32
    return %c0_i32, %c0_i32_0 : i32, i32
  }
  func.func @transform_9(%arg0: i32) -> (i32, i32) {
    %c0_i32 = arith.constant 0 : i32
    %c0_i32_0 = arith.constant 0 : i32
    %c0_i32_1 = arith.constant 0 : i32
    return %c0_i32, %c0_i32_0 : i32, i32
  }
  func.func @transform_10(%arg0: i32) -> (i32, i32) {
    %c0_i32 = arith.constant 0 : i32
    %c0_i32_0 = arith.constant 0 : i32
    %c0_i32_1 = arith.constant 0 : i32
    return %c0_i32, %c0_i32_0 : i32, i32
  }
  func.func @transform_11(%arg0: i32) -> (i32, i32) {
    %c0_i32 = arith.constant 0 : i32
    %c0_i32_0 = arith.constant 0 : i32
    %c0_i32_1 = arith.constant 0 : i32
    return %c0_i32, %c0_i32_0 : i32, i32
  }
  func.func @transform_12(%arg0: i32) -> (i32, i32) {
    %c0_i32 = arith.constant 0 : i32
    %c0_i32_0 = arith.constant 0 : i32
    %c0_i32_1 = arith.constant 0 : i32
    return %c0_i32, %c0_i32_0 : i32, i32
  }
  func.func @transform_13(%arg0: i32) -> (i32, i32, i32) {
    %c0_i32 = arith.constant 0 : i32
    %c0_i32_0 = arith.constant 0 : i32
    %c0_i32_1 = arith.constant 0 : i32
    return %arg0, %c0_i32, %c0_i32_0 : i32, i32, i32
  }
  func.func @transform_14(%arg0: i32) -> (i32, i32, i32) {
    %c0_i32 = arith.constant 0 : i32
    %c0_i32_0 = arith.constant 0 : i32
    %c0_i32_1 = arith.constant 0 : i32
    return %arg0, %c0_i32, %c0_i32_0 : i32, i32, i32
  }
  func.func @transform_15(%arg0: i32) -> (i32, i32, i32) {
    %c0_i32 = arith.constant 0 : i32
    %c0_i32_0 = arith.constant 0 : i32
    %c0_i32_1 = arith.constant 0 : i32
    return %arg0, %c0_i32, %c0_i32_0 : i32, i32, i32
  }
}

</mosaic_0001>

<llo_original>
// kernel: tile.14
$region0: #{tile.14}
  #allocation0 [shape = 's32[1]{0}', space=sflag, size = 0x4, scoped, tag = 'scoped memory for tile.14']
  %s0 = inlined_call_operand.vmem [shape: f32[16], index: 0, kind: input, shape index: {}]
  %s1 = inlined_call_operand.vmem [shape: f32[16,16], index: 1, kind: output, shape index: {}]
  // Predicated region
  $region2: #{tile.14} parent=0 // pred_check
    _
  $region3: #{tile.14} parent=0 // pred_check_branch
    %3 = sbr.rel (0) target = $region5
  $region4: #{tile.14} parent=0 // pred_region
    _
  $region5: #{tile.14} parent=0 // pred_fallthru
    _
  %v4 = vld [vmem:[%s0] ss:$0 sm:$0xff]
  %5 = vst [vmem:[%s1] sm:$0xff] %v4
  %s6 = scalar_lea.vmem %s1, 8
  %7 = vst [vmem:[%s6] sm:$0xff] %v4

// kernel: tile.15
$region0: #{tile.15}
  %s0 = inlined_call_operand.vmem [shape: f32[16,16], index: 0, kind: input, shape index: {}]
  %s1 = inlined_call_operand.vmem [shape: f32[1,256], index: 1, kind: output, shape index: {}]
  $region1: #{tile.15} parent=0
    #allocation0 [shape = 'u8[8192]{0}', space=vmem, size = 0x2000, scoped, tag = 'scoped mem for output reshape']
    %s2 = smov 3
    %v3 = vld [vmem:[%s0] ss:$8 sm:%s2]
    %vm4 = vcmask 130048
    %5 = vst.msk [vmem:[#allocation0] ss:$8 sm:$0x3] %vm4, %v3
    %s6 = scalar_lea.vmem %s0, 7
    %s7 = smov 3
    %v8 = vld [vmem:[%s6] ss:$8 sm:%s7]
    %9 = vrot.lane.b32.xlu0 %v8, 112
    %v10 = vpop.permute.xlu0 %9
    %vm11 = vcmask 1048448
    %12 = vst.msk [vmem:[#allocation0] ss:$8 sm:$0x3] %vm11, %v10
    %s13 = scalar_lea.vmem %s0, 6
    %s14 = smov 3
    %v15 = vld [vmem:[%s13] ss:$8 sm:%s14]
    %16 = vrot.lane.b32.xlu0 %v15, 96
    %v17 = vpop.permute.xlu0 %16
    %vm18 = vcmask 917248
    %19 = vst.msk [vmem:[#allocation0] ss:$8 sm:$0x3] %vm18, %v17
    %s20 = scalar_lea.vmem %s0, 5
    %s21 = smov 3
    %v22 = vld [vmem:[%s20] ss:$8 sm:%s21]
    %23 = vrot.lane.b32.xlu0 %v22, 80
    %v24 = vpop.permute.xlu0 %23
    %vm25 = vcmask 786048
    %26 = vst.msk [vmem:[#allocation0] ss:$8 sm:$0x3] %vm25, %v24
    %s27 = scalar_lea.vmem %s0, 4
    %s28 = smov 3
    %v29 = vld [vmem:[%s27] ss:$8 sm:%s28]
    %30 = vrot.lane.b32.xlu0 %v29, 64
    %v31 = vpop.permute.xlu0 %30
    %vm32 = vcmask 654848
    %33 = vst.msk [vmem:[#allocation0] ss:$8 sm:$0x3] %vm32, %v31
    %s34 = scalar_lea.vmem %s0, 3
    %s35 = smov 3
    %v36 = vld [vmem:[%s34] ss:$8 sm:%s35]
    %37 = vrot.lane.b32.xlu0 %v36, 48
    %v38 = vpop.permute.xlu0 %37
    %vm39 = vcmask 523648
    %40 = vst.msk [vmem:[#allocation0] ss:$8 sm:$0x3] %vm39, %v38
    %s41 = scalar_lea.vmem %s0, 2
    %s42 = smov 3
    %v43 = vld [vmem:[%s41] ss:$8 sm:%s42]
    %44 = vrot.lane.b32.xlu0 %v43, 32
    %v45 = vpop.permute.xlu0 %44
    %vm46 = vcmask 392448
    %47 = vst.msk [vmem:[#allocation0] ss:$8 sm:$0x3] %vm46, %v45
    %s48 = scalar_lea.vmem %s0, 1
    %s49 = smov 3
    %v50 = vld [vmem:[%s48] ss:$8 sm:%s49]
    %51 = vrot.lane.b32.xlu0 %v50, 16
    %v52 = vpop.permute.xlu0 %51
    %vm53 = vcmask 261248
    %54 = vst.msk [vmem:[#allocation0] ss:$8 sm:$0x3] %vm53, %v52
    %s56 = ssub.s32 2, 1
    %v57 = vld [vmem:[#allocation0] sm:%s56]
    %s59 = ssub.s32 2, 1
    %60 = vst [vmem:[%s1] sm:%s59] %v57
    %s61 = scalar_lea.vmem [#allocation0], 8
    %v62 = vld [vmem:[%s61] sm:%s56]
    %s64 = ssub.s32 2, 1
    %s65 = scalar_lea.vmem %s1, 1
    %66 = vst [vmem:[%s65] sm:%s64] %v62

// kernel: tile.19
$region0: #{tile.19}
  #allocation0 [shape = 's32[1]{0}', space=sflag, size = 0x4, scoped, tag = 'scoped memory for tile.19']
  %s0 = inlined_call_operand.vmem [shape: f32[32], index: 0, kind: input, shape index: {}]
  %s1 = inlined_call_operand.vmem [shape: f32[6,32], index: 1, kind: output, shape index: {}]
  // Predicated region
  $region2: #{tile.19} parent=0 // pred_check
    _
  $region3: #{tile.19} parent=0 // pred_check_branch
    %3 = sbr.rel (0) target = $region5
  $region4: #{tile.19} parent=0 // pred_region
    _
  $region5: #{tile.19} parent=0 // pred_fallthru
    _
  %v4 = vld [vmem:[%s0] ss:$0 sm:$0xff]
  %5 = vst [vmem:[%s1] sm:$0xff] %v4

// kernel: tile.20
$region0: #{tile.20}
  %s0 = inlined_call_operand.vmem [shape: f32[6,32], index: 0, kind: input, shape index: {}]
  %s1 = inlined_call_operand.vmem [shape: f32[1,192], index: 1, kind: output, shape index: {}]
  $region1: #{tile.20} parent=0
    #allocation0 [shape = 'u8[8192]{0}', space=vmem, size = 0x2000, scoped, tag = 'scoped mem for output reshape']
    %s2 = smov 3
    %v3 = vld [vmem:[%s0] ss:$4 sm:%s2]
    %vm4 = vcmask 261120
    %5 = vst.msk [vmem:[#allocation0] ss:$8 sm:$0x3] %vm4, %v3
    %s6 = scalar_lea.vmem %s0, 3
    %v7 = vld [vmem:[%s6] sm:$0x1]
    %8 = vrot.lane.b32.xlu0 %v7, 96
    %v9 = vpop.permute.xlu0 %8
    %vm10 = vcmask 1048320
    %11 = vst.msk [vmem:[#allocation0] sm:$0x1] %vm10, %v9
    %s12 = scalar_lea.vmem %s0, 2
    %v13 = vld [vmem:[%s12] sm:$0x1]
    %14 = vrot.lane.b32.xlu0 %v13, 64
    %v15 = vpop.permute.xlu0 %14
    %vm16 = vcmask 785920
    %17 = vst.msk [vmem:[#allocation0] sm:$0x1] %vm16, %v15
    %s18 = scalar_lea.vmem %s0, 1
    %s19 = smov 3
    %v20 = vld [vmem:[%s18] ss:$4 sm:%s19]
    %21 = vrot.lane.b32.xlu0 %v20, 32
    %v22 = vpop.permute.xlu0 %21
    %vm23 = vcmask 523520
    %24 = vst.msk [vmem:[#allocation0] ss:$8 sm:$0x3] %vm23, %v22
    %s26 = ssub.s32 2, 1
    %v27 = vld [vmem:[#allocation0] sm:%s26]
    %s29 = ssub.s32 2, 1
    %30 = vst [vmem:[%s1] sm:%s29] %v27
    %s31 = scalar_lea.vmem [#allocation0], 8
    %v32 = vld [vmem:[%s31] sm:%s26]
    %s34 = ssub.s32 2, 1
    %s35 = scalar_lea.vmem %s1, 1
    %36 = vst [vmem:[%s35] sm:%s34] %v32

// kernel: metric_forward.1
$region0: #{metric_forward.1}
  #allocation0 [shape = 'u32[]', space=smem, size = 0x4, offset = 0x4, fixed_abs, tag = 'smem constant byte address 0x4 - core index']
  #allocation1 [shape = 'u32[72,128]{1,0:T(1,128)}', space=vmem, size = 0x9000, scoped, tag = 'internal scratch']
  #allocation2 [shape = 'bf16[72,128]{1,0:T(8,128)(2,1)}', space=vmem, size = 0x4800, scoped, tag = 'scratch operand']
  #allocation3 [shape = 'bf16[48,1152]{1,0:T(8,128)(2,1)}', space=vmem, size = 0x1b000, scoped, tag = 'scratch operand']
  #allocation4 [shape = 'bf16[16,128]{1,0:T(8,128)(2,1)}', space=vmem, size = 0x1000, scoped, tag = 'scratch operand']
  #allocation5 [shape = 'bf16[3,1152]{1,0:T(4,128)(2,1)}', space=vmem, size = 0x2400, scoped, tag = 'scratch operand']
  %s0 = inlined_call_operand.vmem [shape: bf16[2,288,162], index: 0, kind: input, shape index: {}]
  %s1 = inlined_call_operand.vmem [shape: bf16[162,256], index: 1, kind: input, shape index: {}]
  %s2 = inlined_call_operand.vmem [shape: bf16[1152,192], index: 2, kind: input, shape index: {}]
  %s3 = inlined_call_operand.vmem [shape: bf16[1152,46], index: 3, kind: input, shape index: {}]
  %s4 = inlined_call_operand.vmem [shape: bf16[72,267], index: 4, kind: input, shape index: {}]
  %s5 = inlined_call_operand.vmem [shape: bf16[256,128], index: 5, kind: input, shape index: {}]
  %s6 = inlined_call_operand.vmem [shape: bf16[256,128], index: 6, kind: input, shape index: {}]
  %s7 = inlined_call_operand.vmem [shape: bf16[16,37], index: 7, kind: input, shape index: {}]
  %s8 = inlined_call_operand.vmem [shape: bf16[192,128], index: 8, kind: input, shape index: {}]
  %s9 = inlined_call_operand.vmem [shape: bf16[192,128], index: 9, kind: input, shape index: {}]
  %s10 = inlined_call_operand.vmem [shape: f32[1,256], index: 10, kind: input, shape index: {}]
  %s11 = inlined_call_operand.vmem [shape: f32[1,192], index: 11, kind: input, shape index: {}]
  %s12 = inlined_call_operand.vmem [shape: f32[1,46], index: 12, kind: input, shape index: {}]
  %s13 = inlined_call_operand.vmem [shape: f32[2,288,256], index: 13, kind: output, shape index: {0}]
  %s14 = inlined_call_operand.vmem [shape: f32[2,48,192], index: 14, kind: output, shape index: {1}]
  %s15 = inlined_call_operand.vmem [shape: f32[2,3,46], index: 15, kind: output, shape index: {2}]
  %16 = xla_tuple %s13, %s14, %s15
  %s17 = sld [smem:[#allocation0]]
  $region101: #{metric_forward.1} parent=0
    _
  %s19 = ssub.s32 1, %s17
  %s20 = scalar_select 0, %s19, %s17
  loop: start=0, step=1, limit=4
  $region2: #{metric_forward.1} parent=0 // loop_pre_header
    _
  $region3: #{metric_forward.1} parent=0 // loop_header
    %s22 = sphi 0, %s26
    %p23 = scmp.ge.s32.totalorder %s22, 4
    %s32 = sphi 0, %s34
    %s35 = sphi 0, %s32
    %s36 = sphi 0, %s35
    %s52 = sphi 0, %s36
    %s56 = sphi 0, %s56
    %s58 = sphi 0, %s56
    %s59 = sphi 0, %s58
    %s73 = sphi 0, %s59
    %s77 = sphi 0, %s77
    %s79 = sphi 0, %s77
    %s80 = sphi 0, %s79
    %s94 = sphi 0, %s80
    %s98 = sphi 0, %s98
    %s100 = sphi 0, %s98
    %s101 = sphi 0, %s100
    %s115 = sphi 0, %s101
    %s119 = sphi 0, %s119
    %s121 = sphi 0, %s119
    %s122 = sphi 0, %s121
    %s136 = sphi 0, %s122
    %s140 = sphi 0, %s140
    %s142 = sphi 0, %s140
    %s143 = sphi 0, %s142
    %s157 = sphi 0, %s143
    %s161 = sphi 0, %s161
    %s163 = sphi 0, %s161
    %s164 = sphi 0, %s163
    %s178 = sphi 0, %s164
    %s182 = sphi 0, %s182
    %s184 = sphi 0, %s182
    %s185 = sphi 0, %s184
    %s199 = sphi 0, %s185
    %s203 = sphi 0, %s203
    %s205 = sphi 0, %s203
    %s206 = sphi 0, %s205
    %s220 = sphi 0, %s206
    %s224 = sphi 0, %s224
    %s226 = sphi 0, %s224
    %s227 = sphi 0, %s226
    %s241 = sphi 0, %s227
    %s245 = sphi 0, %s245
    %s247 = sphi 0, %s245
    %s248 = sphi 0, %s247
    %s262 = sphi 0, %s248
    %s266 = sphi 0, %s266
    %s268 = sphi 0, %s266
    %s269 = sphi 0, %s268
    %s283 = sphi 0, %s269
    %s287 = sphi 0, %s287
    %s289 = sphi 0, %s287
    %s290 = sphi 0, %s289
    %s304 = sphi 0, %s290
    %s310 = sphi 0, %s312
    %s313 = sphi 0, %s310
    %s314 = sphi 0, %s313
    %s330 = sphi 0, %s314
    %s336 = sphi 0, %s338
    %s339 = sphi 0, %s336
    %s340 = sphi 0, %s339
    %s356 = sphi 0, %s340
    %s362 = sphi 0, %s364
    %s365 = sphi 0, %s362
    %s366 = sphi 0, %s365
    %s382 = sphi 0, %s366
  $region4: #{metric_forward.1} parent=0 // loop_header_branch
    %25 = sbr.rel (%p23) target = $region8
  $region5: #{metric_forward.1} parent=0 // loop_body
    %s27 = ssub.s32 %s22, 1
    %s28 = ssub.s32 %s22, 2
    %s29 = sadd.s32 %s22, 1
    %s30 = ssub.s32 %s22, %s29
    %p31 = scmp.eq.s32.totalorder %s30, 0
    %s33 = sadd.s32 %s32, 1
    %s34 = scalar_select %p31, %s32, %s33
    %p37 = pneg %p31
    %p38 = scmp.eq.s32.totalorder %s22, 1
    %p39 = por %p37, %p38
    %p40 = scmp.ne.s32.totalorder %s32, %s35
    %p41 = scmp.eq.s32.totalorder %s22, 0
    %p42 = por %p40, %p41
    %p43 = scmp.ne.s32.totalorder %s32, %s35
    %p44 = scmp.eq.s32.totalorder %s27, 1
    %p45 = por %p43, %p44
    %p46 = scmp.ne.s32.totalorder %s35, %s36
    %p47 = scmp.eq.s32.totalorder %s27, 0
    %p48 = por %p46, %p47
    %p49 = scmp.ne.s32.totalorder %s35, %s36
    %p50 = scmp.eq.s32.totalorder %s28, 1
    %p51 = por %p49, %p50
    %p53 = scmp.ne.s32.totalorder %s36, %s52
    %p54 = scmp.eq.s32.totalorder %s28, 0
    %p55 = por %p53, %p54
    %s57 = sadd.s32 %s56, 1
    %p60 = scmp.eq.s32.totalorder %s22, 1
    %p61 = scmp.ne.s32.totalorder %s56, %s58
    %p62 = scmp.eq.s32.totalorder %s22, 0
    %p63 = por %p61, %p62
    %p64 = scmp.ne.s32.totalorder %s56, %s58
    %p65 = scmp.eq.s32.totalorder %s27, 1
    %p66 = por %p64, %p65
    %p67 = scmp.ne.s32.totalorder %s58, %s59
    %p68 = scmp.eq.s32.totalorder %s27, 0
    %p69 = por %p67, %p68
    %p70 = scmp.ne.s32.totalorder %s58, %s59
    %p71 = scmp.eq.s32.totalorder %s28, 1
    %p72 = por %p70, %p71
    %p74 = scmp.ne.s32.totalorder %s59, %s73
    %p75 = scmp.eq.s32.totalorder %s28, 0
    %p76 = por %p74, %p75
    %s78 = sadd.s32 %s77, 1
    %p81 = scmp.eq.s32.totalorder %s22, 1
    %p82 = scmp.ne.s32.totalorder %s77, %s79
    %p83 = scmp.eq.s32.totalorder %s22, 0
    %p84 = por %p82, %p83
    %p85 = scmp.ne.s32.totalorder %s77, %s79
    %p86 = scmp.eq.s32.totalorder %s27, 1
    %p87 = por %p85, %p86
    %p88 = scmp.ne.s32.totalorder %s79, %s80
    %p89 = scmp.eq.s32.totalorder %s27, 0
    %p90 = por %p88, %p89
    %p91 = scmp.ne.s32.totalorder %s79, %s80
    %p92 = scmp.eq.s32.totalorder %s28, 1
    %p93 = por %p91, %p92
    %p95 = scmp.ne.s32.totalorder %s80, %s94
    %p96 = scmp.eq.s32.totalorder %s28, 0
    %p97 = por %p95, %p96
    %s99 = sadd.s32 %s98, 1
    %p102 = scmp.eq.s32.totalorder %s22, 1
    %p103 = scmp.ne.s32.totalorder %s98, %s100
    %p104 = scmp.eq.s32.totalorder %s22, 0
    %p105 = por %p103, %p104
    %p106 = scmp.ne.s32.totalorder %s98, %s100
    %p107 = scmp.eq.s32.totalorder %s27, 1
    %p108 = por %p106, %p107
    %p109 = scmp.ne.s32.totalorder %s100, %s101
    %p110 = scmp.eq.s32.totalorder %s27, 0
    %p111 = por %p109, %p110
    %p112 = scmp.ne.s32.totalorder %s100, %s101
    %p113 = scmp.eq.s32.totalorder %s28, 1
    %p114 = por %p112, %p113
    %p116 = scmp.ne.s32.totalorder %s101, %s115
    %p117 = scmp.eq.s32.totalorder %s28, 0
    %p118 = por %p116, %p117
    %s120 = sadd.s32 %s119, 1
    %p123 = scmp.eq.s32.totalorder %s22, 1
    %p124 = scmp.ne.s32.totalorder %s119, %s121
    %p125 = scmp.eq.s32.totalorder %s22, 0
    %p126 = por %p124, %p125
    %p127 = scmp.ne.s32.totalorder %s119, %s121
    %p128 = scmp.eq.s32.totalorder %s27, 1
    %p129 = por %p127, %p128
    %p130 = scmp.ne.s32.totalorder %s121, %s122
    %p131 = scmp.eq.s32.totalorder %s27, 0
    %p132 = por %p130, %p131
    %p133 = scmp.ne.s32.totalorder %s121, %s122
    %p134 = scmp.eq.s32.totalorder %s28, 1
    %p135 = por %p133, %p134
    %p137 = scmp.ne.s32.totalorder %s122, %s136
    %p138 = scmp.eq.s32.totalorder %s28, 0
    %p139 = por %p137, %p138
    %s141 = sadd.s32 %s140, 1
    %p144 = scmp.eq.s32.totalorder %s22, 1
    %p145 = scmp.ne.s32.totalorder %s140, %s142
    %p146 = scmp.eq.s32.totalorder %s22, 0
    %p147 = por %p145, %p146
    %p148 = scmp.ne.s32.totalorder %s140, %s142
    %p149 = scmp.eq.s32.totalorder %s27, 1
    %p150 = por %p148, %p149
    %p151 = scmp.ne.s32.totalorder %s142, %s143
    %p152 = scmp.eq.s32.totalorder %s27, 0
    %p153 = por %p151, %p152
    %p154 = scmp.ne.s32.totalorder %s142, %s143
    %p155 = scmp.eq.s32.totalorder %s28, 1
    %p156 = por %p154, %p155
    %p158 = scmp.ne.s32.totalorder %s143, %s157
    %p159 = scmp.eq.s32.totalorder %s28, 0
    %p160 = por %p158, %p159
    %s162 = sadd.s32 %s161, 1
    %p165 = scmp.eq.s32.totalorder %s22, 1
    %p166 = scmp.ne.s32.totalorder %s161, %s163
    %p167 = scmp.eq.s32.totalorder %s22, 0
    %p168 = por %p166, %p167
    %p169 = scmp.ne.s32.totalorder %s161, %s163
    %p170 = scmp.eq.s32.totalorder %s27, 1
    %p171 = por %p169, %p170
    %p172 = scmp.ne.s32.totalorder %s163, %s164
    %p173 = scmp.eq.s32.totalorder %s27, 0
    %p174 = por %p172, %p173
    %p175 = scmp.ne.s32.totalorder %s163, %s164
    %p176 = scmp.eq.s32.totalorder %s28, 1
    %p177 = por %p175, %p176
    %p179 = scmp.ne.s32.totalorder %s164, %s178
    %p180 = scmp.eq.s32.totalorder %s28, 0
    %p181 = por %p179, %p180
    %s183 = sadd.s32 %s182, 1
    %p186 = scmp.eq.s32.totalorder %s22, 1
    %p187 = scmp.ne.s32.totalorder %s182, %s184
    %p188 = scmp.eq.s32.totalorder %s22, 0
    %p189 = por %p187, %p188
    %p190 = scmp.ne.s32.totalorder %s182, %s184
    %p191 = scmp.eq.s32.totalorder %s27, 1
    %p192 = por %p190, %p191
    %p193 = scmp.ne.s32.totalorder %s184, %s185
    %p194 = scmp.eq.s32.totalorder %s27, 0
    %p195 = por %p193, %p194
    %p196 = scmp.ne.s32.totalorder %s184, %s185
    %p197 = scmp.eq.s32.totalorder %s28, 1
    %p198 = por %p196, %p197
    %p200 = scmp.ne.s32.totalorder %s185, %s199
    %p201 = scmp.eq.s32.totalorder %s28, 0
    %p202 = por %p200, %p201
    %s204 = sadd.s32 %s203, 1
    %p207 = scmp.eq.s32.totalorder %s22, 1
    %p208 = scmp.ne.s32.totalorder %s203, %s205
    %p209 = scmp.eq.s32.totalorder %s22, 0
    %p210 = por %p208, %p209
    %p211 = scmp.ne.s32.totalorder %s203, %s205
    %p212 = scmp.eq.s32.totalorder %s27, 1
    %p213 = por %p211, %p212
    %p214 = scmp.ne.s32.totalorder %s205, %s206
    %p215 = scmp.eq.s32.totalorder %s27, 0
    %p216 = por %p214, %p215
    %p217 = scmp.ne.s32.totalorder %s205, %s206
    %p218 = scmp.eq.s32.totalorder %s28, 1
    %p219 = por %p217, %p218
    %p221 = scmp.ne.s32.totalorder %s206, %s220
    %p222 = scmp.eq.s32.totalorder %s28, 0
    %p223 = por %p221, %p222
    %s225 = sadd.s32 %s224, 1
    %p228 = scmp.eq.s32.totalorder %s22, 1
    %p229 = scmp.ne.s32.totalorder %s224, %s226
    %p230 = scmp.eq.s32.totalorder %s22, 0
    %p231 = por %p229, %p230
    %p232 = scmp.ne.s32.totalorder %s224, %s226
    %p233 = scmp.eq.s32.totalorder %s27, 1
    %p234 = por %p232, %p233
    %p235 = scmp.ne.s32.totalorder %s226, %s227
    %p236 = scmp.eq.s32.totalorder %s27, 0
    %p237 = por %p235, %p236
    %p238 = scmp.ne.s32.totalorder %s226, %s227
    %p239 = scmp.eq.s32.totalorder %s28, 1
    %p240 = por %p238, %p239
    %p242 = scmp.ne.s32.totalorder %s227, %s241
    %p243 = scmp.eq.s32.totalorder %s28, 0
    %p244 = por %p242, %p243
    %s246 = sadd.s32 %s245, 1
    %p249 = scmp.eq.s32.totalorder %s22, 1
    %p250 = scmp.ne.s32.totalorder %s245, %s247
    %p251 = scmp.eq.s32.totalorder %s22, 0
    %p252 = por %p250, %p251
    %p253 = scmp.ne.s32.totalorder %s245, %s247
    %p254 = scmp.eq.s32.totalorder %s27, 1
    %p255 = por %p253, %p254
    %p256 = scmp.ne.s32.totalorder %s247, %s248
    %p257 = scmp.eq.s32.totalorder %s27, 0
    %p258 = por %p256, %p257
    %p259 = scmp.ne.s32.totalorder %s247, %s248
    %p260 = scmp.eq.s32.totalorder %s28, 1
    %p261 = por %p259, %p260
    %p263 = scmp.ne.s32.totalorder %s248, %s262
    %p264 = scmp.eq.s32.totalorder %s28, 0
    %p265 = por %p263, %p264
    %s267 = sadd.s32 %s266, 1
    %p270 = scmp.eq.s32.totalorder %s22, 1
    %p271 = scmp.ne.s32.totalorder %s266, %s268
    %p272 = scmp.eq.s32.totalorder %s22, 0
    %p273 = por %p271, %p272
    %p274 = scmp.ne.s32.totalorder %s266, %s268
    %p275 = scmp.eq.s32.totalorder %s27, 1
    %p276 = por %p274, %p275
    %p277 = scmp.ne.s32.totalorder %s268, %s269
    %p278 = scmp.eq.s32.totalorder %s27, 0
    %p279 = por %p277, %p278
    %p280 = scmp.ne.s32.totalorder %s268, %s269
    %p281 = scmp.eq.s32.totalorder %s28, 1
    %p282 = por %p280, %p281
    %p284 = scmp.ne.s32.totalorder %s269, %s283
    %p285 = scmp.eq.s32.totalorder %s28, 0
    %p286 = por %p284, %p285
    %s288 = sadd.s32 %s287, 1
    %p291 = scmp.eq.s32.totalorder %s22, 1
    %p292 = scmp.ne.s32.totalorder %s287, %s289
    %p293 = scmp.eq.s32.totalorder %s22, 0
    %p294 = por %p292, %p293
    %p295 = scmp.ne.s32.totalorder %s287, %s289
    %p296 = scmp.eq.s32.totalorder %s27, 1
    %p297 = por %p295, %p296
    %p298 = scmp.ne.s32.totalorder %s289, %s290
    %p299 = scmp.eq.s32.totalorder %s27, 0
    %p300 = por %p298, %p299
    %p301 = scmp.ne.s32.totalorder %s289, %s290
    %p302 = scmp.eq.s32.totalorder %s28, 1
    %p303 = por %p301, %p302
    %p305 = scmp.ne.s32.totalorder %s290, %s304
    %p306 = scmp.eq.s32.totalorder %s28, 0
    %p307 = por %p305, %p306
    %s308 = ssub.s32 %s22, %s29
    %p309 = scmp.eq.s32.totalorder %s308, 0
    %s311 = sadd.s32 %s310, 1
    %s312 = scalar_select %p309, %s310, %s311
    %p315 = pneg %p309
    %p316 = scmp.eq.s32.totalorder %s22, 1
    %p317 = por %p315, %p316
    %p318 = scmp.ne.s32.totalorder %s310, %s313
    %p319 = scmp.eq.s32.totalorder %s22, 0
    %p320 = por %p318, %p319
    %p321 = scmp.ne.s32.totalorder %s310, %s313
    %p322 = scmp.eq.s32.totalorder %s27, 1
    %p323 = por %p321, %p322
    %p324 = scmp.ne.s32.totalorder %s313, %s314
    %p325 = scmp.eq.s32.totalorder %s27, 0
    %p326 = por %p324, %p325
    %p327 = scmp.ne.s32.totalorder %s313, %s314
    %p328 = scmp.eq.s32.totalorder %s28, 1
    %p329 = por %p327, %p328
    %p331 = scmp.ne.s32.totalorder %s314, %s330
    %p332 = scmp.eq.s32.totalorder %s28, 0
    %p333 = por %p331, %p332
    %s334 = ssub.s32 %s22, %s29
    %p335 = scmp.eq.s32.totalorder %s334, 0
    %s337 = sadd.s32 %s336, 1
    %s338 = scalar_select %p335, %s336, %s337
    %p341 = pneg %p335
    %p342 = scmp.eq.s32.totalorder %s22, 1
    %p343 = por %p341, %p342
    %p344 = scmp.ne.s32.totalorder %s336, %s339
    %p345 = scmp.eq.s32.totalorder %s22, 0
    %p346 = por %p344, %p345
    %p347 = scmp.ne.s32.totalorder %s336, %s339
    %p348 = scmp.eq.s32.totalorder %s27, 1
    %p349 = por %p347, %p348
    %p350 = scmp.ne.s32.totalorder %s339, %s340
    %p351 = scmp.eq.s32.totalorder %s27, 0
    %p352 = por %p350, %p351
    %p353 = scmp.ne.s32.totalorder %s339, %s340
    %p354 = scmp.eq.s32.totalorder %s28, 1
    %p355 = por %p353, %p354
    %p357 = scmp.ne.s32.totalorder %s340, %s356
    %p358 = scmp.eq.s32.totalorder %s28, 0
    %p359 = por %p357, %p358
    %s360 = ssub.s32 %s22, %s29
    %p361 = scmp.eq.s32.totalorder %s360, 0
    %s363 = sadd.s32 %s362, 1
    %s364 = scalar_select %p361, %s362, %s363
    %p367 = pneg %p361
    %p368 = scmp.eq.s32.totalorder %s22, 1
    %p369 = por %p367, %p368
    %p370 = scmp.ne.s32.totalorder %s362, %s365
    %p371 = scmp.eq.s32.totalorder %s22, 0
    %p372 = por %p370, %p371
    %p373 = scmp.ne.s32.totalorder %s362, %s365
    %p374 = scmp.eq.s32.totalorder %s27, 1
    %p375 = por %p373, %p374
    %p376 = scmp.ne.s32.totalorder %s365, %s366
    %p377 = scmp.eq.s32.totalorder %s27, 0
    %p378 = por %p376, %p377
    %p379 = scmp.ne.s32.totalorder %s365, %s366
    %p380 = scmp.eq.s32.totalorder %s28, 1
    %p381 = por %p379, %p380
    %p383 = scmp.ne.s32.totalorder %s366, %s382
    %p384 = scmp.eq.s32.totalorder %s28, 0
    %p385 = por %p383, %p384
    %p386 = scmp.le.s32.totalorder 1, %s22
    %p387 = scmp.lt.s32.totalorder %s22, 3
    %p388 = pnand %p386, %p387
    %p389 = pneg %p388
    // Predicated region
    $region9: #{metric_forward.1} parent=5 // pred_check
      _
    $region10: #{metric_forward.1} parent=5 // pred_check_branch
      %391 = sbr.rel (%p388) target = $region12
    $region11: #{metric_forward.1} parent=5 // pred_region
      %s392 = ssub.s32 %s22, 1
      // Predicated region
      $region13: #{metric_forward.1} parent=11 // pred_check
        %p393 = pneg %p69
      $region14: #{metric_forward.1} parent=11 // pred_check_branch
        %395 = sbr.rel (%p393) target = $region16
      $region15: #{metric_forward.1} parent=11 // pred_region
        _
      $region16: #{metric_forward.1} parent=11 // pred_fallthru
        _
      // Predicated region
      $region17: #{metric_forward.1} parent=11 // pred_check
        %p396 = pneg %p90
      $region18: #{metric_forward.1} parent=11 // pred_check_branch
        %398 = sbr.rel (%p396) target = $region20
      $region19: #{metric_forward.1} parent=11 // pred_region
        _
      $region20: #{metric_forward.1} parent=11 // pred_fallthru
        _
      // Predicated region
      $region21: #{metric_forward.1} parent=11 // pred_check
        %p399 = pneg %p111
      $region22: #{metric_forward.1} parent=11 // pred_check_branch
        %401 = sbr.rel (%p399) target = $region24
      $region23: #{metric_forward.1} parent=11 // pred_region
        _
      $region24: #{metric_forward.1} parent=11 // pred_fallthru
        _
      // Predicated region
      $region25: #{metric_forward.1} parent=11 // pred_check
        %p402 = pneg %p132
      $region26: #{metric_forward.1} parent=11 // pred_check_branch
        %404 = sbr.rel (%p402) target = $region28
      $region27: #{metric_forward.1} parent=11 // pred_region
        _
      $region28: #{metric_forward.1} parent=11 // pred_fallthru
        _
      // Predicated region
      $region29: #{metric_forward.1} parent=11 // pred_check
        %p405 = pneg %p153
      $region30: #{metric_forward.1} parent=11 // pred_check_branch
        %407 = sbr.rel (%p405) target = $region32
      $region31: #{metric_forward.1} parent=11 // pred_region
        _
      $region32: #{metric_forward.1} parent=11 // pred_fallthru
        _
      // Predicated region
      $region33: #{metric_forward.1} parent=11 // pred_check
        %p408 = pneg %p174
      $region34: #{metric_forward.1} parent=11 // pred_check_branch
        %410 = sbr.rel (%p408) target = $region36
      $region35: #{metric_forward.1} parent=11 // pred_region
        _
      $region36: #{metric_forward.1} parent=11 // pred_fallthru
        _
      // Predicated region
      $region37: #{metric_forward.1} parent=11 // pred_check
        %p411 = pneg %p195
      $region38: #{metric_forward.1} parent=11 // pred_check_branch
        %413 = sbr.rel (%p411) target = $region40
      $region39: #{metric_forward.1} parent=11 // pred_region
        _
      $region40: #{metric_forward.1} parent=11 // pred_fallthru
        _
      // Predicated region
      $region41: #{metric_forward.1} parent=11 // pred_check
        %p414 = pneg %p216
      $region42: #{metric_forward.1} parent=11 // pred_check_branch
        %416 = sbr.rel (%p414) target = $region44
      $region43: #{metric_forward.1} parent=11 // pred_region
        _
      $region44: #{metric_forward.1} parent=11 // pred_fallthru
        _
      // Predicated region
      $region45: #{metric_forward.1} parent=11 // pred_check
        %p417 = pneg %p237
      $region46: #{metric_forward.1} parent=11 // pred_check_branch
        %419 = sbr.rel (%p417) target = $region48
      $region47: #{metric_forward.1} parent=11 // pred_region
        _
      $region48: #{metric_forward.1} parent=11 // pred_fallthru
        _
      // Predicated region
      $region49: #{metric_forward.1} parent=11 // pred_check
        %p420 = pneg %p258
      $region50: #{metric_forward.1} parent=11 // pred_check_branch
        %422 = sbr.rel (%p420) target = $region52
      $region51: #{metric_forward.1} parent=11 // pred_region
        _
      $region52: #{metric_forward.1} parent=11 // pred_fallthru
        _
      // Predicated region
      $region53: #{metric_forward.1} parent=11 // pred_check
        %p423 = pneg %p279
      $region54: #{metric_forward.1} parent=11 // pred_check_branch
        %425 = sbr.rel (%p423) target = $region56
      $region55: #{metric_forward.1} parent=11 // pred_region
        _
      $region56: #{metric_forward.1} parent=11 // pred_fallthru
        _
      // Predicated region
      $region57: #{metric_forward.1} parent=11 // pred_check
        %p426 = pneg %p300
      $region58: #{metric_forward.1} parent=11 // pred_check_branch
        %428 = sbr.rel (%p426) target = $region60
      $region59: #{metric_forward.1} parent=11 // pred_region
        _
      $region60: #{metric_forward.1} parent=11 // pred_fallthru
        _
    $region12: #{metric_forward.1} parent=5 // pred_fallthru
      _
    %p429 = scmp.lt.s32.totalorder %s22, 2
    // Predicated region
    $region61: #{metric_forward.1} parent=5 // pred_check
      %p430 = pneg %p429
    $region62: #{metric_forward.1} parent=5 // pred_check_branch
      %432 = sbr.rel (%p430) target = $region64
    $region63: #{metric_forward.1} parent=5 // pred_region
      // Predicated region
      $region65: #{metric_forward.1} parent=63 // pred_check
        %p433 = pneg %p42
      $region66: #{metric_forward.1} parent=63 // pred_check_branch
        %435 = sbr.rel (%p433) target = $region68
      $region67: #{metric_forward.1} parent=63 // pred_region
        %p436 = scmp.lt.s32.totalorder %s22, 1
        %s437 = scalar_select %p436, %s22, 1
        %s438 = smul.addr %s437, 72
        %s439 = smul.addr %s438, 4
        %s440 = scalar_lea.vmem %s0, %s439
      $region68: #{metric_forward.1} parent=63 // pred_fallthru
        _
    $region64: #{metric_forward.1} parent=5 // pred_fallthru
      _
    %p441 = scmp.le.s32.totalorder 1, %s22
    %p442 = scmp.lt.s32.totalorder %s22, 3
    %p443 = pnand %p441, %p442
    %p444 = pneg %p443
    // Predicated region
    $region69: #{metric_forward.1} parent=5 // pred_check
      _
    $region70: #{metric_forward.1} parent=5 // pred_check_branch
      %446 = sbr.rel (%p443) target = $region72
    $region71: #{metric_forward.1} parent=5 // pred_region
      %s447 = ssub.s32 %s22, 1
      %p448 = scmp.lt.s32.totalorder %s27, 1
      %s449 = scalar_select %p448, %s27, 1
      %s450 = smul.addr %s449, 72
      %s451 = smul.addr %s450, 4
      %s452 = scalar_lea.vmem %s0, %s451
      %p453 = pneg %p48
      %p454 = pneg %p45
      %p455 = pneg %p69
      %p456 = pneg %p66
      %p457 = pneg %p90
      %p458 = pneg %p87
      %p459 = pneg %p111
      %p460 = pneg %p108
      %p461 = pneg %p132
      %p462 = pneg %p129
      %p463 = pneg %p153
      %p464 = pneg %p150
      %p465 = pneg %p174
      %p466 = pneg %p171
      %p467 = pneg %p195
      %p468 = pneg %p192
      %p469 = pneg %p216
      %p470 = pneg %p213
      %p471 = pneg %p237
      %p472 = pneg %p234
      %p473 = pneg %p258
      %p474 = pneg %p255
      %p475 = pneg %p279
      %p476 = pneg %p276
      %p477 = pneg %p300
      %p478 = pneg %p297
      %p479 = pneg %p326
      %p480 = pneg %p323
      %p481 = scmp.lt.s32.totalorder %s27, 1
      %s482 = scalar_select %p481, %s27, 1
      %s483 = smul.addr %s482, 72
      %s484 = smul.addr %s483, 8
      %s485 = scalar_lea.vmem %s13, %s484
      %p486 = pneg %p352
      %p487 = pneg %p349
      %p488 = scmp.lt.s32.totalorder %s27, 1
      %s489 = scalar_select %p488, %s27, 1
      %s490 = smul.addr %s489, 12
      %s491 = smul.addr %s490, 8
      %s492 = scalar_lea.vmem %s14, %s491
      %p493 = pneg %p378
      %p494 = pneg %p375
      %p495 = scmp.lt.s32.totalorder %s27, 1
      %s496 = scalar_select %p495, %s27, 1
      %s497 = smul.addr %s496, 4
      %s498 = scalar_lea.vmem %s15, %s497
      %p499 = scmp.lt.s32.totalorder %s27, 1
      %s500 = scalar_select %p499, %s27, 1
      %s501 = smul.addr %s500, 72
      %s502 = smul.addr %s501, 4
      %s503 = scalar_lea.vmem %s0, %s502
      %p504 = scmp.lt.s32.totalorder %s27, 1
      %s505 = scalar_select %p504, %s27, 1
      %s506 = smul.addr %s505, 72
      %s507 = smul.addr %s506, 8
      %s508 = scalar_lea.vmem %s13, %s507
      %p509 = scmp.lt.s32.totalorder %s27, 1
      %s510 = scalar_select %p509, %s27, 1
      %s511 = smul.addr %s510, 12
      %s512 = smul.addr %s511, 8
      %s513 = scalar_lea.vmem %s14, %s512
      %p514 = scmp.lt.s32.totalorder %s27, 1
      %s515 = scalar_select %p514, %s27, 1
      %s516 = smul.addr %s515, 4
      %s517 = scalar_lea.vmem %s15, %s516
      %v519 = vld [vmem:[%s503] sm:$0xff]
      %v520 = vld [vmem:[%s503 + $0x8] sm:$0xff]
      %v521 = vld [vmem:[%s503 + $0x10] sm:$0xff]
      %v522 = vld [vmem:[%s503 + $0x18] sm:$0xff]
      %v523 = vld [vmem:[%s503 + $0x20] sm:$0xff]
      %v524 = vld [vmem:[%s503 + $0x28] sm:$0xff]
      %v525 = vld [vmem:[%s503 + $0x30] sm:$0xff]
      %v526 = vld [vmem:[%s503 + $0x38] sm:$0xff]
      %v527 = vld [vmem:[%s503 + $0x40] sm:$0xff]
      %v528 = vld [vmem:[%s503 + $0x48] sm:$0xff]
      %v529 = vld [vmem:[%s503 + $0x50] sm:$0xff]
      %v530 = vld [vmem:[%s503 + $0x58] sm:$0xff]
      %v531 = vld [vmem:[%s503 + $0x60] sm:$0xff]
      %v532 = vld [vmem:[%s503 + $0x68] sm:$0xff]
      %v533 = vld [vmem:[%s503 + $0x70] sm:$0xff]
      %v534 = vld [vmem:[%s503 + $0x78] sm:$0xff]
      %v535 = vld [vmem:[%s503 + $0x80] sm:$0xff]
      %v536 = vld [vmem:[%s503 + $0x88] sm:$0xff]
      %v537 = vld [vmem:[%s503 + $0x90] sm:$0xff]
      %v538 = vld [vmem:[%s503 + $0x98] sm:$0xff]
      %v539 = vld [vmem:[%s503 + $0xa0] sm:$0xff]
      %v540 = vld [vmem:[%s503 + $0xa8] sm:$0xff]
      %v541 = vld [vmem:[%s503 + $0xb0] sm:$0xff]
      %v542 = vld [vmem:[%s503 + $0xb8] sm:$0xff]
      %v543 = vld [vmem:[%s503 + $0xc0] sm:$0xff]
      %v544 = vld [vmem:[%s503 + $0xc8] sm:$0xff]
      %v545 = vld [vmem:[%s503 + $0xd0] sm:$0xff]
      %v546 = vld [vmem:[%s503 + $0xd8] sm:$0xff]
      %v547 = vld [vmem:[%s503 + $0xe0] sm:$0xff]
      %v548 = vld [vmem:[%s503 + $0xe8] sm:$0xff]
      %v549 = vld [vmem:[%s503 + $0xf0] sm:$0xff]
      %v550 = vld [vmem:[%s503 + $0xf8] sm:$0xff]
      %v551 = vld [vmem:[%s503 + $0x100] sm:$0xff]
      %v552 = vld [vmem:[%s503 + $0x108] sm:$0xff]
      %v553 = vld [vmem:[%s503 + $0x110] sm:$0xff]
      %v554 = vld [vmem:[%s503 + $0x118] sm:$0xff]
      %v555 = vld [vmem:[%s1] sm:$0xff]
      %v556 = vld [vmem:[%s1 + $0x8] sm:$0xff]
      %v557 = vld [vmem:[%s1 + $0x10] sm:$0xff]
      %v558 = vld [vmem:[%s1 + $0x18] sm:$0xff]
      %v559 = vld [vmem:[%s1 + $0x20] sm:$0xff]
      %v560 = vld [vmem:[%s1 + $0x28] sm:$0xff]
      %v561 = vld [vmem:[%s1 + $0x30] sm:$0xff]
      %v562 = vld [vmem:[%s1 + $0x38] sm:$0xff]
      %v563 = vld [vmem:[%s1 + $0x40] sm:$0xff]
      %v564 = vld [vmem:[%s1 + $0x48] sm:$0xff]
      %v565 = vld [vmem:[%s1 + $0x50] sm:$0xff]
      %v566 = vld [vmem:[%s1 + $0x58] sm:$0xff]
      %v567 = vld [vmem:[%s1 + $0x60] sm:$0xff]
      %v568 = vld [vmem:[%s1 + $0x68] sm:$0xff]
      %v569 = vld [vmem:[%s1 + $0x70] sm:$0xff]
      %v570 = vld [vmem:[%s1 + $0x78] sm:$0xff]
      %v571 = vld [vmem:[%s1 + $0x80] sm:$0xff]
      %v572 = vld [vmem:[%s1 + $0x88] sm:$0xff]
      %v573 = vld [vmem:[%s1 + $0x90] sm:$0xff]
      %v574 = vld [vmem:[%s1 + $0x98] sm:$0xff]
      %v575 = vld [vmem:[%s1 + $0xa0] sm:$0x11]
      %v576 = vld [vmem:[%s10] sm:$0x3]
      %v578 = vperm.slane %v576, 0
      %v579 = vperm.slane %v576, 1
      %v618 = vunpack.c.l.b16 %v519
      %v619 = vunpack.c.h.b16 %v519
      %v620 = vunpack.c.l.b16 %v520
      %v621 = vunpack.c.h.b16 %v520
      %v622 = vunpack.c.l.b16 %v521
      %v623 = vunpack.c.h.b16 %v521
      %v624 = vunpack.c.l.b16 %v522
      %v625 = vunpack.c.h.b16 %v522
      %v626 = vunpack.c.l.b16 %v523
      %v627 = vunpack.c.h.b16 %v523
      %v628 = vunpack.c.l.b16 %v524
      %v629 = vunpack.c.h.b16 %v524
      %v630 = vunpack.c.l.b16 %v525
      %v631 = vunpack.c.h.b16 %v525
      %v632 = vunpack.c.l.b16 %v526
      %v633 = vunpack.c.h.b16 %v526
      %v634 = vunpack.c.l.b16 %v527
      %v635 = vunpack.c.h.b16 %v527
      %v636 = vunpack.c.l.b16 %v528
      %v637 = vunpack.c.h.b16 %v528
      %v638 = vunpack.c.l.b16 %v529
      %v639 = vunpack.c.h.b16 %v529
      %v640 = vunpack.c.l.b16 %v530
      %v641 = vunpack.c.h.b16 %v530
      %v642 = vunpack.c.l.b16 %v531
      %v643 = vunpack.c.h.b16 %v531
      %v644 = vunpack.c.l.b16 %v532
      %v645 = vunpack.c.h.b16 %v532
      %v646 = vunpack.c.l.b16 %v533
      %v647 = vunpack.c.h.b16 %v533
      %v648 = vunpack.c.l.b16 %v534
      %v649 = vunpack.c.h.b16 %v534
      %v650 = vunpack.c.l.b16 %v535
      %v651 = vunpack.c.h.b16 %v535
      %v652 = vunpack.c.l.b16 %v536
      %v653 = vunpack.c.h.b16 %v536
      %v654 = vunpack.c.l.b16 %v537
      %v655 = vunpack.c.h.b16 %v537
      %v656 = vunpack.c.l.b16 %v538
      %v657 = vunpack.c.h.b16 %v538
      %v658 = vunpack.c.l.b16 %v539
      %v659 = vunpack.c.h.b16 %v539
      %v660 = vunpack.c.l.b16 %v540
      %v661 = vunpack.c.h.b16 %v540
      %v662 = vunpack.c.l.b16 %v541
      %v663 = vunpack.c.h.b16 %v541
      %v664 = vunpack.c.l.b16 %v542
      %v665 = vunpack.c.h.b16 %v542
      %v666 = vunpack.c.l.b16 %v543
      %v667 = vunpack.c.h.b16 %v543
      %v668 = vunpack.c.l.b16 %v544
      %v669 = vunpack.c.h.b16 %v544
      %v670 = vunpack.c.l.b16 %v545
      %v671 = vunpack.c.h.b16 %v545
      %v672 = vunpack.c.l.b16 %v546
      %v673 = vunpack.c.h.b16 %v546
      %v674 = vunpack.c.l.b16 %v547
      %v675 = vunpack.c.h.b16 %v547
      %v676 = vunpack.c.l.b16 %v548
      %v677 = vunpack.c.h.b16 %v548
      %v678 = vunpack.c.l.b16 %v549
      %v679 = vunpack.c.h.b16 %v549
      %v680 = vunpack.c.l.b16 %v550
      %v681 = vunpack.c.h.b16 %v550
      %v682 = vunpack.c.l.b16 %v551
      %v683 = vunpack.c.h.b16 %v551
      %v684 = vunpack.c.l.b16 %v552
      %v685 = vunpack.c.h.b16 %v552
      %v686 = vunpack.c.l.b16 %v553
      %v687 = vunpack.c.h.b16 %v553
      %v688 = vunpack.c.l.b16 %v554
      %v689 = vunpack.c.h.b16 %v554
      %v690 = vpack.c.b16 %v620, %v618
      %v691 = vpack.c.b16 %v621, %v619
      %v692 = vpack.c.b16 %v624, %v622
      %v693 = vpack.c.b16 %v625, %v623
      %v694 = vpack.c.b16 %v628, %v626
      %v695 = vpack.c.b16 %v629, %v627
      %v696 = vpack.c.b16 %v632, %v630
      %v697 = vpack.c.b16 %v633, %v631
      %v698 = vpack.c.b16 %v636, %v634
      %v699 = vpack.c.b16 %v637, %v635
      %v700 = vpack.c.b16 %v640, %v638
      %v701 = vpack.c.b16 %v641, %v639
      %v702 = vpack.c.b16 %v644, %v642
      %v703 = vpack.c.b16 %v645, %v643
      %v704 = vpack.c.b16 %v648, %v646
      %v705 = vpack.c.b16 %v649, %v647
      %v706 = vpack.c.b16 %v652, %v650
      %v707 = vpack.c.b16 %v653, %v651
      %v708 = vpack.c.b16 %v656, %v654
      %v709 = vpack.c.b16 %v657, %v655
      %v710 = vpack.c.b16 %v660, %v658
      %v711 = vpack.c.b16 %v661, %v659
      %v712 = vpack.c.b16 %v664, %v662
      %v713 = vpack.c.b16 %v665, %v663
      %v714 = vpack.c.b16 %v668, %v666
      %v715 = vpack.c.b16 %v669, %v667
      %v716 = vpack.c.b16 %v672, %v670
      %v717 = vpack.c.b16 %v673, %v671
      %v718 = vpack.c.b16 %v676, %v674
      %v719 = vpack.c.b16 %v677, %v675
      %v720 = vpack.c.b16 %v680, %v678
      %v721 = vpack.c.b16 %v681, %v679
      %v722 = vpack.c.b16 %v684, %v682
      %v723 = vpack.c.b16 %v685, %v683
      %v724 = vpack.c.b16 %v688, %v686
      %v725 = vpack.c.b16 %v689, %v687
      %v765 = vunpack.c.l.b16 %v555
      %v766 = vunpack.c.h.b16 %v555
      %v767 = vunpack.c.l.b16 %v556
      %v768 = vunpack.c.h.b16 %v556
      %v769 = vunpack.c.l.b16 %v557
      %v770 = vunpack.c.h.b16 %v557
      %v771 = vunpack.c.l.b16 %v558
      %v772 = vunpack.c.h.b16 %v558
      %v773 = vunpack.c.l.b16 %v559
      %v774 = vunpack.c.h.b16 %v559
      %v775 = vunpack.c.l.b16 %v560
      %v776 = vunpack.c.h.b16 %v560
      %v777 = vunpack.c.l.b16 %v561
      %v778 = vunpack.c.h.b16 %v561
      %v779 = vunpack.c.l.b16 %v562
      %v780 = vunpack.c.h.b16 %v562
      %v781 = vunpack.c.l.b16 %v563
      %v782 = vunpack.c.h.b16 %v563
      %v783 = vunpack.c.l.b16 %v564
      %v784 = vunpack.c.h.b16 %v564
      %v785 = vunpack.c.l.b16 %v565
      %v786 = vunpack.c.h.b16 %v565
      %v787 = vunpack.c.l.b16 %v566
      %v788 = vunpack.c.h.b16 %v566
      %v789 = vunpack.c.l.b16 %v567
      %v790 = vunpack.c.h.b16 %v567
      %v791 = vunpack.c.l.b16 %v568
      %v792 = vunpack.c.h.b16 %v568
      %v793 = vunpack.c.l.b16 %v569
      %v794 = vunpack.c.h.b16 %v569
      %v795 = vunpack.c.l.b16 %v570
      %v796 = vunpack.c.h.b16 %v570
      %v797 = vunpack.c.l.b16 %v571
      %v798 = vunpack.c.h.b16 %v571
      %v799 = vunpack.c.l.b16 %v572
      %v800 = vunpack.c.h.b16 %v572
      %v801 = vunpack.c.l.b16 %v573
      %v802 = vunpack.c.h.b16 %v573
      %v803 = vunpack.c.l.b16 %v574
      %v804 = vunpack.c.h.b16 %v574
      %v805 = vunpack.c.l.b16 %v575
      %v806 = vunpack.c.h.b16 %v575
      %v807 = vpack.c.b16 %v767, %v765
      %v808 = vpack.c.b16 %v768, %v766
      %v809 = vpack.c.b16 %v771, %v769
      %v810 = vpack.c.b16 %v772, %v770
      %v811 = vpack.c.b16 %v775, %v773
      %v812 = vpack.c.b16 %v776, %v774
      %v813 = vpack.c.b16 %v779, %v777
      %v814 = vpack.c.b16 %v780, %v778
      %v815 = vpack.c.b16 %v783, %v781
      %v816 = vpack.c.b16 %v784, %v782
      %v817 = vpack.c.b16 %v787, %v785
      %v818 = vpack.c.b16 %v788, %v786
      %v819 = vpack.c.b16 %v791, %v789
      %v820 = vpack.c.b16 %v792, %v790
      %v821 = vpack.c.b16 %v795, %v793
      %v822 = vpack.c.b16 %v796, %v794
      %v823 = vpack.c.b16 %v799, %v797
      %v824 = vpack.c.b16 %v800, %v798
      %v825 = vpack.c.b16 %v803, %v801
      %v826 = vpack.c.b16 %v804, %v802
      %v827 = vpack.c.b16 %v805, %v805
      %v828 = vpack.c.b16 %v806, %v806
      %vm849 = vcmask 277504
      %v851 = vsel %vm849, %v691, 0
      %v854 = vsel %vm849, %v693, 0
      %v857 = vsel %vm849, %v695, 0
      %v860 = vsel %vm849, %v697, 0
      %v863 = vsel %vm849, %v699, 0
      %v866 = vsel %vm849, %v701, 0
      %v869 = vsel %vm849, %v703, 0
      %v872 = vsel %vm849, %v705, 0
      %v875 = vsel %vm849, %v707, 0
      %v878 = vsel %vm849, %v709, 0
      %v881 = vsel %vm849, %v711, 0
      %v884 = vsel %vm849, %v713, 0
      %v887 = vsel %vm849, %v715, 0
      %v890 = vsel %vm849, %v717, 0
      %v893 = vsel %vm849, %v719, 0
      %v896 = vsel %vm849, %v721, 0
      %v899 = vsel %vm849, %v723, 0
      %v902 = vsel %vm849, %v725, 0
      %vm904 = vcmask 1040384
      %v906 = vsel %vm904, %v827, 0
      %v909 = vsel %vm904, %v828, 0
      %911 = vmatpush.bf16.msra.mxu0 %v821
      %912 = vmatpush.bf16.msra.mxu0 %v819
      %913 = vmatpush.bf16.msra.mxu0 %v817
      %914 = vmatpush.bf16.msra.mxu0 %v815
      %915 = vmatpush.bf16.msra.mxu0 %v813
      %916 = vmatpush.bf16.msra.mxu0 %v811
      %917 = vmatpush.bf16.msra.mxu0 %v809
      %918 = vmatpush.bf16.msra.mxu0 %v807
      %919 = vmatmul.bf16.gmra.mxu0 %v690
      %v920 = vpop.f32.mrf.mxu0
      %v921 = vadd.f32 %v578, %v920
      %v922 = vpop.f32.mrf.mxu0
      %v923 = vadd.f32 %v578, %v922
      %924 = vmatmul.bf16.gmra.mxu0 %v692
      %v925 = vpop.f32.mrf.mxu0
      %v926 = vadd.f32 %v578, %v925
      %v927 = vpop.f32.mrf.mxu0
      %v928 = vadd.f32 %v578, %v927
      %929 = vmatmul.bf16.gmra.mxu0 %v694
      %v930 = vpop.f32.mrf.mxu0
      %v931 = vadd.f32 %v578, %v930
      %v932 = vpop.f32.mrf.mxu0
      %v933 = vadd.f32 %v578, %v932
      %934 = vmatmul.bf16.gmra.mxu0 %v696
      %v935 = vpop.f32.mrf.mxu0
      %v936 = vadd.f32 %v578, %v935
      %v937 = vpop.f32.mrf.mxu0
      %v938 = vadd.f32 %v578, %v937
      %939 = vmatmul.bf16.gmra.mxu0 %v698
      %v940 = vpop.f32.mrf.mxu0
      %v941 = vadd.f32 %v578, %v940
      %v942 = vpop.f32.mrf.mxu0
      %v943 = vadd.f32 %v578, %v942
      %944 = vmatmul.bf16.gmra.mxu0 %v700
      %v945 = vpop.f32.mrf.mxu0
      %v946 = vadd.f32 %v578, %v945
      %v947 = vpop.f32.mrf.mxu0
      %v948 = vadd.f32 %v578, %v947
      %949 = vmatmul.bf16.gmra.mxu0 %v702
      %v950 = vpop.f32.mrf.mxu0
      %v951 = vadd.f32 %v578, %v950
      %v952 = vpop.f32.mrf.mxu0
      %v953 = vadd.f32 %v578, %v952
      %954 = vmatmul.bf16.gmra.mxu0 %v704
      %v955 = vpop.f32.mrf.mxu0
      %v956 = vadd.f32 %v578, %v955
      %v957 = vpop.f32.mrf.mxu0
      %v958 = vadd.f32 %v578, %v957
      %959 = vmatmul.bf16.gmra.mxu0 %v706
      %v960 = vpop.f32.mrf.mxu0
      %v961 = vadd.f32 %v578, %v960
      %v962 = vpop.f32.mrf.mxu0
      %v963 = vadd.f32 %v578, %v962
      %964 = vmatmul.bf16.gmra.mxu0 %v708
      %v965 = vpop.f32.mrf.mxu0
      %v966 = vadd.f32 %v578, %v965
      %v967 = vpop.f32.mrf.mxu0
      %v968 = vadd.f32 %v578, %v967
      %969 = vmatmul.bf16.gmra.mxu0 %v710
      %v970 = vpop.f32.mrf.mxu0
      %v971 = vadd.f32 %v578, %v970
      %v972 = vpop.f32.mrf.mxu0
      %v973 = vadd.f32 %v578, %v972
      %974 = vmatmul.bf16.gmra.mxu0 %v712
      %v975 = vpop.f32.mrf.mxu0
      %v976 = vadd.f32 %v578, %v975
      %v977 = vpop.f32.mrf.mxu0
      %v978 = vadd.f32 %v578, %v977
      %979 = vmatmul.bf16.gmra.mxu0 %v714
      %v980 = vpop.f32.mrf.mxu0
      %v981 = vadd.f32 %v578, %v980
      %v982 = vpop.f32.mrf.mxu0
      %v983 = vadd.f32 %v578, %v982
      %984 = vmatmul.bf16.gmra.mxu0 %v716
      %v985 = vpop.f32.mrf.mxu0
      %v986 = vadd.f32 %v578, %v985
      %v987 = vpop.f32.mrf.mxu0
      %v988 = vadd.f32 %v578, %v987
      %989 = vmatmul.bf16.gmra.mxu0 %v718
      %v990 = vpop.f32.mrf.mxu0
      %v991 = vadd.f32 %v578, %v990
      %v992 = vpop.f32.mrf.mxu0
      %v993 = vadd.f32 %v578, %v992
      %994 = vmatmul.bf16.gmra.mxu0 %v720
      %v995 = vpop.f32.mrf.mxu0
      %v996 = vadd.f32 %v578, %v995
      %v997 = vpop.f32.mrf.mxu0
      %v998 = vadd.f32 %v578, %v997
      %999 = vmatmul.bf16.gmra.mxu0 %v722
      %v1000 = vpop.f32.mrf.mxu0
      %v1001 = vadd.f32 %v578, %v1000
      %v1002 = vpop.f32.mrf.mxu0
      %v1003 = vadd.f32 %v578, %v1002
      %1004 = vmatmul.bf16.gmra.mxu0 %v724
      %v1005 = vpop.f32.mrf.mxu0
      %v1006 = vadd.f32 %v578, %v1005
      %v1007 = vpop.f32.mrf.mxu0
      %v1008 = vadd.f32 %v578, %v1007
      %1009 = vdwg.mxu0
      %1010 = vmatpush.bf16.msra.mxu0 0
      %1011 = vmatpush.bf16.msra.mxu0 0
      %1012 = vmatpush.bf16.msra.mxu0 0
      %1013 = vmatpush.bf16.msra.mxu0 0
      %1014 = vmatpush.bf16.msra.mxu0 0
      %1015 = vmatpush.bf16.msra.mxu0 %v906
      %1016 = vmatpush.bf16.msra.mxu0 %v825
      %1017 = vmatpush.bf16.msra.mxu0 %v823
      %1018 = vmatmul.bf16.gmra.mxu0 %v851
      %v1019 = vpop.f32.mrf.mxu0
      %v1020 = vadd.f32 %v921, %v1019
      %v1021 = vpop.f32.mrf.mxu0
      %v1022 = vadd.f32 %v923, %v1021
      %1023 = vmatmul.bf16.gmra.mxu0 %v854
      %v1024 = vpop.f32.mrf.mxu0
      %v1025 = vadd.f32 %v926, %v1024
      %v1026 = vpop.f32.mrf.mxu0
      %v1027 = vadd.f32 %v928, %v1026
      %1028 = vmatmul.bf16.gmra.mxu0 %v857
      %v1029 = vpop.f32.mrf.mxu0
      %v1030 = vadd.f32 %v931, %v1029
      %v1031 = vpop.f32.mrf.mxu0
      %v1032 = vadd.f32 %v933, %v1031
      %1033 = vmatmul.bf16.gmra.mxu0 %v860
      %v1034 = vpop.f32.mrf.mxu0
      %v1035 = vadd.f32 %v936, %v1034
      %v1036 = vpop.f32.mrf.mxu0
      %v1037 = vadd.f32 %v938, %v1036
      %1038 = vmatmul.bf16.gmra.mxu0 %v863
      %v1039 = vpop.f32.mrf.mxu0
      %v1040 = vadd.f32 %v941, %v1039
      %v1041 = vpop.f32.mrf.mxu0
      %v1042 = vadd.f32 %v943, %v1041
      %1043 = vmatmul.bf16.gmra.mxu0 %v866
      %v1044 = vpop.f32.mrf.mxu0
      %v1045 = vadd.f32 %v946, %v1044
      %v1046 = vpop.f32.mrf.mxu0
      %v1047 = vadd.f32 %v948, %v1046
      %1048 = vmatmul.bf16.gmra.mxu0 %v869
      %v1049 = vpop.f32.mrf.mxu0
      %v1050 = vadd.f32 %v951, %v1049
      %v1051 = vpop.f32.mrf.mxu0
      %v1052 = vadd.f32 %v953, %v1051
      %1053 = vmatmul.bf16.gmra.mxu0 %v872
      %v1054 = vpop.f32.mrf.mxu0
      %v1055 = vadd.f32 %v956, %v1054
      %v1056 = vpop.f32.mrf.mxu0
      %v1057 = vadd.f32 %v958, %v1056
      %1058 = vmatmul.bf16.gmra.mxu0 %v875
      %v1059 = vpop.f32.mrf.mxu0
      %v1060 = vadd.f32 %v961, %v1059
      %v1061 = vpop.f32.mrf.mxu0
      %v1062 = vadd.f32 %v963, %v1061
      %1063 = vmatmul.bf16.gmra.mxu0 %v878
      %v1064 = vpop.f32.mrf.mxu0
      %v1065 = vadd.f32 %v966, %v1064
      %v1066 = vpop.f32.mrf.mxu0
      %v1067 = vadd.f32 %v968, %v1066
      %1068 = vmatmul.bf16.gmra.mxu0 %v881
      %v1069 = vpop.f32.mrf.mxu0
      %v1070 = vadd.f32 %v971, %v1069
      %v1071 = vpop.f32.mrf.mxu0
      %v1072 = vadd.f32 %v973, %v1071
      %1073 = vmatmul.bf16.gmra.mxu0 %v884
      %v1074 = vpop.f32.mrf.mxu0
      %v1075 = vadd.f32 %v976, %v1074
      %v1076 = vpop.f32.mrf.mxu0
      %v1077 = vadd.f32 %v978, %v1076
      %1078 = vmatmul.bf16.gmra.mxu0 %v887
      %v1079 = vpop.f32.mrf.mxu0
      %v1080 = vadd.f32 %v981, %v1079
      %v1081 = vpop.f32.mrf.mxu0
      %v1082 = vadd.f32 %v983, %v1081
      %1083 = vmatmul.bf16.gmra.mxu0 %v890
      %v1084 = vpop.f32.mrf.mxu0
      %v1085 = vadd.f32 %v986, %v1084
      %v1086 = vpop.f32.mrf.mxu0
      %v1087 = vadd.f32 %v988, %v1086
      %1088 = vmatmul.bf16.gmra.mxu0 %v893
      %v1089 = vpop.f32.mrf.mxu0
      %v1090 = vadd.f32 %v991, %v1089
      %v1091 = vpop.f32.mrf.mxu0
      %v1092 = vadd.f32 %v993, %v1091
      %1093 = vmatmul.bf16.gmra.mxu0 %v896
      %v1094 = vpop.f32.mrf.mxu0
      %v1095 = vadd.f32 %v996, %v1094
      %v1096 = vpop.f32.mrf.mxu0
      %v1097 = vadd.f32 %v998, %v1096
      %1098 = vmatmul.bf16.gmra.mxu0 %v899
      %v1099 = vpop.f32.mrf.mxu0
      %v1100 = vadd.f32 %v1001, %v1099
      %v1101 = vpop.f32.mrf.mxu0
      %v1102 = vadd.f32 %v1003, %v1101
      %1103 = vmatmul.bf16.gmra.mxu0 %v902
      %v1104 = vpop.f32.mrf.mxu0
      %v1105 = vadd.f32 %v1006, %v1104
      %v1106 = vpop.f32.mrf.mxu0
      %v1107 = vadd.f32 %v1008, %v1106
      %1108 = vdwg.mxu0
      %1109 = vmatpush.bf16.msra.mxu0 %v822
      %1110 = vmatpush.bf16.msra.mxu0 %v820
      %1111 = vmatpush.bf16.msra.mxu0 %v818
      %1112 = vmatpush.bf16.msra.mxu0 %v816
      %1113 = vmatpush.bf16.msra.mxu0 %v814
      %1114 = vmatpush.bf16.msra.mxu0 %v812
      %1115 = vmatpush.bf16.msra.mxu0 %v810
      %1116 = vmatpush.bf16.msra.mxu0 %v808
      %1117 = vmatmul.bf16.gmra.mxu0 %v690
      %v1118 = vpop.f32.mrf.mxu0
      %v1119 = vadd.f32 %v579, %v1118
      %v1120 = vpop.f32.mrf.mxu0
      %v1121 = vadd.f32 %v579, %v1120
      %1122 = vmatmul.bf16.gmra.mxu0 %v692
      %v1123 = vpop.f32.mrf.mxu0
      %v1124 = vadd.f32 %v579, %v1123
      %v1125 = vpop.f32.mrf.mxu0
      %v1126 = vadd.f32 %v579, %v1125
      %1127 = vmatmul.bf16.gmra.mxu0 %v694
      %v1128 = vpop.f32.mrf.mxu0
      %v1129 = vadd.f32 %v579, %v1128
      %v1130 = vpop.f32.mrf.mxu0
      %v1131 = vadd.f32 %v579, %v1130
      %1132 = vmatmul.bf16.gmra.mxu0 %v696
      %v1133 = vpop.f32.mrf.mxu0
      %v1134 = vadd.f32 %v579, %v1133
      %v1135 = vpop.f32.mrf.mxu0
      %v1136 = vadd.f32 %v579, %v1135
      %1137 = vmatmul.bf16.gmra.mxu0 %v698
      %v1138 = vpop.f32.mrf.mxu0
      %v1139 = vadd.f32 %v579, %v1138
      %v1140 = vpop.f32.mrf.mxu0
      %v1141 = vadd.f32 %v579, %v1140
      %1142 = vmatmul.bf16.gmra.mxu0 %v700
      %v1143 = vpop.f32.mrf.mxu0
      %v1144 = vadd.f32 %v579, %v1143
      %v1145 = vpop.f32.mrf.mxu0
      %v1146 = vadd.f32 %v579, %v1145
      %1147 = vmatmul.bf16.gmra.mxu0 %v702
      %v1148 = vpop.f32.mrf.mxu0
      %v1149 = vadd.f32 %v579, %v1148
      %v1150 = vpop.f32.mrf.mxu0
      %v1151 = vadd.f32 %v579, %v1150
      %1152 = vmatmul.bf16.gmra.mxu0 %v704
      %v1153 = vpop.f32.mrf.mxu0
      %v1154 = vadd.f32 %v579, %v1153
      %v1155 = vpop.f32.mrf.mxu0
      %v1156 = vadd.f32 %v579, %v1155
      %1157 = vmatmul.bf16.gmra.mxu0 %v706
      %v1158 = vpop.f32.mrf.mxu0
      %v1159 = vadd.f32 %v579, %v1158
      %v1160 = vpop.f32.mrf.mxu0
      %v1161 = vadd.f32 %v579, %v1160
      %1162 = vmatmul.bf16.gmra.mxu0 %v708
      %v1163 = vpop.f32.mrf.mxu0
      %v1164 = vadd.f32 %v579, %v1163
      %v1165 = vpop.f32.mrf.mxu0
      %v1166 = vadd.f32 %v579, %v1165
      %1167 = vmatmul.bf16.gmra.mxu0 %v710
      %v1168 = vpop.f32.mrf.mxu0
      %v1169 = vadd.f32 %v579, %v1168
      %v1170 = vpop.f32.mrf.mxu0
      %v1171 = vadd.f32 %v579, %v1170
      %1172 = vmatmul.bf16.gmra.mxu0 %v712
      %v1173 = vpop.f32.mrf.mxu0
      %v1174 = vadd.f32 %v579, %v1173
      %v1175 = vpop.f32.mrf.mxu0
      %v1176 = vadd.f32 %v579, %v1175
      %1177 = vmatmul.bf16.gmra.mxu0 %v714
      %v1178 = vpop.f32.mrf.mxu0
      %v1179 = vadd.f32 %v579, %v1178
      %v1180 = vpop.f32.mrf.mxu0
      %v1181 = vadd.f32 %v579, %v1180
      %1182 = vmatmul.bf16.gmra.mxu0 %v716
      %v1183 = vpop.f32.mrf.mxu0
      %v1184 = vadd.f32 %v579, %v1183
      %v1185 = vpop.f32.mrf.mxu0
      %v1186 = vadd.f32 %v579, %v1185
      %1187 = vmatmul.bf16.gmra.mxu0 %v718
      %v1188 = vpop.f32.mrf.mxu0
      %v1189 = vadd.f32 %v579, %v1188
      %v1190 = vpop.f32.mrf.mxu0
      %v1191 = vadd.f32 %v579, %v1190
      %1192 = vmatmul.bf16.gmra.mxu0 %v720
      %v1193 = vpop.f32.mrf.mxu0
      %v1194 = vadd.f32 %v579, %v1193
      %v1195 = vpop.f32.mrf.mxu0
      %v1196 = vadd.f32 %v579, %v1195
      %1197 = vmatmul.bf16.gmra.mxu0 %v722
      %v1198 = vpop.f32.mrf.mxu0
      %v1199 = vadd.f32 %v579, %v1198
      %v1200 = vpop.f32.mrf.mxu0
      %v1201 = vadd.f32 %v579, %v1200
      %1202 = vmatmul.bf16.gmra.mxu0 %v724
      %v1203 = vpop.f32.mrf.mxu0
      %v1204 = vadd.f32 %v579, %v1203
      %v1205 = vpop.f32.mrf.mxu0
      %v1206 = vadd.f32 %v579, %v1205
      %1207 = vdwg.mxu0
      %1208 = vmatpush.bf16.msra.mxu0 0
      %1209 = vmatpush.bf16.msra.mxu0 0
      %1210 = vmatpush.bf16.msra.mxu0 0
      %1211 = vmatpush.bf16.msra.mxu0 0
      %1212 = vmatpush.bf16.msra.mxu0 0
      %1213 = vmatpush.bf16.msra.mxu0 %v909
      %1214 = vmatpush.bf16.msra.mxu0 %v826
      %1215 = vmatpush.bf16.msra.mxu0 %v824
      %1216 = vmatmul.bf16.gmra.mxu0 %v851
      %v1217 = vpop.f32.mrf.mxu0
      %v1218 = vadd.f32 %v1119, %v1217
      %v1219 = vpop.f32.mrf.mxu0
      %v1220 = vadd.f32 %v1121, %v1219
      %1221 = vmatmul.bf16.gmra.mxu0 %v854
      %v1222 = vpop.f32.mrf.mxu0
      %v1223 = vadd.f32 %v1124, %v1222
      %v1224 = vpop.f32.mrf.mxu0
      %v1225 = vadd.f32 %v1126, %v1224
      %1226 = vmatmul.bf16.gmra.mxu0 %v857
      %v1227 = vpop.f32.mrf.mxu0
      %v1228 = vadd.f32 %v1129, %v1227
      %v1229 = vpop.f32.mrf.mxu0
      %v1230 = vadd.f32 %v1131, %v1229
      %1231 = vmatmul.bf16.gmra.mxu0 %v860
      %v1232 = vpop.f32.mrf.mxu0
      %v1233 = vadd.f32 %v1134, %v1232
      %v1234 = vpop.f32.mrf.mxu0
      %v1235 = vadd.f32 %v1136, %v1234
      %1236 = vmatmul.bf16.gmra.mxu0 %v863
      %v1237 = vpop.f32.mrf.mxu0
      %v1238 = vadd.f32 %v1139, %v1237
      %v1239 = vpop.f32.mrf.mxu0
      %v1240 = vadd.f32 %v1141, %v1239
      %1241 = vmatmul.bf16.gmra.mxu0 %v866
      %v1242 = vpop.f32.mrf.mxu0
      %v1243 = vadd.f32 %v1144, %v1242
      %v1244 = vpop.f32.mrf.mxu0
      %v1245 = vadd.f32 %v1146, %v1244
      %1246 = vmatmul.bf16.gmra.mxu0 %v869
      %v1247 = vpop.f32.mrf.mxu0
      %v1248 = vadd.f32 %v1149, %v1247
      %v1249 = vpop.f32.mrf.mxu0
      %v1250 = vadd.f32 %v1151, %v1249
      %1251 = vmatmul.bf16.gmra.mxu0 %v872
      %v1252 = vpop.f32.mrf.mxu0
      %v1253 = vadd.f32 %v1154, %v1252
      %v1254 = vpop.f32.mrf.mxu0
      %v1255 = vadd.f32 %v1156, %v1254
      %1256 = vmatmul.bf16.gmra.mxu0 %v875
      %v1257 = vpop.f32.mrf.mxu0
      %v1258 = vadd.f32 %v1159, %v1257
      %v1259 = vpop.f32.mrf.mxu0
      %v1260 = vadd.f32 %v1161, %v1259
      %1261 = vmatmul.bf16.gmra.mxu0 %v878
      %v1262 = vpop.f32.mrf.mxu0
      %v1263 = vadd.f32 %v1164, %v1262
      %v1264 = vpop.f32.mrf.mxu0
      %v1265 = vadd.f32 %v1166, %v1264
      %1266 = vmatmul.bf16.gmra.mxu0 %v881
      %v1267 = vpop.f32.mrf.mxu0
      %v1268 = vadd.f32 %v1169, %v1267
      %v1269 = vpop.f32.mrf.mxu0
      %v1270 = vadd.f32 %v1171, %v1269
      %1271 = vmatmul.bf16.gmra.mxu0 %v884
      %v1272 = vpop.f32.mrf.mxu0
      %v1273 = vadd.f32 %v1174, %v1272
      %v1274 = vpop.f32.mrf.mxu0
      %v1275 = vadd.f32 %v1176, %v1274
      %1276 = vmatmul.bf16.gmra.mxu0 %v887
      %v1277 = vpop.f32.mrf.mxu0
      %v1278 = vadd.f32 %v1179, %v1277
      %v1279 = vpop.f32.mrf.mxu0
      %v1280 = vadd.f32 %v1181, %v1279
      %1281 = vmatmul.bf16.gmra.mxu0 %v890
      %v1282 = vpop.f32.mrf.mxu0
      %v1283 = vadd.f32 %v1184, %v1282
      %v1284 = vpop.f32.mrf.mxu0
      %v1285 = vadd.f32 %v1186, %v1284
      %1286 = vmatmul.bf16.gmra.mxu0 %v893
      %v1287 = vpop.f32.mrf.mxu0
      %v1288 = vadd.f32 %v1189, %v1287
      %v1289 = vpop.f32.mrf.mxu0
      %v1290 = vadd.f32 %v1191, %v1289
      %1291 = vmatmul.bf16.gmra.mxu0 %v896
      %v1292 = vpop.f32.mrf.mxu0
      %v1293 = vadd.f32 %v1194, %v1292
      %v1294 = vpop.f32.mrf.mxu0
      %v1295 = vadd.f32 %v1196, %v1294
      %1296 = vmatmul.bf16.gmra.mxu0 %v899
      %v1297 = vpop.f32.mrf.mxu0
      %v1298 = vadd.f32 %v1199, %v1297
      %v1299 = vpop.f32.mrf.mxu0
      %v1300 = vadd.f32 %v1201, %v1299
      %1301 = vmatmul.bf16.gmra.mxu0 %v902
      %v1302 = vpop.f32.mrf.mxu0
      %v1303 = vadd.f32 %v1204, %v1302
      %v1304 = vpop.f32.mrf.mxu0
      %v1305 = vadd.f32 %v1206, %v1304
      %1306 = vdwg.mxu0
      %v1307 = vmul.f32 %v1020, 0.2
      %v1308 = vmul.f32 %v1218, 0.2
      %v1309 = vmul.f32 %v1022, 0.2
      %v1310 = vmul.f32 %v1220, 0.2
      %v1311 = vmul.f32 %v1025, 0.2
      %v1312 = vmul.f32 %v1223, 0.2
      %v1313 = vmul.f32 %v1027, 0.2
      %v1314 = vmul.f32 %v1225, 0.2
      %v1315 = vmul.f32 %v1030, 0.2
      %v1316 = vmul.f32 %v1228, 0.2
      %v1317 = vmul.f32 %v1032, 0.2
      %v1318 = vmul.f32 %v1230, 0.2
      %v1319 = vmul.f32 %v1035, 0.2
      %v1320 = vmul.f32 %v1233, 0.2
      %v1321 = vmul.f32 %v1037, 0.2
      %v1322 = vmul.f32 %v1235, 0.2
      %v1323 = vmul.f32 %v1040, 0.2
      %v1324 = vmul.f32 %v1238, 0.2
      %v1325 = vmul.f32 %v1042, 0.2
      %v1326 = vmul.f32 %v1240, 0.2
      %v1327 = vmul.f32 %v1045, 0.2
      %v1328 = vmul.f32 %v1243, 0.2
      %v1329 = vmul.f32 %v1047, 0.2
      %v1330 = vmul.f32 %v1245, 0.2
      %v1331 = vmul.f32 %v1050, 0.2
      %v1332 = vmul.f32 %v1248, 0.2
      %v1333 = vmul.f32 %v1052, 0.2
      %v1334 = vmul.f32 %v1250, 0.2
      %v1335 = vmul.f32 %v1055, 0.2
      %v1336 = vmul.f32 %v1253, 0.2
      %v1337 = vmul.f32 %v1057, 0.2
      %v1338 = vmul.f32 %v1255, 0.2
      %v1339 = vmul.f32 %v1060, 0.2
      %v1340 = vmul.f32 %v1258, 0.2
      %v1341 = vmul.f32 %v1062, 0.2
      %v1342 = vmul.f32 %v1260, 0.2
      %v1343 = vmul.f32 %v1065, 0.2
      %v1344 = vmul.f32 %v1263, 0.2
      %v1345 = vmul.f32 %v1067, 0.2
      %v1346 = vmul.f32 %v1265, 0.2
      %v1347 = vmul.f32 %v1070, 0.2
      %v1348 = vmul.f32 %v1268, 0.2
      %v1349 = vmul.f32 %v1072, 0.2
      %v1350 = vmul.f32 %v1270, 0.2
      %v1351 = vmul.f32 %v1075, 0.2
      %v1352 = vmul.f32 %v1273, 0.2
      %v1353 = vmul.f32 %v1077, 0.2
      %v1354 = vmul.f32 %v1275, 0.2
      %v1355 = vmul.f32 %v1080, 0.2
      %v1356 = vmul.f32 %v1278, 0.2
      %v1357 = vmul.f32 %v1082, 0.2
      %v1358 = vmul.f32 %v1280, 0.2
      %v1359 = vmul.f32 %v1085, 0.2
      %v1360 = vmul.f32 %v1283, 0.2
      %v1361 = vmul.f32 %v1087, 0.2
      %v1362 = vmul.f32 %v1285, 0.2
      %v1363 = vmul.f32 %v1090, 0.2
      %v1364 = vmul.f32 %v1288, 0.2
      %v1365 = vmul.f32 %v1092, 0.2
      %v1366 = vmul.f32 %v1290, 0.2
      %v1367 = vmul.f32 %v1095, 0.2
      %v1368 = vmul.f32 %v1293, 0.2
      %v1369 = vmul.f32 %v1097, 0.2
      %v1370 = vmul.f32 %v1295, 0.2
      %v1371 = vmul.f32 %v1100, 0.2
      %v1372 = vmul.f32 %v1298, 0.2
      %v1373 = vmul.f32 %v1102, 0.2
      %v1374 = vmul.f32 %v1300, 0.2
      %v1375 = vmul.f32 %v1105, 0.2
      %v1376 = vmul.f32 %v1303, 0.2
      %v1377 = vmul.f32 %v1107, 0.2
      %v1378 = vmul.f32 %v1305, 0.2
      %v1379 = vmax.f32 %v1020, %v1307
      %v1380 = vmax.f32 %v1218, %v1308
      %v1381 = vmax.f32 %v1022, %v1309
      %v1382 = vmax.f32 %v1220, %v1310
      %v1383 = vmax.f32 %v1025, %v1311
      %v1384 = vmax.f32 %v1223, %v1312
      %v1385 = vmax.f32 %v1027, %v1313
      %v1386 = vmax.f32 %v1225, %v1314
      %v1387 = vmax.f32 %v1030, %v1315
      %v1388 = vmax.f32 %v1228, %v1316
      %v1389 = vmax.f32 %v1032, %v1317
      %v1390 = vmax.f32 %v1230, %v1318
      %v1391 = vmax.f32 %v1035, %v1319
      %v1392 = vmax.f32 %v1233, %v1320
      %v1393 = vmax.f32 %v1037, %v1321
      %v1394 = vmax.f32 %v1235, %v1322
      %v1395 = vmax.f32 %v1040, %v1323
      %v1396 = vmax.f32 %v1238, %v1324
      %v1397 = vmax.f32 %v1042, %v1325
      %v1398 = vmax.f32 %v1240, %v1326
      %v1399 = vmax.f32 %v1045, %v1327
      %v1400 = vmax.f32 %v1243, %v1328
      %v1401 = vmax.f32 %v1047, %v1329
      %v1402 = vmax.f32 %v1245, %v1330
      %v1403 = vmax.f32 %v1050, %v1331
      %v1404 = vmax.f32 %v1248, %v1332
      %v1405 = vmax.f32 %v1052, %v1333
      %v1406 = vmax.f32 %v1250, %v1334
      %v1407 = vmax.f32 %v1055, %v1335
      %v1408 = vmax.f32 %v1253, %v1336
      %v1409 = vmax.f32 %v1057, %v1337
      %v1410 = vmax.f32 %v1255, %v1338
      %v1411 = vmax.f32 %v1060, %v1339
      %v1412 = vmax.f32 %v1258, %v1340
      %v1413 = vmax.f32 %v1062, %v1341
      %v1414 = vmax.f32 %v1260, %v1342
      %v1415 = vmax.f32 %v1065, %v1343
      %v1416 = vmax.f32 %v1263, %v1344
      %v1417 = vmax.f32 %v1067, %v1345
      %v1418 = vmax.f32 %v1265, %v1346
      %v1419 = vmax.f32 %v1070, %v1347
      %v1420 = vmax.f32 %v1268, %v1348
      %v1421 = vmax.f32 %v1072, %v1349
      %v1422 = vmax.f32 %v1270, %v1350
      %v1423 = vmax.f32 %v1075, %v1351
      %v1424 = vmax.f32 %v1273, %v1352
      %v1425 = vmax.f32 %v1077, %v1353
      %v1426 = vmax.f32 %v1275, %v1354
      %v1427 = vmax.f32 %v1080, %v1355
      %v1428 = vmax.f32 %v1278, %v1356
      %v1429 = vmax.f32 %v1082, %v1357
      %v1430 = vmax.f32 %v1280, %v1358
      %v1431 = vmax.f32 %v1085, %v1359
      %v1432 = vmax.f32 %v1283, %v1360
      %v1433 = vmax.f32 %v1087, %v1361
      %v1434 = vmax.f32 %v1285, %v1362
      %v1435 = vmax.f32 %v1090, %v1363
      %v1436 = vmax.f32 %v1288, %v1364
      %v1437 = vmax.f32 %v1092, %v1365
      %v1438 = vmax.f32 %v1290, %v1366
      %v1439 = vmax.f32 %v1095, %v1367
      %v1440 = vmax.f32 %v1293, %v1368
      %v1441 = vmax.f32 %v1097, %v1369
      %v1442 = vmax.f32 %v1295, %v1370
      %v1443 = vmax.f32 %v1100, %v1371
      %v1444 = vmax.f32 %v1298, %v1372
      %v1445 = vmax.f32 %v1102, %v1373
      %v1446 = vmax.f32 %v1300, %v1374
      %v1447 = vmax.f32 %v1105, %v1375
      %v1448 = vmax.f32 %v1303, %v1376
      %v1449 = vmax.f32 %v1107, %v1377
      %v1450 = vmax.f32 %v1305, %v1378
      %1451 = vst [vmem:[%s508] sm:$0xff] %v1379
      %1452 = vst [vmem:[%s508 + $0x8] sm:$0xff] %v1380
      %1453 = vst [vmem:[%s508 + $0x10] sm:$0xff] %v1381
      %1454 = vst [vmem:[%s508 + $0x18] sm:$0xff] %v1382
      %1455 = vst [vmem:[%s508 + $0x20] sm:$0xff] %v1383
      %1456 = vst [vmem:[%s508 + $0x28] sm:$0xff] %v1384
      %1457 = vst [vmem:[%s508 + $0x30] sm:$0xff] %v1385
      %1458 = vst [vmem:[%s508 + $0x38] sm:$0xff] %v1386
      %1459 = vst [vmem:[%s508 + $0x40] sm:$0xff] %v1387
      %1460 = vst [vmem:[%s508 + $0x48] sm:$0xff] %v1388
      %1461 = vst [vmem:[%s508 + $0x50] sm:$0xff] %v1389
      %1462 = vst [vmem:[%s508 + $0x58] sm:$0xff] %v1390
      %1463 = vst [vmem:[%s508 + $0x60] sm:$0xff] %v1391
      %1464 = vst [vmem:[%s508 + $0x68] sm:$0xff] %v1392
      %1465 = vst [vmem:[%s508 + $0x70] sm:$0xff] %v1393
      %1466 = vst [vmem:[%s508 + $0x78] sm:$0xff] %v1394
      %1467 = vst [vmem:[%s508 + $0x80] sm:$0xff] %v1395
      %1468 = vst [vmem:[%s508 + $0x88] sm:$0xff] %v1396
      %1469 = vst [vmem:[%s508 + $0x90] sm:$0xff] %v1397
      %1470 = vst [vmem:[%s508 + $0x98] sm:$0xff] %v1398
      %1471 = vst [vmem:[%s508 + $0xa0] sm:$0xff] %v1399
      %1472 = vst [vmem:[%s508 + $0xa8] sm:$0xff] %v1400
      %1473 = vst [vmem:[%s508 + $0xb0] sm:$0xff] %v1401
      %1474 = vst [vmem:[%s508 + $0xb8] sm:$0xff] %v1402
      %1475 = vst [vmem:[%s508 + $0xc0] sm:$0xff] %v1403
      %1476 = vst [vmem:[%s508 + $0xc8] sm:$0xff] %v1404
      %1477 = vst [vmem:[%s508 + $0xd0] sm:$0xff] %v1405
      %1478 = vst [vmem:[%s508 + $0xd8] sm:$0xff] %v1406
      %1479 = vst [vmem:[%s508 + $0xe0] sm:$0xff] %v1407
      %1480 = vst [vmem:[%s508 + $0xe8] sm:$0xff] %v1408
      %1481 = vst [vmem:[%s508 + $0xf0] sm:$0xff] %v1409
      %1482 = vst [vmem:[%s508 + $0xf8] sm:$0xff] %v1410
      %1483 = vst [vmem:[%s508 + $0x100] sm:$0xff] %v1411
      %1484 = vst [vmem:[%s508 + $0x108] sm:$0xff] %v1412
      %1485 = vst [vmem:[%s508 + $0x110] sm:$0xff] %v1413
      %1486 = vst [vmem:[%s508 + $0x118] sm:$0xff] %v1414
      %1487 = vst [vmem:[%s508 + $0x120] sm:$0xff] %v1415
      %1488 = vst [vmem:[%s508 + $0x128] sm:$0xff] %v1416
      %1489 = vst [vmem:[%s508 + $0x130] sm:$0xff] %v1417
      %1490 = vst [vmem:[%s508 + $0x138] sm:$0xff] %v1418
      %1491 = vst [vmem:[%s508 + $0x140] sm:$0xff] %v1419
      %1492 = vst [vmem:[%s508 + $0x148] sm:$0xff] %v1420
      %1493 = vst [vmem:[%s508 + $0x150] sm:$0xff] %v1421
      %1494 = vst [vmem:[%s508 + $0x158] sm:$0xff] %v1422
      %1495 = vst [vmem:[%s508 + $0x160] sm:$0xff] %v1423
      %1496 = vst [vmem:[%s508 + $0x168] sm:$0xff] %v1424
      %1497 = vst [vmem:[%s508 + $0x170] sm:$0xff] %v1425
      %1498 = vst [vmem:[%s508 + $0x178] sm:$0xff] %v1426
      %1499 = vst [vmem:[%s508 + $0x180] sm:$0xff] %v1427
      %1500 = vst [vmem:[%s508 + $0x188] sm:$0xff] %v1428
      %1501 = vst [vmem:[%s508 + $0x190] sm:$0xff] %v1429
      %1502 = vst [vmem:[%s508 + $0x198] sm:$0xff] %v1430
      %1503 = vst [vmem:[%s508 + $0x1a0] sm:$0xff] %v1431
      %1504 = vst [vmem:[%s508 + $0x1a8] sm:$0xff] %v1432
      %1505 = vst [vmem:[%s508 + $0x1b0] sm:$0xff] %v1433
      %1506 = vst [vmem:[%s508 + $0x1b8] sm:$0xff] %v1434
      %1507 = vst [vmem:[%s508 + $0x1c0] sm:$0xff] %v1435
      %1508 = vst [vmem:[%s508 + $0x1c8] sm:$0xff] %v1436
      %1509 = vst [vmem:[%s508 + $0x1d0] sm:$0xff] %v1437
      %1510 = vst [vmem:[%s508 + $0x1d8] sm:$0xff] %v1438
      %1511 = vst [vmem:[%s508 + $0x1e0] sm:$0xff] %v1439
      %1512 = vst [vmem:[%s508 + $0x1e8] sm:$0xff] %v1440
      %1513 = vst [vmem:[%s508 + $0x1f0] sm:$0xff] %v1441
      %1514 = vst [vmem:[%s508 + $0x1f8] sm:$0xff] %v1442
      %1515 = vst [vmem:[%s508 + $0x200] sm:$0xff] %v1443
      %1516 = vst [vmem:[%s508 + $0x208] sm:$0xff] %v1444
      %1517 = vst [vmem:[%s508 + $0x210] sm:$0xff] %v1445
      %1518 = vst [vmem:[%s508 + $0x218] sm:$0xff] %v1446
      %1519 = vst [vmem:[%s508 + $0x220] sm:$0xff] %v1447
      %1520 = vst [vmem:[%s508 + $0x228] sm:$0xff] %v1448
      %1521 = vst [vmem:[%s508 + $0x230] sm:$0xff] %v1449
      %1522 = vst [vmem:[%s508 + $0x238] sm:$0xff] %v1450
      %v1523 = vld [vmem:[%s508] sm:$0xff]
      %v1524 = vld [vmem:[%s508 + $0x8] sm:$0xff]
      %v1525 = vld [vmem:[%s508 + $0x10] sm:$0xff]
      %v1526 = vld [vmem:[%s508 + $0x18] sm:$0xff]
      %v1527 = vld [vmem:[%s508 + $0x20] sm:$0xff]
      %v1528 = vld [vmem:[%s508 + $0x28] sm:$0xff]
      %v1529 = vld [vmem:[%s508 + $0x30] sm:$0xff]
      %v1530 = vld [vmem:[%s508 + $0x38] sm:$0xff]
      %v1531 = vld [vmem:[%s508 + $0x40] sm:$0xff]
      %v1532 = vld [vmem:[%s508 + $0x48] sm:$0xff]
      %v1533 = vld [vmem:[%s508 + $0x50] sm:$0xff]
      %v1534 = vld [vmem:[%s508 + $0x58] sm:$0xff]
      %v1535 = vld [vmem:[%s508 + $0x60] sm:$0xff]
      %v1536 = vld [vmem:[%s508 + $0x68] sm:$0xff]
      %v1537 = vld [vmem:[%s508 + $0x70] sm:$0xff]
      %v1538 = vld [vmem:[%s508 + $0x78] sm:$0xff]
      %v1539 = vld [vmem:[%s508 + $0x80] sm:$0xff]
      %v1540 = vld [vmem:[%s508 + $0x88] sm:$0xff]
      %v1541 = vld [vmem:[%s508 + $0x90] sm:$0xff]
      %v1542 = vld [vmem:[%s508 + $0x98] sm:$0xff]
      %v1543 = vld [vmem:[%s508 + $0xa0] sm:$0xff]
      %v1544 = vld [vmem:[%s508 + $0xa8] sm:$0xff]
      %v1545 = vld [vmem:[%s508 + $0xb0] sm:$0xff]
      %v1546 = vld [vmem:[%s508 + $0xb8] sm:$0xff]
      %v1547 = vld [vmem:[%s508 + $0xc0] sm:$0xff]
      %v1548 = vld [vmem:[%s508 + $0xc8] sm:$0xff]
      %v1549 = vld [vmem:[%s508 + $0xd0] sm:$0xff]
      %v1550 = vld [vmem:[%s508 + $0xd8] sm:$0xff]
      %v1551 = vld [vmem:[%s508 + $0xe0] sm:$0xff]
      %v1552 = vld [vmem:[%s508 + $0xe8] sm:$0xff]
      %v1553 = vld [vmem:[%s508 + $0xf0] sm:$0xff]
      %v1554 = vld [vmem:[%s508 + $0xf8] sm:$0xff]
      %v1555 = vld [vmem:[%s508 + $0x100] sm:$0xff]
      %v1556 = vld [vmem:[%s508 + $0x108] sm:$0xff]
      %v1557 = vld [vmem:[%s508 + $0x110] sm:$0xff]
      %v1558 = vld [vmem:[%s508 + $0x118] sm:$0xff]
      %v1559 = vld [vmem:[%s508 + $0x120] sm:$0xff]
      %v1560 = vld [vmem:[%s508 + $0x128] sm:$0xff]
      %v1561 = vld [vmem:[%s508 + $0x130] sm:$0xff]
      %v1562 = vld [vmem:[%s508 + $0x138] sm:$0xff]
      %v1563 = vld [vmem:[%s508 + $0x140] sm:$0xff]
      %v1564 = vld [vmem:[%s508 + $0x148] sm:$0xff]
      %v1565 = vld [vmem:[%s508 + $0x150] sm:$0xff]
      %v1566 = vld [vmem:[%s508 + $0x158] sm:$0xff]
      %v1567 = vld [vmem:[%s508 + $0x160] sm:$0xff]
      %v1568 = vld [vmem:[%s508 + $0x168] sm:$0xff]
      %v1569 = vld [vmem:[%s508 + $0x170] sm:$0xff]
      %v1570 = vld [vmem:[%s508 + $0x178] sm:$0xff]
      %v1571 = vld [vmem:[%s508 + $0x180] sm:$0xff]
      %v1572 = vld [vmem:[%s508 + $0x188] sm:$0xff]
      %v1573 = vld [vmem:[%s508 + $0x190] sm:$0xff]
      %v1574 = vld [vmem:[%s508 + $0x198] sm:$0xff]
      %v1575 = vld [vmem:[%s508 + $0x1a0] sm:$0xff]
      %v1576 = vld [vmem:[%s508 + $0x1a8] sm:$0xff]
      %v1577 = vld [vmem:[%s508 + $0x1b0] sm:$0xff]
      %v1578 = vld [vmem:[%s508 + $0x1b8] sm:$0xff]
      %v1579 = vld [vmem:[%s508 + $0x1c0] sm:$0xff]
      %v1580 = vld [vmem:[%s508 + $0x1c8] sm:$0xff]
      %v1581 = vld [vmem:[%s508 + $0x1d0] sm:$0xff]
      %v1582 = vld [vmem:[%s508 + $0x1d8] sm:$0xff]
      %v1583 = vld [vmem:[%s508 + $0x1e0] sm:$0xff]
      %v1584 = vld [vmem:[%s508 + $0x1e8] sm:$0xff]
      %v1585 = vld [vmem:[%s508 + $0x1f0] sm:$0xff]
      %v1586 = vld [vmem:[%s508 + $0x1f8] sm:$0xff]
      %v1587 = vld [vmem:[%s508 + $0x200] sm:$0xff]
      %v1588 = vld [vmem:[%s508 + $0x208] sm:$0xff]
      %v1589 = vld [vmem:[%s508 + $0x210] sm:$0x7]
      %v1590 = vld [vmem:[%s508 + $0x218] sm:$0x7]
      %v1591 = vld [vmem:[%s508] sm:$0xfe]
      %v1592 = vld [vmem:[%s508 + $0x8] sm:$0xfe]
      %v1593 = vld [vmem:[%s508 + $0x210] sm:$0xf]
      %v1594 = vld [vmem:[%s508 + $0x218] sm:$0xf]
      %vm1663 = vcmask 1046528
      %v1664 = vrot.slane %v1591, 1
      %v1665 = vrot.slane %v1525, 1
      %v1666 = vsel %vm1663, %v1664, %v1665
      %v1667 = vrot.slane %v1592, 1
      %v1668 = vrot.slane %v1526, 1
      %v1669 = vsel %vm1663, %v1667, %v1668
      %v1670 = vrot.slane %v1527, 1
      %v1671 = vsel %vm1663, %v1665, %v1670
      %v1672 = vrot.slane %v1528, 1
      %v1673 = vsel %vm1663, %v1668, %v1672
      %v1674 = vrot.slane %v1529, 1
      %v1675 = vsel %vm1663, %v1670, %v1674
      %v1676 = vrot.slane %v1530, 1
      %v1677 = vsel %vm1663, %v1672, %v1676
      %v1678 = vrot.slane %v1531, 1
      %v1679 = vsel %vm1663, %v1674, %v1678
      %v1680 = vrot.slane %v1532, 1
      %v1681 = vsel %vm1663, %v1676, %v1680
      %v1682 = vrot.slane %v1533, 1
      %v1683 = vsel %vm1663, %v1678, %v1682
      %v1684 = vrot.slane %v1534, 1
      %v1685 = vsel %vm1663, %v1680, %v1684
      %v1686 = vrot.slane %v1535, 1
      %v1687 = vsel %vm1663, %v1682, %v1686
      %v1688 = vrot.slane %v1536, 1
      %v1689 = vsel %vm1663, %v1684, %v1688
      %v1690 = vrot.slane %v1537, 1
      %v1691 = vsel %vm1663, %v1686, %v1690
      %v1692 = vrot.slane %v1538, 1
      %v1693 = vsel %vm1663, %v1688, %v1692
      %v1694 = vrot.slane %v1539, 1
      %v1695 = vsel %vm1663, %v1690, %v1694
      %v1696 = vrot.slane %v1540, 1
      %v1697 = vsel %vm1663, %v1692, %v1696
      %v1698 = vrot.slane %v1541, 1
      %v1699 = vsel %vm1663, %v1694, %v1698
      %v1700 = vrot.slane %v1542, 1
      %v1701 = vsel %vm1663, %v1696, %v1700
      %v1702 = vrot.slane %v1543, 1
      %v1703 = vsel %vm1663, %v1698, %v1702
      %v1704 = vrot.slane %v1544, 1
      %v1705 = vsel %vm1663, %v1700, %v1704
      %v1706 = vrot.slane %v1545, 1
      %v1707 = vsel %vm1663, %v1702, %v1706
      %v1708 = vrot.slane %v1546, 1
      %v1709 = vsel %vm1663, %v1704, %v1708
      %v1710 = vrot.slane %v1547, 1
      %v1711 = vsel %vm1663, %v1706, %v1710
      %v1712 = vrot.slane %v1548, 1
      %v1713 = vsel %vm1663, %v1708, %v1712
      %v1714 = vrot.slane %v1549, 1
      %v1715 = vsel %vm1663, %v1710, %v1714
      %v1716 = vrot.slane %v1550, 1
      %v1717 = vsel %vm1663, %v1712, %v1716
      %v1718 = vrot.slane %v1551, 1
      %v1719 = vsel %vm1663, %v1714, %v1718
      %v1720 = vrot.slane %v1552, 1
      %v1721 = vsel %vm1663, %v1716, %v1720
      %v1722 = vrot.slane %v1553, 1
      %v1723 = vsel %vm1663, %v1718, %v1722
      %v1724 = vrot.slane %v1554, 1
      %v1725 = vsel %vm1663, %v1720, %v1724
      %v1726 = vrot.slane %v1555, 1
      %v1727 = vsel %vm1663, %v1722, %v1726
      %v1728 = vrot.slane %v1556, 1
      %v1729 = vsel %vm1663, %v1724, %v1728
      %v1730 = vrot.slane %v1557, 1
      %v1731 = vsel %vm1663, %v1726, %v1730
      %v1732 = vrot.slane %v1558, 1
      %v1733 = vsel %vm1663, %v1728, %v1732
      %v1734 = vrot.slane %v1559, 1
      %v1735 = vsel %vm1663, %v1730, %v1734
      %v1736 = vrot.slane %v1560, 1
      %v1737 = vsel %vm1663, %v1732, %v1736
      %v1738 = vrot.slane %v1561, 1
      %v1739 = vsel %vm1663, %v1734, %v1738
      %v1740 = vrot.slane %v1562, 1
      %v1741 = vsel %vm1663, %v1736, %v1740
      %v1742 = vrot.slane %v1563, 1
      %v1743 = vsel %vm1663, %v1738, %v1742
      %v1744 = vrot.slane %v1564, 1
      %v1745 = vsel %vm1663, %v1740, %v1744
      %v1746 = vrot.slane %v1565, 1
      %v1747 = vsel %vm1663, %v1742, %v1746
      %v1748 = vrot.slane %v1566, 1
      %v1749 = vsel %vm1663, %v1744, %v1748
      %v1750 = vrot.slane %v1567, 1
      %v1751 = vsel %vm1663, %v1746, %v1750
      %v1752 = vrot.slane %v1568, 1
      %v1753 = vsel %vm1663, %v1748, %v1752
      %v1754 = vrot.slane %v1569, 1
      %v1755 = vsel %vm1663, %v1750, %v1754
      %v1756 = vrot.slane %v1570, 1
      %v1757 = vsel %vm1663, %v1752, %v1756
      %v1758 = vrot.slane %v1571, 1
      %v1759 = vsel %vm1663, %v1754, %v1758
      %v1760 = vrot.slane %v1572, 1
      %v1761 = vsel %vm1663, %v1756, %v1760
      %v1762 = vrot.slane %v1573, 1
      %v1763 = vsel %vm1663, %v1758, %v1762
      %v1764 = vrot.slane %v1574, 1
      %v1765 = vsel %vm1663, %v1760, %v1764
      %v1766 = vrot.slane %v1575, 1
      %v1767 = vsel %vm1663, %v1762, %v1766
      %v1768 = vrot.slane %v1576, 1
      %v1769 = vsel %vm1663, %v1764, %v1768
      %v1770 = vrot.slane %v1577, 1
      %v1771 = vsel %vm1663, %v1766, %v1770
      %v1772 = vrot.slane %v1578, 1
      %v1773 = vsel %vm1663, %v1768, %v1772
      %v1774 = vrot.slane %v1579, 1
      %v1775 = vsel %vm1663, %v1770, %v1774
      %v1776 = vrot.slane %v1580, 1
      %v1777 = vsel %vm1663, %v1772, %v1776
      %v1778 = vrot.slane %v1581, 1
      %v1779 = vsel %vm1663, %v1774, %v1778
      %v1780 = vrot.slane %v1582, 1
      %v1781 = vsel %vm1663, %v1776, %v1780
      %v1782 = vrot.slane %v1583, 1
      %v1783 = vsel %vm1663, %v1778, %v1782
      %v1784 = vrot.slane %v1584, 1
      %v1785 = vsel %vm1663, %v1780, %v1784
      %v1786 = vrot.slane %v1585, 1
      %v1787 = vsel %vm1663, %v1782, %v1786
      %v1788 = vrot.slane %v1586, 1
      %v1789 = vsel %vm1663, %v1784, %v1788
      %v1790 = vrot.slane %v1587, 1
      %v1791 = vsel %vm1663, %v1786, %v1790
      %v1792 = vrot.slane %v1588, 1
      %v1793 = vsel %vm1663, %v1788, %v1792
      %v1794 = vrot.slane %v1593, 1
      %v1795 = vsel %vm1663, %v1790, %v1794
      %v1796 = vrot.slane %v1594, 1
      %v1797 = vsel %vm1663, %v1792, %v1796
      %v1866 = vmax.f32 %v1523, %v1666
      %v1867 = vmax.f32 %v1524, %v1669
      %v1868 = vmax.f32 %v1525, %v1671
      %v1869 = vmax.f32 %v1526, %v1673
      %v1870 = vmax.f32 %v1527, %v1675
      %v1871 = vmax.f32 %v1528, %v1677
      %v1872 = vmax.f32 %v1529, %v1679
      %v1873 = vmax.f32 %v1530, %v1681
      %v1874 = vmax.f32 %v1531, %v1683
      %v1875 = vmax.f32 %v1532, %v1685
      %v1876 = vmax.f32 %v1533, %v1687
      %v1877 = vmax.f32 %v1534, %v1689
      %v1878 = vmax.f32 %v1535, %v1691
      %v1879 = vmax.f32 %v1536, %v1693
      %v1880 = vmax.f32 %v1537, %v1695
      %v1881 = vmax.f32 %v1538, %v1697
      %v1882 = vmax.f32 %v1539, %v1699
      %v1883 = vmax.f32 %v1540, %v1701
      %v1884 = vmax.f32 %v1541, %v1703
      %v1885 = vmax.f32 %v1542, %v1705
      %v1886 = vmax.f32 %v1543, %v1707
      %v1887 = vmax.f32 %v1544, %v1709
      %v1888 = vmax.f32 %v1545, %v1711
      %v1889 = vmax.f32 %v1546, %v1713
      %v1890 = vmax.f32 %v1547, %v1715
      %v1891 = vmax.f32 %v1548, %v1717
      %v1892 = vmax.f32 %v1549, %v1719
      %v1893 = vmax.f32 %v1550, %v1721
      %v1894 = vmax.f32 %v1551, %v1723
      %v1895 = vmax.f32 %v1552, %v1725
      %v1896 = vmax.f32 %v1553, %v1727
      %v1897 = vmax.f32 %v1554, %v1729
      %v1898 = vmax.f32 %v1555, %v1731
      %v1899 = vmax.f32 %v1556, %v1733
      %v1900 = vmax.f32 %v1557, %v1735
      %v1901 = vmax.f32 %v1558, %v1737
      %v1902 = vmax.f32 %v1559, %v1739
      %v1903 = vmax.f32 %v1560, %v1741
      %v1904 = vmax.f32 %v1561, %v1743
      %v1905 = vmax.f32 %v1562, %v1745
      %v1906 = vmax.f32 %v1563, %v1747
      %v1907 = vmax.f32 %v1564, %v1749
      %v1908 = vmax.f32 %v1565, %v1751
      %v1909 = vmax.f32 %v1566, %v1753
      %v1910 = vmax.f32 %v1567, %v1755
      %v1911 = vmax.f32 %v1568, %v1757
      %v1912 = vmax.f32 %v1569, %v1759
      %v1913 = vmax.f32 %v1570, %v1761
      %v1914 = vmax.f32 %v1571, %v1763
      %v1915 = vmax.f32 %v1572, %v1765
      %v1916 = vmax.f32 %v1573, %v1767
      %v1917 = vmax.f32 %v1574, %v1769
      %v1918 = vmax.f32 %v1575, %v1771
      %v1919 = vmax.f32 %v1576, %v1773
      %v1920 = vmax.f32 %v1577, %v1775
      %v1921 = vmax.f32 %v1578, %v1777
      %v1922 = vmax.f32 %v1579, %v1779
      %v1923 = vmax.f32 %v1580, %v1781
      %v1924 = vmax.f32 %v1581, %v1783
      %v1925 = vmax.f32 %v1582, %v1785
      %v1926 = vmax.f32 %v1583, %v1787
      %v1927 = vmax.f32 %v1584, %v1789
      %v1928 = vmax.f32 %v1585, %v1791
      %v1929 = vmax.f32 %v1586, %v1793
      %v1930 = vmax.f32 %v1587, %v1795
      %v1931 = vmax.f32 %v1588, %v1797
      %v1932 = vmax.f32 %v1589, %v1794
      %v1933 = vmax.f32 %v1590, %v1796
      %v1934 = vld [vmem:[%s508 + $0x20] sm:$0xfc]
      %v1935 = vld [vmem:[%s508 + $0x28] sm:$0xfc]
      %v1936 = vld [vmem:[%s508 + $0x30] sm:$0xff]
      %v1937 = vld [vmem:[%s508 + $0x38] sm:$0xff]
      %v1938 = vld [vmem:[%s508 + $0x40] sm:$0xff]
      %v1939 = vld [vmem:[%s508 + $0x48] sm:$0xff]
      %v1940 = vld [vmem:[%s508 + $0x50] sm:$0xff]
      %v1941 = vld [vmem:[%s508 + $0x58] sm:$0xff]
      %v1942 = vld [vmem:[%s508 + $0x60] sm:$0xff]
      %v1943 = vld [vmem:[%s508 + $0x68] sm:$0xff]
      %v1944 = vld [vmem:[%s508 + $0x70] sm:$0xff]
      %v1945 = vld [vmem:[%s508 + $0x78] sm:$0xff]
      %v1946 = vld [vmem:[%s508 + $0x80] sm:$0xff]
      %v1947 = vld [vmem:[%s508 + $0x88] sm:$0xff]
      %v1948 = vld [vmem:[%s508 + $0x90] sm:$0xff]
      %v1949 = vld [vmem:[%s508 + $0x98] sm:$0xff]
      %v1950 = vld [vmem:[%s508 + $0xa0] sm:$0xff]
      %v1951 = vld [vmem:[%s508 + $0xa8] sm:$0xff]
      %v1952 = vld [vmem:[%s508 + $0xb0] sm:$0xff]
      %v1953 = vld [vmem:[%s508 + $0xb8] sm:$0xff]
      %v1954 = vld [vmem:[%s508 + $0xc0] sm:$0xff]
      %v1955 = vld [vmem:[%s508 + $0xc8] sm:$0xff]
      %v1956 = vld [vmem:[%s508 + $0xd0] sm:$0xff]
      %v1957 = vld [vmem:[%s508 + $0xd8] sm:$0xff]
      %v1958 = vld [vmem:[%s508 + $0xe0] sm:$0xff]
      %v1959 = vld [vmem:[%s508 + $0xe8] sm:$0xff]
      %v1960 = vld [vmem:[%s508 + $0xf0] sm:$0xff]
      %v1961 = vld [vmem:[%s508 + $0xf8] sm:$0xff]
      %v1962 = vld [vmem:[%s508 + $0x100] sm:$0xff]
      %v1963 = vld [vmem:[%s508 + $0x108] sm:$0xff]
      %v1964 = vld [vmem:[%s508 + $0x110] sm:$0xff]
      %v1965 = vld [vmem:[%s508 + $0x118] sm:$0xff]
      %v1966 = vld [vmem:[%s508 + $0x120] sm:$0xff]
      %v1967 = vld [vmem:[%s508 + $0x128] sm:$0xff]
      %v1968 = vld [vmem:[%s508 + $0x130] sm:$0xff]
      %v1969 = vld [vmem:[%s508 + $0x138] sm:$0xff]
      %v1970 = vld [vmem:[%s508 + $0x140] sm:$0xff]
      %v1971 = vld [vmem:[%s508 + $0x148] sm:$0xff]
      %v1972 = vld [vmem:[%s508 + $0x150] sm:$0xff]
      %v1973 = vld [vmem:[%s508 + $0x158] sm:$0xff]
      %v1974 = vld [vmem:[%s508 + $0x160] sm:$0xff]
      %v1975 = vld [vmem:[%s508 + $0x168] sm:$0xff]
      %v1976 = vld [vmem:[%s508 + $0x170] sm:$0xff]
      %v1977 = vld [vmem:[%s508 + $0x178] sm:$0xff]
      %v1978 = vld [vmem:[%s508 + $0x180] sm:$0xff]
      %v1979 = vld [vmem:[%s508 + $0x188] sm:$0xff]
      %v1980 = vld [vmem:[%s508 + $0x190] sm:$0xff]
      %v1981 = vld [vmem:[%s508 + $0x198] sm:$0xff]
      %v1982 = vld [vmem:[%s508 + $0x1a0] sm:$0xff]
      %v1983 = vld [vmem:[%s508 + $0x1a8] sm:$0xff]
      %v1984 = vld [vmem:[%s508 + $0x1b0] sm:$0xff]
      %v1985 = vld [vmem:[%s508 + $0x1b8] sm:$0xff]
      %v1986 = vld [vmem:[%s508 + $0x1c0] sm:$0xff]
      %v1987 = vld [vmem:[%s508 + $0x1c8] sm:$0xff]
      %v1988 = vld [vmem:[%s508 + $0x1d0] sm:$0xff]
      %v1989 = vld [vmem:[%s508 + $0x1d8] sm:$0xff]
      %v1990 = vld [vmem:[%s508 + $0x1e0] sm:$0xff]
      %v1991 = vld [vmem:[%s508 + $0x1e8] sm:$0xff]
      %v1992 = vld [vmem:[%s508 + $0x1f0] sm:$0xff]
      %v1993 = vld [vmem:[%s508 + $0x1f8] sm:$0xff]
      %v1994 = vld [vmem:[%s508 + $0x200] sm:$0xff]
      %v1995 = vld [vmem:[%s508 + $0x208] sm:$0xff]
      %v1996 = vld [vmem:[%s508 + $0x210] sm:$0xff]
      %v1997 = vld [vmem:[%s508 + $0x218] sm:$0xff]
      %v1998 = vld [vmem:[%s508 + $0x220] sm:$0xff]
      %v1999 = vld [vmem:[%s508 + $0x228] sm:$0xff]
      %v2000 = vld [vmem:[%s508 + $0x230] sm:$0x1f]
      %v2001 = vld [vmem:[%s508 + $0x238] sm:$0x1f]
      %v2002 = vld [vmem:[%s508 + $0x20] sm:$0xf8]
      %v2003 = vld [vmem:[%s508 + $0x28] sm:$0xf8]
      %v2004 = vld [vmem:[%s508 + $0x230] sm:$0x3f]
      %v2005 = vld [vmem:[%s508 + $0x238] sm:$0x3f]
      %v2074 = vrot.slane %v2002, 1
      %v2075 = vrot.slane %v1936, 1
      %v2076 = vsel %vm1663, %v2074, %v2075
      %v2077 = vrot.slane %v2003, 1
      %v2078 = vrot.slane %v1937, 1
      %v2079 = vsel %vm1663, %v2077, %v2078
      %v2080 = vrot.slane %v1938, 1
      %v2081 = vsel %vm1663, %v2075, %v2080
      %v2082 = vrot.slane %v1939, 1
      %v2083 = vsel %vm1663, %v2078, %v2082
      %v2084 = vrot.slane %v1940, 1
      %v2085 = vsel %vm1663, %v2080, %v2084
      %v2086 = vrot.slane %v1941, 1
      %v2087 = vsel %vm1663, %v2082, %v2086
      %v2088 = vrot.slane %v1942, 1
      %v2089 = vsel %vm1663, %v2084, %v2088
      %v2090 = vrot.slane %v1943, 1
      %v2091 = vsel %vm1663, %v2086, %v2090
      %v2092 = vrot.slane %v1944, 1
      %v2093 = vsel %vm1663, %v2088, %v2092
      %v2094 = vrot.slane %v1945, 1
      %v2095 = vsel %vm1663, %v2090, %v2094
      %v2096 = vrot.slane %v1946, 1
      %v2097 = vsel %vm1663, %v2092, %v2096
      %v2098 = vrot.slane %v1947, 1
      %v2099 = vsel %vm1663, %v2094, %v2098
      %v2100 = vrot.slane %v1948, 1
      %v2101 = vsel %vm1663, %v2096, %v2100
      %v2102 = vrot.slane %v1949, 1
      %v2103 = vsel %vm1663, %v2098, %v2102
      %v2104 = vrot.slane %v1950, 1
      %v2105 = vsel %vm1663, %v2100, %v2104
      %v2106 = vrot.slane %v1951, 1
      %v2107 = vsel %vm1663, %v2102, %v2106
      %v2108 = vrot.slane %v1952, 1
      %v2109 = vsel %vm1663, %v2104, %v2108
      %v2110 = vrot.slane %v1953, 1
      %v2111 = vsel %vm1663, %v2106, %v2110
      %v2112 = vrot.slane %v1954, 1
      %v2113 = vsel %vm1663, %v2108, %v2112
      %v2114 = vrot.slane %v1955, 1
      %v2115 = vsel %vm1663, %v2110, %v2114
      %v2116 = vrot.slane %v1956, 1
      %v2117 = vsel %vm1663, %v2112, %v2116
      %v2118 = vrot.slane %v1957, 1
      %v2119 = vsel %vm1663, %v2114, %v2118
      %v2120 = vrot.slane %v1958, 1
      %v2121 = vsel %vm1663, %v2116, %v2120
      %v2122 = vrot.slane %v1959, 1
      %v2123 = vsel %vm1663, %v2118, %v2122
      %v2124 = vrot.slane %v1960, 1
      %v2125 = vsel %vm1663, %v2120, %v2124
      %v2126 = vrot.slane %v1961, 1
      %v2127 = vsel %vm1663, %v2122, %v2126
      %v2128 = vrot.slane %v1962, 1
      %v2129 = vsel %vm1663, %v2124, %v2128
      %v2130 = vrot.slane %v1963, 1
      %v2131 = vsel %vm1663, %v2126, %v2130
      %v2132 = vrot.slane %v1964, 1
      %v2133 = vsel %vm1663, %v2128, %v2132
      %v2134 = vrot.slane %v1965, 1
      %v2135 = vsel %vm1663, %v2130, %v2134
      %v2136 = vrot.slane %v1966, 1
      %v2137 = vsel %vm1663, %v2132, %v2136
      %v2138 = vrot.slane %v1967, 1
      %v2139 = vsel %vm1663, %v2134, %v2138
      %v2140 = vrot.slane %v1968, 1
      %v2141 = vsel %vm1663, %v2136, %v2140
      %v2142 = vrot.slane %v1969, 1
      %v2143 = vsel %vm1663, %v2138, %v2142
      %v2144 = vrot.slane %v1970, 1
      %v2145 = vsel %vm1663, %v2140, %v2144
      %v2146 = vrot.slane %v1971, 1
      %v2147 = vsel %vm1663, %v2142, %v2146
      %v2148 = vrot.slane %v1972, 1
      %v2149 = vsel %vm1663, %v2144, %v2148
      %v2150 = vrot.slane %v1973, 1
      %v2151 = vsel %vm1663, %v2146, %v2150
      %v2152 = vrot.slane %v1974, 1
      %v2153 = vsel %vm1663, %v2148, %v2152
      %v2154 = vrot.slane %v1975, 1
      %v2155 = vsel %vm1663, %v2150, %v2154
      %v2156 = vrot.slane %v1976, 1
      %v2157 = vsel %vm1663, %v2152, %v2156
      %v2158 = vrot.slane %v1977, 1
      %v2159 = vsel %vm1663, %v2154, %v2158
      %v2160 = vrot.slane %v1978, 1
      %v2161 = vsel %vm1663, %v2156, %v2160
      %v2162 = vrot.slane %v1979, 1
      %v2163 = vsel %vm1663, %v2158, %v2162
      %v2164 = vrot.slane %v1980, 1
      %v2165 = vsel %vm1663, %v2160, %v2164
      %v2166 = vrot.slane %v1981, 1
      %v2167 = vsel %vm1663, %v2162, %v2166
      %v2168 = vrot.slane %v1982, 1
      %v2169 = vsel %vm1663, %v2164, %v2168
      %v2170 = vrot.slane %v1983, 1
      %v2171 = vsel %vm1663, %v2166, %v2170
      %v2172 = vrot.slane %v1984, 1
      %v2173 = vsel %vm1663, %v2168, %v2172
      %v2174 = vrot.slane %v1985, 1
      %v2175 = vsel %vm1663, %v2170, %v2174
      %v2176 = vrot.slane %v1986, 1
      %v2177 = vsel %vm1663, %v2172, %v2176
      %v2178 = vrot.slane %v1987, 1
      %v2179 = vsel %vm1663, %v2174, %v2178
      %v2180 = vrot.slane %v1988, 1
      %v2181 = vsel %vm1663, %v2176, %v2180
      %v2182 = vrot.slane %v1989, 1
      %v2183 = vsel %vm1663, %v2178, %v2182
      %v2184 = vrot.slane %v1990, 1
      %v2185 = vsel %vm1663, %v2180, %v2184
      %v2186 = vrot.slane %v1991, 1
      %v2187 = vsel %vm1663, %v2182, %v2186
      %v2188 = vrot.slane %v1992, 1
      %v2189 = vsel %vm1663, %v2184, %v2188
      %v2190 = vrot.slane %v1993, 1
      %v2191 = vsel %vm1663, %v2186, %v2190
      %v2192 = vrot.slane %v1994, 1
      %v2193 = vsel %vm1663, %v2188, %v2192
      %v2194 = vrot.slane %v1995, 1
      %v2195 = vsel %vm1663, %v2190, %v2194
      %v2196 = vrot.slane %v1996, 1
      %v2197 = vsel %vm1663, %v2192, %v2196
      %v2198 = vrot.slane %v1997, 1
      %v2199 = vsel %vm1663, %v2194, %v2198
      %v2200 = vrot.slane %v1998, 1
      %v2201 = vsel %vm1663, %v2196, %v2200
      %v2202 = vrot.slane %v1999, 1
      %v2203 = vsel %vm1663, %v2198, %v2202
      %v2204 = vrot.slane %v2004, 1
      %v2205 = vsel %vm1663, %v2200, %v2204
      %v2206 = vrot.slane %v2005, 1
      %v2207 = vsel %vm1663, %v2202, %v2206
      %v2276 = vmax.f32 %v1934, %v2076
      %v2277 = vmax.f32 %v1935, %v2079
      %v2278 = vmax.f32 %v1936, %v2081
      %v2279 = vmax.f32 %v1937, %v2083
      %v2280 = vmax.f32 %v1938, %v2085
      %v2281 = vmax.f32 %v1939, %v2087
      %v2282 = vmax.f32 %v1940, %v2089
      %v2283 = vmax.f32 %v1941, %v2091
      %v2284 = vmax.f32 %v1942, %v2093
      %v2285 = vmax.f32 %v1943, %v2095
      %v2286 = vmax.f32 %v1944, %v2097
      %v2287 = vmax.f32 %v1945, %v2099
      %v2288 = vmax.f32 %v1946, %v2101
      %v2289 = vmax.f32 %v1947, %v2103
      %v2290 = vmax.f32 %v1948, %v2105
      %v2291 = vmax.f32 %v1949, %v2107
      %v2292 = vmax.f32 %v1950, %v2109
      %v2293 = vmax.f32 %v1951, %v2111
      %v2294 = vmax.f32 %v1952, %v2113
      %v2295 = vmax.f32 %v1953, %v2115
      %v2296 = vmax.f32 %v1954, %v2117
      %v2297 = vmax.f32 %v1955, %v2119
      %v2298 = vmax.f32 %v1956, %v2121
      %v2299 = vmax.f32 %v1957, %v2123
      %v2300 = vmax.f32 %v1958, %v2125
      %v2301 = vmax.f32 %v1959, %v2127
      %v2302 = vmax.f32 %v1960, %v2129
      %v2303 = vmax.f32 %v1961, %v2131
      %v2304 = vmax.f32 %v1962, %v2133
      %v2305 = vmax.f32 %v1963, %v2135
      %v2306 = vmax.f32 %v1964, %v2137
      %v2307 = vmax.f32 %v1965, %v2139
      %v2308 = vmax.f32 %v1966, %v2141
      %v2309 = vmax.f32 %v1967, %v2143
      %v2310 = vmax.f32 %v1968, %v2145
      %v2311 = vmax.f32 %v1969, %v2147
      %v2312 = vmax.f32 %v1970, %v2149
      %v2313 = vmax.f32 %v1971, %v2151
      %v2314 = vmax.f32 %v1972, %v2153
      %v2315 = vmax.f32 %v1973, %v2155
      %v2316 = vmax.f32 %v1974, %v2157
      %v2317 = vmax.f32 %v1975, %v2159
      %v2318 = vmax.f32 %v1976, %v2161
      %v2319 = vmax.f32 %v1977, %v2163
      %v2320 = vmax.f32 %v1978, %v2165
      %v2321 = vmax.f32 %v1979, %v2167
      %v2322 = vmax.f32 %v1980, %v2169
      %v2323 = vmax.f32 %v1981, %v2171
      %v2324 = vmax.f32 %v1982, %v2173
      %v2325 = vmax.f32 %v1983, %v2175
      %v2326 = vmax.f32 %v1984, %v2177
      %v2327 = vmax.f32 %v1985, %v2179
      %v2328 = vmax.f32 %v1986, %v2181
      %v2329 = vmax.f32 %v1987, %v2183
      %v2330 = vmax.f32 %v1988, %v2185
      %v2331 = vmax.f32 %v1989, %v2187
      %v2332 = vmax.f32 %v1990, %v2189
      %v2333 = vmax.f32 %v1991, %v2191
      %v2334 = vmax.f32 %v1992, %v2193
      %v2335 = vmax.f32 %v1993, %v2195
      %v2336 = vmax.f32 %v1994, %v2197
      %v2337 = vmax.f32 %v1995, %v2199
      %v2338 = vmax.f32 %v1996, %v2201
      %v2339 = vmax.f32 %v1997, %v2203
      %v2340 = vmax.f32 %v1998, %v2205
      %v2341 = vmax.f32 %v1999, %v2207
      %v2342 = vmax.f32 %v2000, %v2204
      %v2343 = vmax.f32 %v2001, %v2206
      %vm2412 = vcmask 1045504
      %v2413 = vrot.slane %v2276, 2
      %v2414 = vrot.slane %v2278, 2
      %v2415 = vsel %vm2412, %v2413, %v2414
      %v2416 = vrot.slane %v2277, 2
      %v2417 = vrot.slane %v2279, 2
      %v2418 = vsel %vm2412, %v2416, %v2417
      %v2419 = vrot.slane %v2280, 2
      %v2420 = vsel %vm2412, %v2414, %v2419
      %v2421 = vrot.slane %v2281, 2
      %v2422 = vsel %vm2412, %v2417, %v2421
      %v2423 = vrot.slane %v2282, 2
      %v2424 = vsel %vm2412, %v2419, %v2423
      %v2425 = vrot.slane %v2283, 2
      %v2426 = vsel %vm2412, %v2421, %v2425
      %v2427 = vrot.slane %v2284, 2
      %v2428 = vsel %vm2412, %v2423, %v2427
      %v2429 = vrot.slane %v2285, 2
      %v2430 = vsel %vm2412, %v2425, %v2429
      %v2431 = vrot.slane %v2286, 2
      %v2432 = vsel %vm2412, %v2427, %v2431
      %v2433 = vrot.slane %v2287, 2
      %v2434 = vsel %vm2412, %v2429, %v2433
      %v2435 = vrot.slane %v2288, 2
      %v2436 = vsel %vm2412, %v2431, %v2435
      %v2437 = vrot.slane %v2289, 2
      %v2438 = vsel %vm2412, %v2433, %v2437
      %v2439 = vrot.slane %v2290, 2
      %v2440 = vsel %vm2412, %v2435, %v2439
      %v2441 = vrot.slane %v2291, 2
      %v2442 = vsel %vm2412, %v2437, %v2441
      %v2443 = vrot.slane %v2292, 2
      %v2444 = vsel %vm2412, %v2439, %v2443
      %v2445 = vrot.slane %v2293, 2
      %v2446 = vsel %vm2412, %v2441, %v2445
      %v2447 = vrot.slane %v2294, 2
      %v2448 = vsel %vm2412, %v2443, %v2447
      %v2449 = vrot.slane %v2295, 2
      %v2450 = vsel %vm2412, %v2445, %v2449
      %v2451 = vrot.slane %v2296, 2
      %v2452 = vsel %vm2412, %v2447, %v2451
      %v2453 = vrot.slane %v2297, 2
      %v2454 = vsel %vm2412, %v2449, %v2453
      %v2455 = vrot.slane %v2298, 2
      %v2456 = vsel %vm2412, %v2451, %v2455
      %v2457 = vrot.slane %v2299, 2
      %v2458 = vsel %vm2412, %v2453, %v2457
      %v2459 = vrot.slane %v2300, 2
      %v2460 = vsel %vm2412, %v2455, %v2459
      %v2461 = vrot.slane %v2301, 2
      %v2462 = vsel %vm2412, %v2457, %v2461
      %v2463 = vrot.slane %v2302, 2
      %v2464 = vsel %vm2412, %v2459, %v2463
      %v2465 = vrot.slane %v2303, 2
      %v2466 = vsel %vm2412, %v2461, %v2465
      %v2467 = vrot.slane %v2304, 2
      %v2468 = vsel %vm2412, %v2463, %v2467
      %v2469 = vrot.slane %v2305, 2
      %v2470 = vsel %vm2412, %v2465, %v2469
      %v2471 = vrot.slane %v2306, 2
      %v2472 = vsel %vm2412, %v2467, %v2471
      %v2473 = vrot.slane %v2307, 2
      %v2474 = vsel %vm2412, %v2469, %v2473
      %v2475 = vrot.slane %v2308, 2
      %v2476 = vsel %vm2412, %v2471, %v2475
      %v2477 = vrot.slane %v2309, 2
      %v2478 = vsel %vm2412, %v2473, %v2477
      %v2479 = vrot.slane %v2310, 2
      %v2480 = vsel %vm2412, %v2475, %v2479
      %v2481 = vrot.slane %v2311, 2
      %v2482 = vsel %vm2412, %v2477, %v2481
      %v2483 = vrot.slane %v2312, 2
      %v2484 = vsel %vm2412, %v2479, %v2483
      %v2485 = vrot.slane %v2313, 2
      %v2486 = vsel %vm2412, %v2481, %v2485
      %v2487 = vrot.slane %v2314, 2
      %v2488 = vsel %vm2412, %v2483, %v2487
      %v2489 = vrot.slane %v2315, 2
      %v2490 = vsel %vm2412, %v2485, %v2489
      %v2491 = vrot.slane %v2316, 2
      %v2492 = vsel %vm2412, %v2487, %v2491
      %v2493 = vrot.slane %v2317, 2
      %v2494 = vsel %vm2412, %v2489, %v2493
      %v2495 = vrot.slane %v2318, 2
      %v2496 = vsel %vm2412, %v2491, %v2495
      %v2497 = vrot.slane %v2319, 2
      %v2498 = vsel %vm2412, %v2493, %v2497
      %v2499 = vrot.slane %v2320, 2
      %v2500 = vsel %vm2412, %v2495, %v2499
      %v2501 = vrot.slane %v2321, 2
      %v2502 = vsel %vm2412, %v2497, %v2501
      %v2503 = vrot.slane %v2322, 2
      %v2504 = vsel %vm2412, %v2499, %v2503
      %v2505 = vrot.slane %v2323, 2
      %v2506 = vsel %vm2412, %v2501, %v2505
      %v2507 = vrot.slane %v2324, 2
      %v2508 = vsel %vm2412, %v2503, %v2507
      %v2509 = vrot.slane %v2325, 2
      %v2510 = vsel %vm2412, %v2505, %v2509
      %v2511 = vrot.slane %v2326, 2
      %v2512 = vsel %vm2412, %v2507, %v2511
      %v2513 = vrot.slane %v2327, 2
      %v2514 = vsel %vm2412, %v2509, %v2513
      %v2515 = vrot.slane %v2328, 2
      %v2516 = vsel %vm2412, %v2511, %v2515
      %v2517 = vrot.slane %v2329, 2
      %v2518 = vsel %vm2412, %v2513, %v2517
      %v2519 = vrot.slane %v2330, 2
      %v2520 = vsel %vm2412, %v2515, %v2519
      %v2521 = vrot.slane %v2331, 2
      %v2522 = vsel %vm2412, %v2517, %v2521
      %v2523 = vrot.slane %v2332, 2
      %v2524 = vsel %vm2412, %v2519, %v2523
      %v2525 = vrot.slane %v2333, 2
      %v2526 = vsel %vm2412, %v2521, %v2525
      %v2527 = vrot.slane %v2334, 2
      %v2528 = vsel %vm2412, %v2523, %v2527
      %v2529 = vrot.slane %v2335, 2
      %v2530 = vsel %vm2412, %v2525, %v2529
      %v2531 = vrot.slane %v2336, 2
      %v2532 = vsel %vm2412, %v2527, %v2531
      %v2533 = vrot.slane %v2337, 2
      %v2534 = vsel %vm2412, %v2529, %v2533
      %v2535 = vrot.slane %v2338, 2
      %v2536 = vsel %vm2412, %v2531, %v2535
      %v2537 = vrot.slane %v2339, 2
      %v2538 = vsel %vm2412, %v2533, %v2537
      %v2539 = vrot.slane %v2340, 2
      %v2540 = vsel %vm2412, %v2535, %v2539
      %v2541 = vrot.slane %v2341, 2
      %v2542 = vsel %vm2412, %v2537, %v2541
      %v2543 = vrot.slane %v2342, 2
      %v2544 = vsel %vm2412, %v2539, %v2543
      %v2545 = vrot.slane %v2343, 2
      %v2546 = vsel %vm2412, %v2541, %v2545
      %v2615 = vmax.f32 %v1866, %v2415
      %v2616 = vmax.f32 %v1867, %v2418
      %v2617 = vmax.f32 %v1868, %v2420
      %v2618 = vmax.f32 %v1869, %v2422
      %v2619 = vmax.f32 %v1870, %v2424
      %v2620 = vmax.f32 %v1871, %v2426
      %v2621 = vmax.f32 %v1872, %v2428
      %v2622 = vmax.f32 %v1873, %v2430
      %v2623 = vmax.f32 %v1874, %v2432
      %v2624 = vmax.f32 %v1875, %v2434
      %v2625 = vmax.f32 %v1876, %v2436
      %v2626 = vmax.f32 %v1877, %v2438
      %v2627 = vmax.f32 %v1878, %v2440
      %v2628 = vmax.f32 %v1879, %v2442
      %v2629 = vmax.f32 %v1880, %v2444
      %v2630 = vmax.f32 %v1881, %v2446
      %v2631 = vmax.f32 %v1882, %v2448
      %v2632 = vmax.f32 %v1883, %v2450
      %v2633 = vmax.f32 %v1884, %v2452
      %v2634 = vmax.f32 %v1885, %v2454
      %v2635 = vmax.f32 %v1886, %v2456
      %v2636 = vmax.f32 %v1887, %v2458
      %v2637 = vmax.f32 %v1888, %v2460
      %v2638 = vmax.f32 %v1889, %v2462
      %v2639 = vmax.f32 %v1890, %v2464
      %v2640 = vmax.f32 %v1891, %v2466
      %v2641 = vmax.f32 %v1892, %v2468
      %v2642 = vmax.f32 %v1893, %v2470
      %v2643 = vmax.f32 %v1894, %v2472
      %v2644 = vmax.f32 %v1895, %v2474
      %v2645 = vmax.f32 %v1896, %v2476
      %v2646 = vmax.f32 %v1897, %v2478
      %v2647 = vmax.f32 %v1898, %v2480
      %v2648 = vmax.f32 %v1899, %v2482
      %v2649 = vmax.f32 %v1900, %v2484
      %v2650 = vmax.f32 %v1901, %v2486
      %v2651 = vmax.f32 %v1902, %v2488
      %v2652 = vmax.f32 %v1903, %v2490
      %v2653 = vmax.f32 %v1904, %v2492
      %v2654 = vmax.f32 %v1905, %v2494
      %v2655 = vmax.f32 %v1906, %v2496
      %v2656 = vmax.f32 %v1907, %v2498
      %v2657 = vmax.f32 %v1908, %v2500
      %v2658 = vmax.f32 %v1909, %v2502
      %v2659 = vmax.f32 %v1910, %v2504
      %v2660 = vmax.f32 %v1911, %v2506
      %v2661 = vmax.f32 %v1912, %v2508
      %v2662 = vmax.f32 %v1913, %v2510
      %v2663 = vmax.f32 %v1914, %v2512
      %v2664 = vmax.f32 %v1915, %v2514
      %v2665 = vmax.f32 %v1916, %v2516
      %v2666 = vmax.f32 %v1917, %v2518
      %v2667 = vmax.f32 %v1918, %v2520
      %v2668 = vmax.f32 %v1919, %v2522
      %v2669 = vmax.f32 %v1920, %v2524
      %v2670 = vmax.f32 %v1921, %v2526
      %v2671 = vmax.f32 %v1922, %v2528
      %v2672 = vmax.f32 %v1923, %v2530
      %v2673 = vmax.f32 %v1924, %v2532
      %v2674 = vmax.f32 %v1925, %v2534
      %v2675 = vmax.f32 %v1926, %v2536
      %v2676 = vmax.f32 %v1927, %v2538
      %v2677 = vmax.f32 %v1928, %v2540
      %v2678 = vmax.f32 %v1929, %v2542
      %v2679 = vmax.f32 %v1930, %v2544
      %v2680 = vmax.f32 %v1931, %v2546
      %v2681 = vmax.f32 %v1932, %v2543
      %v2682 = vmax.f32 %v1933, %v2545
      %v2683 = vld [vmem:[%s4] sm:$0xff]
      %v2684 = vld [vmem:[%s4 + $0x8] sm:$0xf]
      %v2685 = vld [vmem:[%s4 + $0xc] sm:$0xff]
      %v2686 = vld [vmem:[%s4 + $0x14] sm:$0xf]
      %v2687 = vld [vmem:[%s4 + $0x18] sm:$0xff]
      %v2688 = vld [vmem:[%s4 + $0x20] sm:$0xf]
      %v2689 = vld [vmem:[%s4 + $0x24] sm:$0xff]
      %v2690 = vld [vmem:[%s4 + $0x2c] sm:$0xf]
      %v2691 = vld [vmem:[%s4 + $0x30] sm:$0xff]
      %v2692 = vld [vmem:[%s4 + $0x38] sm:$0xf]
      %v2693 = vld [vmem:[%s4 + $0x3c] sm:$0xff]
      %v2694 = vld [vmem:[%s4 + $0x44] sm:$0xf]
      %v2695 = vld [vmem:[%s4 + $0x48] sm:$0xff]
      %v2696 = vld [vmem:[%s4 + $0x50] sm:$0xf]
      %v2697 = vld [vmem:[%s4 + $0x54] sm:$0xff]
      %v2698 = vld [vmem:[%s4 + $0x5c] sm:$0xf]
      %v2699 = vld [vmem:[%s4 + $0x60] sm:$0xff]
      %v2700 = vld [vmem:[%s4 + $0x68] sm:$0xf]
      %v2701 = vpack.c.bf16 %v2617, %v2615
      %v2702 = vpack.c.bf16 %v2618, %v2616
      %v2703 = vpack.c.bf16 %v2621, %v2619
      %v2704 = vpack.c.bf16 %v2622, %v2620
      %v2705 = vpack.c.bf16 %v2625, %v2623
      %v2706 = vpack.c.bf16 %v2626, %v2624
      %v2707 = vpack.c.bf16 %v2629, %v2627
      %v2708 = vpack.c.bf16 %v2630, %v2628
      %v2709 = vpack.c.bf16 %v2633, %v2631
      %v2710 = vpack.c.bf16 %v2634, %v2632
      %v2711 = vpack.c.bf16 %v2637, %v2635
      %v2712 = vpack.c.bf16 %v2638, %v2636
      %v2713 = vpack.c.bf16 %v2641, %v2639
      %v2714 = vpack.c.bf16 %v2642, %v2640
      %v2715 = vpack.c.bf16 %v2645, %v2643
      %v2716 = vpack.c.bf16 %v2646, %v2644
      %v2717 = vpack.c.bf16 %v2649, %v2647
      %v2718 = vpack.c.bf16 %v2650, %v2648
      %v2719 = vpack.c.bf16 %v2653, %v2651
      %v2720 = vpack.c.bf16 %v2654, %v2652
      %v2721 = vpack.c.bf16 %v2657, %v2655
      %v2722 = vpack.c.bf16 %v2658, %v2656
      %v2723 = vpack.c.bf16 %v2661, %v2659
      %v2724 = vpack.c.bf16 %v2662, %v2660
      %v2725 = vpack.c.bf16 %v2665, %v2663
      %v2726 = vpack.c.bf16 %v2666, %v2664
      %v2727 = vpack.c.bf16 %v2669, %v2667
      %v2728 = vpack.c.bf16 %v2670, %v2668
      %v2729 = vpack.c.bf16 %v2673, %v2671
      %v2730 = vpack.c.bf16 %v2674, %v2672
      %v2731 = vpack.c.bf16 %v2677, %v2675
      %v2732 = vpack.c.bf16 %v2678, %v2676
      %v2733 = vpack.c.bf16 %v2681, %v2679
      %v2734 = vpack.c.bf16 %v2682, %v2680
      %v2753 = vunpack.c.l.b16 %v2683
      %v2754 = vunpack.c.h.b16 %v2683
      %v2755 = vunpack.c.l.b16 %v2684
      %v2756 = vunpack.c.l.b16 %v2685
      %v2757 = vunpack.c.h.b16 %v2685
      %v2758 = vunpack.c.l.b16 %v2686
      %v2759 = vunpack.c.l.b16 %v2687
      %v2760 = vunpack.c.h.b16 %v2687
      %v2761 = vunpack.c.l.b16 %v2688
      %v2762 = vunpack.c.l.b16 %v2689
      %v2763 = vunpack.c.h.b16 %v2689
      %v2764 = vunpack.c.l.b16 %v2690
      %v2765 = vunpack.c.l.b16 %v2691
      %v2766 = vunpack.c.h.b16 %v2691
      %v2767 = vunpack.c.l.b16 %v2692
      %v2768 = vunpack.c.l.b16 %v2693
      %v2769 = vunpack.c.h.b16 %v2693
      %v2770 = vunpack.c.l.b16 %v2694
      %v2771 = vunpack.c.l.b16 %v2695
      %v2772 = vunpack.c.h.b16 %v2695
      %v2773 = vunpack.c.l.b16 %v2696
      %v2774 = vunpack.c.l.b16 %v2697
      %v2775 = vunpack.c.h.b16 %v2697
      %v2776 = vunpack.c.l.b16 %v2698
      %v2777 = vunpack.c.l.b16 %v2699
      %v2778 = vunpack.c.h.b16 %v2699
      %v2779 = vunpack.c.l.b16 %v2700
      %v2780 = vpack.c.b16 %v2756, %v2753
      %v2781 = vpack.c.b16 %v2757, %v2754
      %v2782 = vpack.c.b16 %v2758, %v2755
      %v2783 = vpack.c.b16 %v2762, %v2759
      %v2784 = vpack.c.b16 %v2763, %v2760
      %v2785 = vpack.c.b16 %v2764, %v2761
      %v2786 = vpack.c.b16 %v2768, %v2765
      %v2787 = vpack.c.b16 %v2769, %v2766
      %v2788 = vpack.c.b16 %v2770, %v2767
      %v2789 = vpack.c.b16 %v2774, %v2771
      %v2790 = vpack.c.b16 %v2775, %v2772
      %v2791 = vpack.c.b16 %v2776, %v2773
      %v2792 = vpack.c.b16 %v2777, %v2777
      %v2793 = vpack.c.b16 %v2778, %v2778
      %v2794 = vpack.c.b16 %v2779, %v2779
      %vm2805 = vcmask 89088
      %v2807 = vsel %vm2805, %v2782, 0
      %v2810 = vsel %vm2805, %v2785, 0
      %v2813 = vsel %vm2805, %v2788, 0
      %v2816 = vsel %vm2805, %v2791, 0
      %v2819 = vsel %vm2805, %v2794, 0
      %vm2821 = vcmask 1044480
      %v2822 = vsel %vm2821, 4294967295, 65535
      %v2823 = vsel %vm2412, %v2822, 0
      %v2825 = vand.u32 %v2733, %v2823
      %v2828 = vand.u32 %v2734, %v2823
      %2830 = vmatpush.bf16.msra.mxu0 %v2715
      %2831 = vmatpush.bf16.msra.mxu0 %v2713
      %2832 = vmatpush.bf16.msra.mxu0 %v2711
      %2833 = vmatpush.bf16.msra.mxu0 %v2709
      %2834 = vmatpush.bf16.msra.mxu0 %v2707
      %2835 = vmatpush.bf16.msra.mxu0 %v2705
      %2836 = vmatpush.bf16.msra.mxu0 %v2703
      %2837 = vmatpush.bf16.msra.mxu0 %v2701
      %2838 = vmatmul.bf16.gmra.mxu0 %v2780
      %v2839 = vpop.f32.mrf.mxu0
      %v2840 = vadd.f32 0.0, %v2839
      %v2841 = vpop.f32.mrf.mxu0
      %v2842 = vadd.f32 0.0, %v2841
      %2843 = vmatmul.bf16.gmra.mxu0 %v2783
      %v2844 = vpop.f32.mrf.mxu0
      %v2845 = vadd.f32 0.0, %v2844
      %v2846 = vpop.f32.mrf.mxu0
      %v2847 = vadd.f32 0.0, %v2846
      %2848 = vmatmul.bf16.gmra.mxu0 %v2786
      %v2849 = vpop.f32.mrf.mxu0
      %v2850 = vadd.f32 0.0, %v2849
      %v2851 = vpop.f32.mrf.mxu0
      %v2852 = vadd.f32 0.0, %v2851
      %2853 = vmatmul.bf16.gmra.mxu0 %v2789
      %v2854 = vpop.f32.mrf.mxu0
      %v2855 = vadd.f32 0.0, %v2854
      %v2856 = vpop.f32.mrf.mxu0
      %v2857 = vadd.f32 0.0, %v2856
      %2858 = vmatmul.bf16.gmra.mxu0 %v2792
      %v2859 = vpop.f32.mrf.mxu0
      %v2860 = vadd.f32 0.0, %v2859
      %v2861 = vpop.f32.mrf.mxu0
      %2862 = vdwg.mxu0
      %2863 = vmatpush.bf16.msra.mxu0 %v2731
      %2864 = vmatpush.bf16.msra.mxu0 %v2729
      %2865 = vmatpush.bf16.msra.mxu0 %v2727
      %2866 = vmatpush.bf16.msra.mxu0 %v2725
      %2867 = vmatpush.bf16.msra.mxu0 %v2723
      %2868 = vmatpush.bf16.msra.mxu0 %v2721
      %2869 = vmatpush.bf16.msra.mxu0 %v2719
      %2870 = vmatpush.bf16.msra.mxu0 %v2717
      %2871 = vmatmul.bf16.gmra.mxu0 %v2781
      %v2872 = vpop.f32.mrf.mxu0
      %v2873 = vadd.f32 %v2840, %v2872
      %v2874 = vpop.f32.mrf.mxu0
      %v2875 = vadd.f32 %v2842, %v2874
      %2876 = vmatmul.bf16.gmra.mxu0 %v2784
      %v2877 = vpop.f32.mrf.mxu0
      %v2878 = vadd.f32 %v2845, %v2877
      %v2879 = vpop.f32.mrf.mxu0
      %v2880 = vadd.f32 %v2847, %v2879
      %2881 = vmatmul.bf16.gmra.mxu0 %v2787
      %v2882 = vpop.f32.mrf.mxu0
      %v2883 = vadd.f32 %v2850, %v2882
      %v2884 = vpop.f32.mrf.mxu0
      %v2885 = vadd.f32 %v2852, %v2884
      %2886 = vmatmul.bf16.gmra.mxu0 %v2790
      %v2887 = vpop.f32.mrf.mxu0
      %v2888 = vadd.f32 %v2855, %v2887
      %v2889 = vpop.f32.mrf.mxu0
      %v2890 = vadd.f32 %v2857, %v2889
      %2891 = vmatmul.bf16.gmra.mxu0 %v2793
      %v2892 = vpop.f32.mrf.mxu0
      %v2893 = vadd.f32 %v2860, %v2892
      %v2894 = vpop.f32.mrf.mxu0
      %2895 = vdwg.mxu0
      %2896 = vmatpush.bf16.msra.mxu0 0
      %2897 = vmatpush.bf16.msra.mxu0 0
      %2898 = vmatpush.bf16.msra.mxu0 0
      %2899 = vmatpush.bf16.msra.mxu0 0
      %2900 = vmatpush.bf16.msra.mxu0 0
      %2901 = vmatpush.bf16.msra.mxu0 0
      %2902 = vmatpush.bf16.msra.mxu0 0
      %2903 = vmatpush.bf16.msra.mxu0 %v2825
      %2904 = vmatmul.bf16.gmra.mxu0 %v2807
      %v2905 = vpop.f32.mrf.mxu0
      %v2906 = vadd.f32 %v2873, %v2905
      %v2907 = vpop.f32.mrf.mxu0
      %v2908 = vadd.f32 %v2875, %v2907
      %2909 = vmatmul.bf16.gmra.mxu0 %v2810
      %v2910 = vpop.f32.mrf.mxu0
      %v2911 = vadd.f32 %v2878, %v2910
      %v2912 = vpop.f32.mrf.mxu0
      %v2913 = vadd.f32 %v2880, %v2912
      %2914 = vmatmul.bf16.gmra.mxu0 %v2813
      %v2915 = vpop.f32.mrf.mxu0
      %v2916 = vadd.f32 %v2883, %v2915
      %v2917 = vpop.f32.mrf.mxu0
      %v2918 = vadd.f32 %v2885, %v2917
      %2919 = vmatmul.bf16.gmra.mxu0 %v2816
      %v2920 = vpop.f32.mrf.mxu0
      %v2921 = vadd.f32 %v2888, %v2920
      %v2922 = vpop.f32.mrf.mxu0
      %v2923 = vadd.f32 %v2890, %v2922
      %2924 = vmatmul.bf16.gmra.mxu0 %v2819
      %v2925 = vpop.f32.mrf.mxu0
      %v2926 = vadd.f32 %v2893, %v2925
      %v2927 = vpop.f32.mrf.mxu0
      %2928 = vdwg.mxu0
      %2929 = vmatpush.bf16.msra.mxu0 %v2716
      %2930 = vmatpush.bf16.msra.mxu0 %v2714
      %2931 = vmatpush.bf16.msra.mxu0 %v2712
      %2932 = vmatpush.bf16.msra.mxu0 %v2710
      %2933 = vmatpush.bf16.msra.mxu0 %v2708
      %2934 = vmatpush.bf16.msra.mxu0 %v2706
      %2935 = vmatpush.bf16.msra.mxu0 %v2704
      %2936 = vmatpush.bf16.msra.mxu0 %v2702
      %2937 = vmatmul.bf16.gmra.mxu0 %v2780
      %v2938 = vpop.f32.mrf.mxu0
      %v2939 = vadd.f32 0.0, %v2938
      %v2940 = vpop.f32.mrf.mxu0
      %v2941 = vadd.f32 0.0, %v2940
      %2942 = vmatmul.bf16.gmra.mxu0 %v2783
      %v2943 = vpop.f32.mrf.mxu0
      %v2944 = vadd.f32 0.0, %v2943
      %v2945 = vpop.f32.mrf.mxu0
      %v2946 = vadd.f32 0.0, %v2945
      %2947 = vmatmul.bf16.gmra.mxu0 %v2786
      %v2948 = vpop.f32.mrf.mxu0
      %v2949 = vadd.f32 0.0, %v2948
      %v2950 = vpop.f32.mrf.mxu0
      %v2951 = vadd.f32 0.0, %v2950
      %2952 = vmatmul.bf16.gmra.mxu0 %v2789
      %v2953 = vpop.f32.mrf.mxu0
      %v2954 = vadd.f32 0.0, %v2953
      %v2955 = vpop.f32.mrf.mxu0
      %v2956 = vadd.f32 0.0, %v2955
      %2957 = vmatmul.bf16.gmra.mxu0 %v2792
      %v2958 = vpop.f32.mrf.mxu0
      %v2959 = vadd.f32 0.0, %v2958
      %v2960 = vpop.f32.mrf.mxu0
      %2961 = vdwg.mxu0
      %2962 = vmatpush.bf16.msra.mxu0 %v2732
      %2963 = vmatpush.bf16.msra.mxu0 %v2730
      %2964 = vmatpush.bf16.msra.mxu0 %v2728
      %2965 = vmatpush.bf16.msra.mxu0 %v2726
      %2966 = vmatpush.bf16.msra.mxu0 %v2724
      %2967 = vmatpush.bf16.msra.mxu0 %v2722
      %2968 = vmatpush.bf16.msra.mxu0 %v2720
      %2969 = vmatpush.bf16.msra.mxu0 %v2718
      %2970 = vmatmul.bf16.gmra.mxu0 %v2781
      %v2971 = vpop.f32.mrf.mxu0
      %v2972 = vadd.f32 %v2939, %v2971
      %v2973 = vpop.f32.mrf.mxu0
      %v2974 = vadd.f32 %v2941, %v2973
      %2975 = vmatmul.bf16.gmra.mxu0 %v2784
      %v2976 = vpop.f32.mrf.mxu0
      %v2977 = vadd.f32 %v2944, %v2976
      %v2978 = vpop.f32.mrf.mxu0
      %v2979 = vadd.f32 %v2946, %v2978
      %2980 = vmatmul.bf16.gmra.mxu0 %v2787
      %v2981 = vpop.f32.mrf.mxu0
      %v2982 = vadd.f32 %v2949, %v2981
      %v2983 = vpop.f32.mrf.mxu0
      %v2984 = vadd.f32 %v2951, %v2983
      %2985 = vmatmul.bf16.gmra.mxu0 %v2790
      %v2986 = vpop.f32.mrf.mxu0
      %v2987 = vadd.f32 %v2954, %v2986
      %v2988 = vpop.f32.mrf.mxu0
      %v2989 = vadd.f32 %v2956, %v2988
      %2990 = vmatmul.bf16.gmra.mxu0 %v2793
      %v2991 = vpop.f32.mrf.mxu0
      %v2992 = vadd.f32 %v2959, %v2991
      %v2993 = vpop.f32.mrf.mxu0
      %2994 = vdwg.mxu0
      %2995 = vmatpush.bf16.msra.mxu0 0
      %2996 = vmatpush.bf16.msra.mxu0 0
      %2997 = vmatpush.bf16.msra.mxu0 0
      %2998 = vmatpush.bf16.msra.mxu0 0
      %2999 = vmatpush.bf16.msra.mxu0 0
      %3000 = vmatpush.bf16.msra.mxu0 0
      %3001 = vmatpush.bf16.msra.mxu0 0
      %3002 = vmatpush.bf16.msra.mxu0 %v2828
      %3003 = vmatmul.bf16.gmra.mxu0 %v2807
      %v3004 = vpop.f32.mrf.mxu0
      %v3005 = vadd.f32 %v2972, %v3004
      %v3006 = vpop.f32.mrf.mxu0
      %v3007 = vadd.f32 %v2974, %v3006
      %3008 = vmatmul.bf16.gmra.mxu0 %v2810
      %v3009 = vpop.f32.mrf.mxu0
      %v3010 = vadd.f32 %v2977, %v3009
      %v3011 = vpop.f32.mrf.mxu0
      %v3012 = vadd.f32 %v2979, %v3011
      %3013 = vmatmul.bf16.gmra.mxu0 %v2813
      %v3014 = vpop.f32.mrf.mxu0
      %v3015 = vadd.f32 %v2982, %v3014
      %v3016 = vpop.f32.mrf.mxu0
      %v3017 = vadd.f32 %v2984, %v3016
      %3018 = vmatmul.bf16.gmra.mxu0 %v2816
      %v3019 = vpop.f32.mrf.mxu0
      %v3020 = vadd.f32 %v2987, %v3019
      %v3021 = vpop.f32.mrf.mxu0
      %v3022 = vadd.f32 %v2989, %v3021
      %3023 = vmatmul.bf16.gmra.mxu0 %v2819
      %v3024 = vpop.f32.mrf.mxu0
      %v3025 = vadd.f32 %v2992, %v3024
      %v3026 = vpop.f32.mrf.mxu0
      %3027 = vdwg.mxu0
      %v3028 = vpack.c.bf16 %v2908, %v2906
      %v3029 = vpack.c.bf16 %v3007, %v3005
      %v3030 = vpack.c.bf16 %v2913, %v2911
      %v3031 = vpack.c.bf16 %v3012, %v3010
      %v3032 = vpack.c.bf16 %v2918, %v2916
      %v3033 = vpack.c.bf16 %v3017, %v3015
      %v3034 = vpack.c.bf16 %v2923, %v2921
      %v3035 = vpack.c.bf16 %v3022, %v3020
      %v3036 = vpack.c.bf16 %v2926, %v2926
      %v3037 = vpack.c.bf16 %v3025, %v3025
      %v3038 = vld [vmem:[%s5] sm:$0xf]
      %v3039 = vld [vmem:[%s5 + $0x4] sm:$0xf]
      %v3040 = vld [vmem:[%s5 + $0x8] sm:$0xf]
      %v3041 = vld [vmem:[%s5 + $0xc] sm:$0xf]
      %v3042 = vld [vmem:[%s5 + $0x10] sm:$0xf]
      %v3043 = vld [vmem:[%s5 + $0x14] sm:$0xf]
      %v3044 = vld [vmem:[%s5 + $0x18] sm:$0xf]
      %v3045 = vld [vmem:[%s5 + $0x1c] sm:$0xf]
      %v3046 = vld [vmem:[%s5 + $0x20] sm:$0xf]
      %v3047 = vld [vmem:[%s5 + $0x24] sm:$0xf]
      %v3048 = vld [vmem:[%s5 + $0x28] sm:$0xf]
      %v3049 = vld [vmem:[%s5 + $0x2c] sm:$0xf]
      %v3050 = vld [vmem:[%s5 + $0x30] sm:$0xf]
      %v3051 = vld [vmem:[%s5 + $0x34] sm:$0xf]
      %v3052 = vld [vmem:[%s5 + $0x38] sm:$0xf]
      %v3053 = vld [vmem:[%s5 + $0x3c] sm:$0xf]
      %v3054 = vld [vmem:[%s5 + $0x40] sm:$0xf]
      %v3055 = vld [vmem:[%s5 + $0x44] sm:$0xf]
      %v3056 = vld [vmem:[%s5 + $0x48] sm:$0xf]
      %v3057 = vld [vmem:[%s5 + $0x4c] sm:$0xf]
      %v3058 = vld [vmem:[%s5 + $0x50] sm:$0xf]
      %v3059 = vld [vmem:[%s5 + $0x54] sm:$0xf]
      %v3060 = vld [vmem:[%s5 + $0x58] sm:$0xf]
      %v3061 = vld [vmem:[%s5 + $0x5c] sm:$0xf]
      %v3062 = vld [vmem:[%s5 + $0x60] sm:$0xf]
      %v3063 = vld [vmem:[%s5 + $0x64] sm:$0xf]
      %v3064 = vld [vmem:[%s5 + $0x68] sm:$0xf]
      %v3065 = vld [vmem:[%s5 + $0x6c] sm:$0xf]
      %v3066 = vld [vmem:[%s5 + $0x70] sm:$0xf]
      %v3067 = vld [vmem:[%s5 + $0x74] sm:$0xf]
      %v3068 = vld [vmem:[%s5 + $0x78] sm:$0xf]
      %v3069 = vld [vmem:[%s5 + $0x7c] sm:$0xf]
      %v3102 = vunpack.c.l.b16 %v3038
      %v3103 = vunpack.c.l.b16 %v3039
      %v3104 = vunpack.c.l.b16 %v3040
      %v3105 = vunpack.c.l.b16 %v3041
      %v3106 = vunpack.c.l.b16 %v3042
      %v3107 = vunpack.c.l.b16 %v3043
      %v3108 = vunpack.c.l.b16 %v3044
      %v3109 = vunpack.c.l.b16 %v3045
      %v3110 = vunpack.c.l.b16 %v3046
      %v3111 = vunpack.c.l.b16 %v3047
      %v3112 = vunpack.c.l.b16 %v3048
      %v3113 = vunpack.c.l.b16 %v3049
      %v3114 = vunpack.c.l.b16 %v3050
      %v3115 = vunpack.c.l.b16 %v3051
      %v3116 = vunpack.c.l.b16 %v3052
      %v3117 = vunpack.c.l.b16 %v3053
      %v3118 = vunpack.c.l.b16 %v3054
      %v3119 = vunpack.c.l.b16 %v3055
      %v3120 = vunpack.c.l.b16 %v3056
      %v3121 = vunpack.c.l.b16 %v3057
      %v3122 = vunpack.c.l.b16 %v3058
      %v3123 = vunpack.c.l.b16 %v3059
      %v3124 = vunpack.c.l.b16 %v3060
      %v3125 = vunpack.c.l.b16 %v3061
      %v3126 = vunpack.c.l.b16 %v3062
      %v3127 = vunpack.c.l.b16 %v3063
      %v3128 = vunpack.c.l.b16 %v3064
      %v3129 = vunpack.c.l.b16 %v3065
      %v3130 = vunpack.c.l.b16 %v3066
      %v3131 = vunpack.c.l.b16 %v3067
      %v3132 = vunpack.c.l.b16 %v3068
      %v3133 = vunpack.c.l.b16 %v3069
      %v3134 = vpack.c.b16 %v3103, %v3102
      %v3135 = vpack.c.b16 %v3105, %v3104
      %v3136 = vpack.c.b16 %v3107, %v3106
      %v3137 = vpack.c.b16 %v3109, %v3108
      %v3138 = vpack.c.b16 %v3111, %v3110
      %v3139 = vpack.c.b16 %v3113, %v3112
      %v3140 = vpack.c.b16 %v3115, %v3114
      %v3141 = vpack.c.b16 %v3117, %v3116
      %v3142 = vpack.c.b16 %v3119, %v3118
      %v3143 = vpack.c.b16 %v3121, %v3120
      %v3144 = vpack.c.b16 %v3123, %v3122
      %v3145 = vpack.c.b16 %v3125, %v3124
      %v3146 = vpack.c.b16 %v3127, %v3126
      %v3147 = vpack.c.b16 %v3129, %v3128
      %v3148 = vpack.c.b16 %v3131, %v3130
      %v3149 = vpack.c.b16 %v3133, %v3132
      %3166 = vmatpush.bf16.msra.mxu0 %v3141
      %3167 = vmatpush.bf16.msra.mxu0 %v3140
      %3168 = vmatpush.bf16.msra.mxu0 %v3139
      %3169 = vmatpush.bf16.msra.mxu0 %v3138
      %3170 = vmatpush.bf16.msra.mxu0 %v3137
      %3171 = vmatpush.bf16.msra.mxu0 %v3136
      %3172 = vmatpush.bf16.msra.mxu0 %v3135
      %3173 = vmatpush.bf16.msra.mxu0 %v3134
      %3174 = vmatmul.bf16.gmra.mxu0 %v3028
      %v3175 = vpop.f32.mrf.mxu0
      %v3176 = vadd.f32 0.0, %v3175
      %v3177 = vpop.f32.mrf.mxu0
      %v3178 = vadd.f32 0.0, %v3177
      %3179 = vmatmul.bf16.gmra.mxu0 %v3030
      %v3180 = vpop.f32.mrf.mxu0
      %v3181 = vadd.f32 0.0, %v3180
      %v3182 = vpop.f32.mrf.mxu0
      %v3183 = vadd.f32 0.0, %v3182
      %3184 = vmatmul.bf16.gmra.mxu0 %v3032
      %v3185 = vpop.f32.mrf.mxu0
      %v3186 = vadd.f32 0.0, %v3185
      %v3187 = vpop.f32.mrf.mxu0
      %v3188 = vadd.f32 0.0, %v3187
      %3189 = vmatmul.bf16.gmra.mxu0 %v3034
      %v3190 = vpop.f32.mrf.mxu0
      %v3191 = vadd.f32 0.0, %v3190
      %v3192 = vpop.f32.mrf.mxu0
      %v3193 = vadd.f32 0.0, %v3192
      %3194 = vmatmul.bf16.gmra.mxu0 %v3036
      %v3195 = vpop.f32.mrf.mxu0
      %v3196 = vadd.f32 0.0, %v3195
      %v3197 = vpop.f32.mrf.mxu0
      %3198 = vdwg.mxu0
      %3199 = vmatpush.bf16.msra.mxu0 %v3149
      %3200 = vmatpush.bf16.msra.mxu0 %v3148
      %3201 = vmatpush.bf16.msra.mxu0 %v3147
      %3202 = vmatpush.bf16.msra.mxu0 %v3146
      %3203 = vmatpush.bf16.msra.mxu0 %v3145
      %3204 = vmatpush.bf16.msra.mxu0 %v3144
      %3205 = vmatpush.bf16.msra.mxu0 %v3143
      %3206 = vmatpush.bf16.msra.mxu0 %v3142
      %3207 = vmatmul.bf16.gmra.mxu0 %v3029
      %v3208 = vpop.f32.mrf.mxu0
      %v3209 = vadd.f32 %v3176, %v3208
      %v3210 = vpop.f32.mrf.mxu0
      %v3211 = vadd.f32 %v3178, %v3210
      %3212 = vmatmul.bf16.gmra.mxu0 %v3031
      %v3213 = vpop.f32.mrf.mxu0
      %v3214 = vadd.f32 %v3181, %v3213
      %v3215 = vpop.f32.mrf.mxu0
      %v3216 = vadd.f32 %v3183, %v3215
      %3217 = vmatmul.bf16.gmra.mxu0 %v3033
      %v3218 = vpop.f32.mrf.mxu0
      %v3219 = vadd.f32 %v3186, %v3218
      %v3220 = vpop.f32.mrf.mxu0
      %v3221 = vadd.f32 %v3188, %v3220
      %3222 = vmatmul.bf16.gmra.mxu0 %v3035
      %v3223 = vpop.f32.mrf.mxu0
      %v3224 = vadd.f32 %v3191, %v3223
      %v3225 = vpop.f32.mrf.mxu0
      %v3226 = vadd.f32 %v3193, %v3225
      %3227 = vmatmul.bf16.gmra.mxu0 %v3037
      %v3228 = vpop.f32.mrf.mxu0
      %v3229 = vadd.f32 %v3196, %v3228
      %v3230 = vpop.f32.mrf.mxu0
      %3231 = vdwg.mxu0
      %v3232 = vld [vmem:[%s6] sm:$0xf]
      %v3233 = vld [vmem:[%s6 + $0x4] sm:$0xf]
      %v3234 = vld [vmem:[%s6 + $0x8] sm:$0xf]
      %v3235 = vld [vmem:[%s6 + $0xc] sm:$0xf]
      %v3236 = vld [vmem:[%s6 + $0x10] sm:$0xf]
      %v3237 = vld [vmem:[%s6 + $0x14] sm:$0xf]
      %v3238 = vld [vmem:[%s6 + $0x18] sm:$0xf]
      %v3239 = vld [vmem:[%s6 + $0x1c] sm:$0xf]
      %v3240 = vld [vmem:[%s6 + $0x20] sm:$0xf]
      %v3241 = vld [vmem:[%s6 + $0x24] sm:$0xf]
      %v3242 = vld [vmem:[%s6 + $0x28] sm:$0xf]
      %v3243 = vld [vmem:[%s6 + $0x2c] sm:$0xf]
      %v3244 = vld [vmem:[%s6 + $0x30] sm:$0xf]
      %v3245 = vld [vmem:[%s6 + $0x34] sm:$0xf]
      %v3246 = vld [vmem:[%s6 + $0x38] sm:$0xf]
      %v3247 = vld [vmem:[%s6 + $0x3c] sm:$0xf]
      %v3248 = vld [vmem:[%s6 + $0x40] sm:$0xf]
      %v3249 = vld [vmem:[%s6 + $0x44] sm:$0xf]
      %v3250 = vld [vmem:[%s6 + $0x48] sm:$0xf]
      %v3251 = vld [vmem:[%s6 + $0x4c] sm:$0xf]
      %v3252 = vld [vmem:[%s6 + $0x50] sm:$0xf]
      %v3253 = vld [vmem:[%s6 + $0x54] sm:$0xf]
      %v3254 = vld [vmem:[%s6 + $0x58] sm:$0xf]
      %v3255 = vld [vmem:[%s6 + $0x5c] sm:$0xf]
      %v3256 = vld [vmem:[%s6 + $0x60] sm:$0xf]
      %v3257 = vld [vmem:[%s6 + $0x64] sm:$0xf]
      %v3258 = vld [vmem:[%s6 + $0x68] sm:$0xf]
      %v3259 = vld [vmem:[%s6 + $0x6c] sm:$0xf]
      %v3260 = vld [vmem:[%s6 + $0x70] sm:$0xf]
      %v3261 = vld [vmem:[%s6 + $0x74] sm:$0xf]
      %v3262 = vld [vmem:[%s6 + $0x78] sm:$0xf]
      %v3263 = vld [vmem:[%s6 + $0x7c] sm:$0xf]
      %v3296 = vunpack.c.l.b16 %v3232
      %v3297 = vunpack.c.l.b16 %v3233
      %v3298 = vunpack.c.l.b16 %v3234
      %v3299 = vunpack.c.l.b16 %v3235
      %v3300 = vunpack.c.l.b16 %v3236
      %v3301 = vunpack.c.l.b16 %v3237
      %v3302 = vunpack.c.l.b16 %v3238
      %v3303 = vunpack.c.l.b16 %v3239
      %v3304 = vunpack.c.l.b16 %v3240
      %v3305 = vunpack.c.l.b16 %v3241
      %v3306 = vunpack.c.l.b16 %v3242
      %v3307 = vunpack.c.l.b16 %v3243
      %v3308 = vunpack.c.l.b16 %v3244
      %v3309 = vunpack.c.l.b16 %v3245
      %v3310 = vunpack.c.l.b16 %v3246
      %v3311 = vunpack.c.l.b16 %v3247
      %v3312 = vunpack.c.l.b16 %v3248
      %v3313 = vunpack.c.l.b16 %v3249
      %v3314 = vunpack.c.l.b16 %v3250
      %v3315 = vunpack.c.l.b16 %v3251
      %v3316 = vunpack.c.l.b16 %v3252
      %v3317 = vunpack.c.l.b16 %v3253
      %v3318 = vunpack.c.l.b16 %v3254
      %v3319 = vunpack.c.l.b16 %v3255
      %v3320 = vunpack.c.l.b16 %v3256
      %v3321 = vunpack.c.l.b16 %v3257
      %v3322 = vunpack.c.l.b16 %v3258
      %v3323 = vunpack.c.l.b16 %v3259
      %v3324 = vunpack.c.l.b16 %v3260
      %v3325 = vunpack.c.l.b16 %v3261
      %v3326 = vunpack.c.l.b16 %v3262
      %v3327 = vunpack.c.l.b16 %v3263
      %v3328 = vpack.c.b16 %v3297, %v3296
      %v3329 = vpack.c.b16 %v3299, %v3298
      %v3330 = vpack.c.b16 %v3301, %v3300
      %v3331 = vpack.c.b16 %v3303, %v3302
      %v3332 = vpack.c.b16 %v3305, %v3304
      %v3333 = vpack.c.b16 %v3307, %v3306
      %v3334 = vpack.c.b16 %v3309, %v3308
      %v3335 = vpack.c.b16 %v3311, %v3310
      %v3336 = vpack.c.b16 %v3313, %v3312
      %v3337 = vpack.c.b16 %v3315, %v3314
      %v3338 = vpack.c.b16 %v3317, %v3316
      %v3339 = vpack.c.b16 %v3319, %v3318
      %v3340 = vpack.c.b16 %v3321, %v3320
      %v3341 = vpack.c.b16 %v3323, %v3322
      %v3342 = vpack.c.b16 %v3325, %v3324
      %v3343 = vpack.c.b16 %v3327, %v3326
      %3360 = vmatpush.bf16.msra.mxu0 %v3335
      %3361 = vmatpush.bf16.msra.mxu0 %v3334
      %3362 = vmatpush.bf16.msra.mxu0 %v3333
      %3363 = vmatpush.bf16.msra.mxu0 %v3332
      %3364 = vmatpush.bf16.msra.mxu0 %v3331
      %3365 = vmatpush.bf16.msra.mxu0 %v3330
      %3366 = vmatpush.bf16.msra.mxu0 %v3329
      %3367 = vmatpush.bf16.msra.mxu0 %v3328
      %3368 = vmatmul.bf16.gmra.mxu0 %v3028
      %v3369 = vpop.f32.mrf.mxu0
      %v3370 = vadd.f32 0.0, %v3369
      %v3371 = vpop.f32.mrf.mxu0
      %v3372 = vadd.f32 0.0, %v3371
      %3373 = vmatmul.bf16.gmra.mxu0 %v3030
      %v3374 = vpop.f32.mrf.mxu0
      %v3375 = vadd.f32 0.0, %v3374
      %v3376 = vpop.f32.mrf.mxu0
      %v3377 = vadd.f32 0.0, %v3376
      %3378 = vmatmul.bf16.gmra.mxu0 %v3032
      %v3379 = vpop.f32.mrf.mxu0
      %v3380 = vadd.f32 0.0, %v3379
      %v3381 = vpop.f32.mrf.mxu0
      %v3382 = vadd.f32 0.0, %v3381
      %3383 = vmatmul.bf16.gmra.mxu0 %v3034
      %v3384 = vpop.f32.mrf.mxu0
      %v3385 = vadd.f32 0.0, %v3384
      %v3386 = vpop.f32.mrf.mxu0
      %v3387 = vadd.f32 0.0, %v3386
      %3388 = vmatmul.bf16.gmra.mxu0 %v3036
      %v3389 = vpop.f32.mrf.mxu0
      %v3390 = vadd.f32 0.0, %v3389
      %v3391 = vpop.f32.mrf.mxu0
      %3392 = vdwg.mxu0
      %3393 = vmatpush.bf16.msra.mxu0 %v3343
      %3394 = vmatpush.bf16.msra.mxu0 %v3342
      %3395 = vmatpush.bf16.msra.mxu0 %v3341
      %3396 = vmatpush.bf16.msra.mxu0 %v3340
      %3397 = vmatpush.bf16.msra.mxu0 %v3339
      %3398 = vmatpush.bf16.msra.mxu0 %v3338
      %3399 = vmatpush.bf16.msra.mxu0 %v3337
      %3400 = vmatpush.bf16.msra.mxu0 %v3336
      %3401 = vmatmul.bf16.gmra.mxu0 %v3029
      %v3402 = vpop.f32.mrf.mxu0
      %v3403 = vadd.f32 %v3370, %v3402
      %v3404 = vpop.f32.mrf.mxu0
      %v3405 = vadd.f32 %v3372, %v3404
      %3406 = vmatmul.bf16.gmra.mxu0 %v3031
      %v3407 = vpop.f32.mrf.mxu0
      %v3408 = vadd.f32 %v3375, %v3407
      %v3409 = vpop.f32.mrf.mxu0
      %v3410 = vadd.f32 %v3377, %v3409
      %3411 = vmatmul.bf16.gmra.mxu0 %v3033
      %v3412 = vpop.f32.mrf.mxu0
      %v3413 = vadd.f32 %v3380, %v3412
      %v3414 = vpop.f32.mrf.mxu0
      %v3415 = vadd.f32 %v3382, %v3414
      %3416 = vmatmul.bf16.gmra.mxu0 %v3035
      %v3417 = vpop.f32.mrf.mxu0
      %v3418 = vadd.f32 %v3385, %v3417
      %v3419 = vpop.f32.mrf.mxu0
      %v3420 = vadd.f32 %v3387, %v3419
      %3421 = vmatmul.bf16.gmra.mxu0 %v3037
      %v3422 = vpop.f32.mrf.mxu0
      %v3423 = vadd.f32 %v3390, %v3422
      %v3424 = vpop.f32.mrf.mxu0
      %3425 = vdwg.mxu0
      %v3426 = vmax.f32 %v3209, %v3403
      %v3427 = vmax.f32 %v3211, %v3405
      %v3428 = vmax.f32 %v3214, %v3408
      %v3429 = vmax.f32 %v3216, %v3410
      %v3430 = vmax.f32 %v3219, %v3413
      %v3431 = vmax.f32 %v3221, %v3415
      %v3432 = vmax.f32 %v3224, %v3418
      %v3433 = vmax.f32 %v3226, %v3420
      %v3434 = vmax.f32 %v3229, %v3423
      %v3435 = vpack.c.bf16 %v3426, %v3426
      %v3436 = vpack.c.bf16 %v3427, %v3427
      %v3437 = vpack.c.bf16 %v3428, %v3428
      %v3438 = vpack.c.bf16 %v3429, %v3429
      %v3439 = vpack.c.bf16 %v3430, %v3430
      %v3440 = vpack.c.bf16 %v3431, %v3431
      %v3441 = vpack.c.bf16 %v3432, %v3432
      %v3442 = vpack.c.bf16 %v3433, %v3433
      %v3443 = vpack.c.bf16 %v3434, %v3434
      %3444 = vst [vmem:[#allocation2] sm:$0xf] %v3435
      %3445 = vst [vmem:[#allocation2 + $0x4] sm:$0xf] %v3436
      %3446 = vst [vmem:[#allocation2 + $0x8] sm:$0xf] %v3437
      %3447 = vst [vmem:[#allocation2 + $0xc] sm:$0xf] %v3438
      %3448 = vst [vmem:[#allocation2 + $0x10] sm:$0xf] %v3439
      %3449 = vst [vmem:[#allocation2 + $0x14] sm:$0xf] %v3440
      %3450 = vst [vmem:[#allocation2 + $0x18] sm:$0xf] %v3441
      %3451 = vst [vmem:[#allocation2 + $0x1c] sm:$0xf] %v3442
      %3452 = vst [vmem:[#allocation2 + $0x20] sm:$0xf] %v3443
      %v3453 = vld [vmem:[#allocation2] sm:$0xf]
      %v3454 = vld [vmem:[#allocation2 + $0x4] sm:$0xf]
      %v3455 = vld [vmem:[#allocation2 + $0x8] sm:$0xf]
      %v3456 = vld [vmem:[#allocation2 + $0xc] sm:$0xf]
      %v3457 = vld [vmem:[#allocation2 + $0x10] sm:$0xf]
      %v3458 = vld [vmem:[#allocation2 + $0x14] sm:$0xf]
      %3459 = vst [vmem:[#allocation3] sm:$0xf] %v3453
      %3460 = vst [vmem:[#allocation3 + $0x24] sm:$0xf] %v3454
      %3461 = vst [vmem:[#allocation3 + $0x48] sm:$0xf] %v3455
      %3462 = vst [vmem:[#allocation3 + $0x6c] sm:$0xf] %v3456
      %3463 = vst [vmem:[#allocation3 + $0x90] sm:$0xf] %v3457
      %3464 = vst [vmem:[#allocation3 + $0xb4] sm:$0xf] %v3458
      %v3465 = vld [vmem:[#allocation2] sm:$0xf]
      %v3466 = vld [vmem:[#allocation2 + $0x4] sm:$0xf]
      %v3467 = vld [vmem:[#allocation2 + $0x8] sm:$0xf]
      %v3468 = vld [vmem:[#allocation2 + $0xc] sm:$0xf]
      %v3469 = vld [vmem:[#allocation2 + $0x10] sm:$0xf]
      %v3470 = vld [vmem:[#allocation2 + $0x14] sm:$0xf]
      %v3471 = vld [vmem:[#allocation2 + $0x18] sm:$0x1]
      %vm3472 = vsmask.f32 3328
      %vm3473 = vsmask.f32 7440
      %vm3474 = vmor %vm3472, %vm3473
      %v3476 = vshrl.u32 %v3465, 16
      %v3478 = vrot.slane %v3476, 4
      %v3479 = vshll.u32 %v3465, 16
      %v3481 = vrot.slane %v3479, 5
      %v3482 = vor.u32 %v3478, %v3481
      %v3483 = vrot.slane %v3482, 4
      %v3485 = vshll.u32 %v3466, 16
      %v3487 = vrot.slane %v3485, 5
      %v3488 = vsel %vm3474, %v3483, %v3487
      %v3489 = vshrl.u32 %v3466, 16
      %v3491 = vrot.slane %v3489, 4
      %v3492 = vor.u32 %v3491, %v3487
      %v3493 = vrot.slane %v3492, 4
      %v3495 = vshll.u32 %v3467, 16
      %v3497 = vrot.slane %v3495, 5
      %v3498 = vsel %vm3474, %v3493, %v3497
      %v3499 = vshrl.u32 %v3467, 16
      %v3501 = vrot.slane %v3499, 4
      %v3502 = vor.u32 %v3501, %v3497
      %v3503 = vrot.slane %v3502, 4
      %v3505 = vshll.u32 %v3468, 16
      %v3507 = vrot.slane %v3505, 5
      %v3508 = vsel %vm3474, %v3503, %v3507
      %v3509 = vshrl.u32 %v3468, 16
      %v3511 = vrot.slane %v3509, 4
      %v3512 = vor.u32 %v3511, %v3507
      %v3513 = vrot.slane %v3512, 4
      %v3515 = vshll.u32 %v3469, 16
      %v3517 = vrot.slane %v3515, 5
      %v3518 = vsel %vm3474, %v3513, %v3517
      %v3519 = vshrl.u32 %v3469, 16
      %v3521 = vrot.slane %v3519, 4
      %v3522 = vor.u32 %v3521, %v3517
      %v3523 = vrot.slane %v3522, 4
      %v3525 = vshll.u32 %v3470, 16
      %v3527 = vrot.slane %v3525, 5
      %v3528 = vsel %vm3474, %v3523, %v3527
      %v3529 = vshrl.u32 %v3470, 16
      %v3531 = vrot.slane %v3529, 4
      %v3532 = vor.u32 %v3531, %v3527
      %v3533 = vrot.slane %v3532, 4
      %v3535 = vshll.u32 %v3471, 16
      %v3537 = vrot.slane %v3535, 5
      %v3538 = vsel %vm3474, %v3533, %v3537
      %3545 = vst [vmem:[#allocation3 + $0x4] sm:$0xf] %v3488
      %3546 = vst [vmem:[#allocation3 + $0x28] sm:$0xf] %v3498
      %3547 = vst [vmem:[#allocation3 + $0x4c] sm:$0xf] %v3508
      %3548 = vst [vmem:[#allocation3 + $0x70] sm:$0xf] %v3518
      %3549 = vst [vmem:[#allocation3 + $0x94] sm:$0xf] %v3528
      %3550 = vst [vmem:[#allocation3 + $0xb8] sm:$0xf] %v3538
      %v3551 = vld [vmem:[#allocation2] sm:$0xe]
      %v3552 = vld [vmem:[#allocation2 + $0x4] sm:$0xf]
      %v3553 = vld [vmem:[#allocation2 + $0x8] sm:$0xf]
      %v3554 = vld [vmem:[#allocation2 + $0xc] sm:$0xf]
      %v3555 = vld [vmem:[#allocation2 + $0x10] sm:$0xf]
      %v3556 = vld [vmem:[#allocation2 + $0x14] sm:$0xf]
      %v3557 = vld [vmem:[#allocation2 + $0x18] sm:$0x1]
      %vm3565 = vcmask 1042432
      %vm3566 = vcmask 1046532
      %vm3567 = vmor %vm3565, %vm3566
      %v3568 = vrot.slane %v3551, 5
      %v3569 = vrot.slane %v3568, 4
      %v3570 = vrot.slane %v3552, 5
      %v3571 = vsel %vm3567, %v3569, %v3570
      %v3572 = vrot.slane %v3570, 4
      %v3573 = vrot.slane %v3553, 5
      %v3574 = vsel %vm3567, %v3572, %v3573
      %v3575 = vrot.slane %v3573, 4
      %v3576 = vrot.slane %v3554, 5
      %v3577 = vsel %vm3567, %v3575, %v3576
      %v3578 = vrot.slane %v3576, 4
      %v3579 = vrot.slane %v3555, 5
      %v3580 = vsel %vm3567, %v3578, %v3579
      %v3581 = vrot.slane %v3579, 4
      %v3582 = vrot.slane %v3556, 5
      %v3583 = vsel %vm3567, %v3581, %v3582
      %v3584 = vrot.slane %v3582, 4
      %v3585 = vrot.slane %v3557, 5
      %v3586 = vsel %vm3567, %v3584, %v3585
      %3593 = vst [vmem:[#allocation3 + $0x8] sm:$0xf] %v3571
      %3594 = vst [vmem:[#allocation3 + $0x2c] sm:$0xf] %v3574
      %3595 = vst [vmem:[#allocation3 + $0x50] sm:$0xf] %v3577
      %3596 = vst [vmem:[#allocation3 + $0x74] sm:$0xf] %v3580
      %3597 = vst [vmem:[#allocation3 + $0x98] sm:$0xf] %v3583
      %3598 = vst [vmem:[#allocation3 + $0xbc] sm:$0xf] %v3586
      %v3599 = vld [vmem:[#allocation2 + $0x4] sm:$0xf]
      %v3600 = vld [vmem:[#allocation2 + $0x8] sm:$0xf]
      %v3601 = vld [vmem:[#allocation2 + $0xc] sm:$0xf]
      %v3602 = vld [vmem:[#allocation2 + $0x10] sm:$0xf]
      %v3603 = vld [vmem:[#allocation2 + $0x14] sm:$0xf]
      %v3604 = vld [vmem:[#allocation2 + $0x18] sm:$0xf]
      %3605 = vst [vmem:[#allocation3 + $0xc] sm:$0xf] %v3599
      %3606 = vst [vmem:[#allocation3 + $0x30] sm:$0xf] %v3600
      %3607 = vst [vmem:[#allocation3 + $0x54] sm:$0xf] %v3601
      %3608 = vst [vmem:[#allocation3 + $0x78] sm:$0xf] %v3602
      %3609 = vst [vmem:[#allocation3 + $0x9c] sm:$0xf] %v3603
      %3610 = vst [vmem:[#allocation3 + $0xc0] sm:$0xf] %v3604
      %v3611 = vld [vmem:[#allocation2 + $0x4] sm:$0xf]
      %v3612 = vld [vmem:[#allocation2 + $0x8] sm:$0xf]
      %v3613 = vld [vmem:[#allocation2 + $0xc] sm:$0xf]
      %v3614 = vld [vmem:[#allocation2 + $0x10] sm:$0xf]
      %v3615 = vld [vmem:[#allocation2 + $0x14] sm:$0xf]
      %v3616 = vld [vmem:[#allocation2 + $0x18] sm:$0xf]
      %v3617 = vld [vmem:[#allocation2 + $0x1c] sm:$0x1]
      %v3619 = vshrl.u32 %v3611, 16
      %v3621 = vrot.slane %v3619, 4
      %v3622 = vshll.u32 %v3611, 16
      %v3624 = vrot.slane %v3622, 5
      %v3625 = vor.u32 %v3621, %v3624
      %v3626 = vrot.slane %v3625, 4
      %v3628 = vshll.u32 %v3612, 16
      %v3630 = vrot.slane %v3628, 5
      %v3631 = vsel %vm3474, %v3626, %v3630
      %v3632 = vshrl.u32 %v3612, 16
      %v3634 = vrot.slane %v3632, 4
      %v3635 = vor.u32 %v3634, %v3630
      %v3636 = vrot.slane %v3635, 4
      %v3638 = vshll.u32 %v3613, 16
      %v3640 = vrot.slane %v3638, 5
      %v3641 = vsel %vm3474, %v3636, %v3640
      %v3642 = vshrl.u32 %v3613, 16
      %v3644 = vrot.slane %v3642, 4
      %v3645 = vor.u32 %v3644, %v3640
      %v3646 = vrot.slane %v3645, 4
      %v3648 = vshll.u32 %v3614, 16
      %v3650 = vrot.slane %v3648, 5
      %v3651 = vsel %vm3474, %v3646, %v3650
      %v3652 = vshrl.u32 %v3614, 16
      %v3654 = vrot.slane %v3652, 4
      %v3655 = vor.u32 %v3654, %v3650
      %v3656 = vrot.slane %v3655, 4
      %v3658 = vshll.u32 %v3615, 16
      %v3660 = vrot.slane %v3658, 5
      %v3661 = vsel %vm3474, %v3656, %v3660
      %v3662 = vshrl.u32 %v3615, 16
      %v3664 = vrot.slane %v3662, 4
      %v3665 = vor.u32 %v3664, %v3660
      %v3666 = vrot.slane %v3665, 4
      %v3668 = vshll.u32 %v3616, 16
      %v3670 = vrot.slane %v3668, 5
      %v3671 = vsel %vm3474, %v3666, %v3670
      %v3672 = vshrl.u32 %v3616, 16
      %v3674 = vrot.slane %v3672, 4
      %v3675 = vor.u32 %v3674, %v3670
      %v3676 = vrot.slane %v3675, 4
      %v3678 = vshll.u32 %v3617, 16
      %v3680 = vrot.slane %v3678, 5
      %v3681 = vsel %vm3474, %v3676, %v3680
      %3688 = vst [vmem:[#allocation3 + $0x10] sm:$0xf] %v3631
      %3689 = vst [vmem:[#allocation3 + $0x34] sm:$0xf] %v3641
      %3690 = vst [vmem:[#allocation3 + $0x58] sm:$0xf] %v3651
      %3691 = vst [vmem:[#allocation3 + $0x7c] sm:$0xf] %v3661
      %3692 = vst [vmem:[#allocation3 + $0xa0] sm:$0xf] %v3671
      %3693 = vst [vmem:[#allocation3 + $0xc4] sm:$0xf] %v3681
      %v3694 = vld [vmem:[#allocation2 + $0x4] sm:$0xe]
      %v3695 = vld [vmem:[#allocation2 + $0x8] sm:$0xf]
      %v3696 = vld [vmem:[#allocation2 + $0xc] sm:$0xf]
      %v3697 = vld [vmem:[#allocation2 + $0x10] sm:$0xf]
      %v3698 = vld [vmem:[#allocation2 + $0x14] sm:$0xf]
      %v3699 = vld [vmem:[#allocation2 + $0x18] sm:$0xf]
      %v3700 = vld [vmem:[#allocation2 + $0x1c] sm:$0x1]
      %v3708 = vrot.slane %v3694, 5
      %v3709 = vrot.slane %v3708, 4
      %v3710 = vrot.slane %v3695, 5
      %v3711 = vsel %vm3567, %v3709, %v3710
      %v3712 = vrot.slane %v3710, 4
      %v3713 = vrot.slane %v3696, 5
      %v3714 = vsel %vm3567, %v3712, %v3713
      %v3715 = vrot.slane %v3713, 4
      %v3716 = vrot.slane %v3697, 5
      %v3717 = vsel %vm3567, %v3715, %v3716
      %v3718 = vrot.slane %v3716, 4
      %v3719 = vrot.slane %v3698, 5
      %v3720 = vsel %vm3567, %v3718, %v3719
      %v3721 = vrot.slane %v3719, 4
      %v3722 = vrot.slane %v3699, 5
      %v3723 = vsel %vm3567, %v3721, %v3722
      %v3724 = vrot.slane %v3722, 4
      %v3725 = vrot.slane %v3700, 5
      %v3726 = vsel %vm3567, %v3724, %v3725
      %3733 = vst [vmem:[#allocation3 + $0x14] sm:$0xf] %v3711
      %3734 = vst [vmem:[#allocation3 + $0x38] sm:$0xf] %v3714
      %3735 = vst [vmem:[#allocation3 + $0x5c] sm:$0xf] %v3717
      %3736 = vst [vmem:[#allocation3 + $0x80] sm:$0xf] %v3720
      %3737 = vst [vmem:[#allocation3 + $0xa4] sm:$0xf] %v3723
      %3738 = vst [vmem:[#allocation3 + $0xc8] sm:$0xf] %v3726
      %v3739 = vld [vmem:[#allocation2 + $0x8] sm:$0xf]
      %v3740 = vld [vmem:[#allocation2 + $0xc] sm:$0xf]
      %v3741 = vld [vmem:[#allocation2 + $0x10] sm:$0xf]
      %v3742 = vld [vmem:[#allocation2 + $0x14] sm:$0xf]
      %v3743 = vld [vmem:[#allocation2 + $0x18] sm:$0xf]
      %v3744 = vld [vmem:[#allocation2 + $0x1c] sm:$0xf]
      %3745 = vst [vmem:[#allocation3 + $0x18] sm:$0xf] %v3739
      %3746 = vst [vmem:[#allocation3 + $0x3c] sm:$0xf] %v3740
      %3747 = vst [vmem:[#allocation3 + $0x60] sm:$0xf] %v3741
      %3748 = vst [vmem:[#allocation3 + $0x84] sm:$0xf] %v3742
      %3749 = vst [vmem:[#allocation3 + $0xa8] sm:$0xf] %v3743
      %3750 = vst [vmem:[#allocation3 + $0xcc] sm:$0xf] %v3744
      %v3751 = vld [vmem:[#allocation2 + $0x8] sm:$0xf]
      %v3752 = vld [vmem:[#allocation2 + $0xc] sm:$0xf]
      %v3753 = vld [vmem:[#allocation2 + $0x10] sm:$0xf]
      %v3754 = vld [vmem:[#allocation2 + $0x14] sm:$0xf]
      %v3755 = vld [vmem:[#allocation2 + $0x18] sm:$0xf]
      %v3756 = vld [vmem:[#allocation2 + $0x1c] sm:$0xf]
      %v3757 = vld [vmem:[#allocation2 + $0x20] sm:$0x1]
      %v3759 = vshrl.u32 %v3751, 16
      %v3761 = vrot.slane %v3759, 4
      %v3762 = vshll.u32 %v3751, 16
      %v3764 = vrot.slane %v3762, 5
      %v3765 = vor.u32 %v3761, %v3764
      %v3766 = vrot.slane %v3765, 4
      %v3768 = vshll.u32 %v3752, 16
      %v3770 = vrot.slane %v3768, 5
      %v3771 = vsel %vm3474, %v3766, %v3770
      %v3772 = vshrl.u32 %v3752, 16
      %v3774 = vrot.slane %v3772, 4
      %v3775 = vor.u32 %v3774, %v3770
      %v3776 = vrot.slane %v3775, 4
      %v3778 = vshll.u32 %v3753, 16
      %v3780 = vrot.slane %v3778, 5
      %v3781 = vsel %vm3474, %v3776, %v3780
      %v3782 = vshrl.u32 %v3753, 16
      %v3784 = vrot.slane %v3782, 4
      %v3785 = vor.u32 %v3784, %v3780
      %v3786 = vrot.slane %v3785, 4
      %v3788 = vshll.u32 %v3754, 16
      %v3790 = vrot.slane %v3788, 5
      %v3791 = vsel %vm3474, %v3786, %v3790
      %v3792 = vshrl.u32 %v3754, 16
      %v3794 = vrot.slane %v3792, 4
      %v3795 = vor.u32 %v3794, %v3790
      %v3796 = vrot.slane %v3795, 4
      %v3798 = vshll.u32 %v3755, 16
      %v3800 = vrot.slane %v3798, 5
      %v3801 = vsel %vm3474, %v3796, %v3800
      %v3802 = vshrl.u32 %v3755, 16
      %v3804 = vrot.slane %v3802, 4
      %v3805 = vor.u32 %v3804, %v3800
      %v3806 = vrot.slane %v3805, 4
      %v3808 = vshll.u32 %v3756, 16
      %v3810 = vrot.slane %v3808, 5
      %v3811 = vsel %vm3474, %v3806, %v3810
      %v3812 = vshrl.u32 %v3756, 16
      %v3814 = vrot.slane %v3812, 4
      %v3815 = vor.u32 %v3814, %v3810
      %v3816 = vrot.slane %v3815, 4
      %v3818 = vshll.u32 %v3757, 16
      %v3820 = vrot.slane %v3818, 5
      %v3821 = vsel %vm3474, %v3816, %v3820
      %3828 = vst [vmem:[#allocation3 + $0x1c] sm:$0xf] %v3771
      %3829 = vst [vmem:[#allocation3 + $0x40] sm:$0xf] %v3781
      %3830 = vst [vmem:[#allocation3 + $0x64] sm:$0xf] %v3791
      %3831 = vst [vmem:[#allocation3 + $0x88] sm:$0xf] %v3801
      %3832 = vst [vmem:[#allocation3 + $0xac] sm:$0xf] %v3811
      %3833 = vst [vmem:[#allocation3 + $0xd0] sm:$0xf] %v3821
      %v3834 = vld [vmem:[#allocation2 + $0x8] sm:$0xe]
      %v3835 = vld [vmem:[#allocation2 + $0xc] sm:$0xf]
      %v3836 = vld [vmem:[#allocation2 + $0x10] sm:$0xf]
      %v3837 = vld [vmem:[#allocation2 + $0x14] sm:$0xf]
      %v3838 = vld [vmem:[#allocation2 + $0x18] sm:$0xf]
      %v3839 = vld [vmem:[#allocation2 + $0x1c] sm:$0xf]
      %v3840 = vld [vmem:[#allocation2 + $0x20] sm:$0x1]
      %v3848 = vrot.slane %v3834, 5
      %v3849 = vrot.slane %v3848, 4
      %v3850 = vrot.slane %v3835, 5
      %v3851 = vsel %vm3567, %v3849, %v3850
      %v3852 = vrot.slane %v3850, 4
      %v3853 = vrot.slane %v3836, 5
      %v3854 = vsel %vm3567, %v3852, %v3853
      %v3855 = vrot.slane %v3853, 4
      %v3856 = vrot.slane %v3837, 5
      %v3857 = vsel %vm3567, %v3855, %v3856
      %v3858 = vrot.slane %v3856, 4
      %v3859 = vrot.slane %v3838, 5
      %v3860 = vsel %vm3567, %v3858, %v3859
      %v3861 = vrot.slane %v3859, 4
      %v3862 = vrot.slane %v3839, 5
      %v3863 = vsel %vm3567, %v3861, %v3862
      %v3864 = vrot.slane %v3862, 4
      %v3865 = vrot.slane %v3840, 5
      %v3866 = vsel %vm3567, %v3864, %v3865
      %3873 = vst [vmem:[#allocation3 + $0x20] sm:$0xf] %v3851
      %3874 = vst [vmem:[#allocation3 + $0x44] sm:$0xf] %v3854
      %3875 = vst [vmem:[#allocation3 + $0x68] sm:$0xf] %v3857
      %3876 = vst [vmem:[#allocation3 + $0x8c] sm:$0xf] %v3860
      %3877 = vst [vmem:[#allocation3 + $0xb0] sm:$0xf] %v3863
      %3878 = vst [vmem:[#allocation3 + $0xd4] sm:$0xf] %v3866
      %v3879 = vld [vmem:[#allocation3] sm:$0xff]
      %v3880 = vld [vmem:[#allocation3 + $0x8] sm:$0xff]
      %v3881 = vld [vmem:[#allocation3 + $0x10] sm:$0xff]
      %v3882 = vld [vmem:[#allocation3 + $0x18] sm:$0xff]
      %v3883 = vld [vmem:[#allocation3 + $0x20] sm:$0xf]
      %v3884 = vld [vmem:[#allocation3 + $0x24] sm:$0xff]
      %v3885 = vld [vmem:[#allocation3 + $0x2c] sm:$0xff]
      %v3886 = vld [vmem:[#allocation3 + $0x34] sm:$0xff]
      %v3887 = vld [vmem:[#allocation3 + $0x3c] sm:$0xff]
      %v3888 = vld [vmem:[#allocation3 + $0x44] sm:$0xf]
      %v3889 = vld [vmem:[#allocation3 + $0x48] sm:$0xff]
      %v3890 = vld [vmem:[#allocation3 + $0x50] sm:$0xff]
      %v3891 = vld [vmem:[#allocation3 + $0x58] sm:$0xff]
      %v3892 = vld [vmem:[#allocation3 + $0x60] sm:$0xff]
      %v3893 = vld [vmem:[#allocation3 + $0x68] sm:$0xf]
      %v3894 = vld [vmem:[#allocation3 + $0x6c] sm:$0xff]
      %v3895 = vld [vmem:[#allocation3 + $0x74] sm:$0xff]
      %v3896 = vld [vmem:[#allocation3 + $0x7c] sm:$0xff]
      %v3897 = vld [vmem:[#allocation3 + $0x84] sm:$0xff]
      %v3898 = vld [vmem:[#allocation3 + $0x8c] sm:$0xf]
      %v3899 = vld [vmem:[#allocation3 + $0x90] sm:$0xff]
      %v3900 = vld [vmem:[#allocation3 + $0x98] sm:$0xff]
      %v3901 = vld [vmem:[#allocation3 + $0xa0] sm:$0xff]
      %v3902 = vld [vmem:[#allocation3 + $0xa8] sm:$0xff]
      %v3903 = vld [vmem:[#allocation3 + $0xb0] sm:$0xf]
      %v3904 = vld [vmem:[#allocation3 + $0xb4] sm:$0xff]
      %v3905 = vld [vmem:[#allocation3 + $0xbc] sm:$0xff]
      %v3906 = vld [vmem:[#allocation3 + $0xc4] sm:$0xff]
      %v3907 = vld [vmem:[#allocation3 + $0xcc] sm:$0xff]
      %v3908 = vld [vmem:[#allocation3 + $0xd4] sm:$0xf]
      %v3909 = vld [vmem:[%s2] sm:$0xff]
      %v3910 = vld [vmem:[%s2 + $0x8] sm:$0xff]
      %v3911 = vld [vmem:[%s2 + $0x10] sm:$0xff]
      %v3912 = vld [vmem:[%s2 + $0x18] sm:$0xff]
      %v3913 = vld [vmem:[%s2 + $0x20] sm:$0xff]
      %v3914 = vld [vmem:[%s2 + $0x28] sm:$0xff]
      %v3915 = vld [vmem:[%s2 + $0x30] sm:$0xff]
      %v3916 = vld [vmem:[%s2 + $0x38] sm:$0xff]
      %v3917 = vld [vmem:[%s2 + $0x40] sm:$0xff]
      %v3918 = vld [vmem:[%s2 + $0x48] sm:$0xff]
      %v3919 = vld [vmem:[%s2 + $0x50] sm:$0xff]
      %v3920 = vld [vmem:[%s2 + $0x58] sm:$0xff]
      %v3921 = vld [vmem:[%s2 + $0x60] sm:$0xff]
      %v3922 = vld [vmem:[%s2 + $0x68] sm:$0xff]
      %v3923 = vld [vmem:[%s2 + $0x70] sm:$0xff]
      %v3924 = vld [vmem:[%s2 + $0x78] sm:$0xff]
      %v3925 = vld [vmem:[%s2 + $0x80] sm:$0xff]
      %v3926 = vld [vmem:[%s2 + $0x88] sm:$0xff]
      %v3927 = vld [vmem:[%s2 + $0x90] sm:$0xff]
      %v3928 = vld [vmem:[%s2 + $0x98] sm:$0xff]
      %v3929 = vld [vmem:[%s2 + $0xa0] sm:$0xff]
      %v3930 = vld [vmem:[%s2 + $0xa8] sm:$0xff]
      %v3931 = vld [vmem:[%s2 + $0xb0] sm:$0xff]
      %v3932 = vld [vmem:[%s2 + $0xb8] sm:$0xff]
      %v3933 = vld [vmem:[%s2 + $0xc0] sm:$0xff]
      %v3934 = vld [vmem:[%s2 + $0xc8] sm:$0xff]
      %v3935 = vld [vmem:[%s2 + $0xd0] sm:$0xff]
      %v3936 = vld [vmem:[%s2 + $0xd8] sm:$0xff]
      %v3937 = vld [vmem:[%s2 + $0xe0] sm:$0xff]
      %v3938 = vld [vmem:[%s2 + $0xe8] sm:$0xff]
      %v3939 = vld [vmem:[%s2 + $0xf0] sm:$0xff]
      %v3940 = vld [vmem:[%s2 + $0xf8] sm:$0xff]
      %v3941 = vld [vmem:[%s2 + $0x100] sm:$0xff]
      %v3942 = vld [vmem:[%s2 + $0x108] sm:$0xff]
      %v3943 = vld [vmem:[%s2 + $0x110] sm:$0xff]
      %v3944 = vld [vmem:[%s2 + $0x118] sm:$0xff]
      %v3945 = vld [vmem:[%s2 + $0x120] sm:$0xff]
      %v3946 = vld [vmem:[%s2 + $0x128] sm:$0xff]
      %v3947 = vld [vmem:[%s2 + $0x130] sm:$0xff]
      %v3948 = vld [vmem:[%s2 + $0x138] sm:$0xff]
      %v3949 = vld [vmem:[%s2 + $0x140] sm:$0xff]
      %v3950 = vld [vmem:[%s2 + $0x148] sm:$0xff]
      %v3951 = vld [vmem:[%s2 + $0x150] sm:$0xff]
      %v3952 = vld [vmem:[%s2 + $0x158] sm:$0xff]
      %v3953 = vld [vmem:[%s2 + $0x160] sm:$0xff]
      %v3954 = vld [vmem:[%s2 + $0x168] sm:$0xff]
      %v3955 = vld [vmem:[%s2 + $0x170] sm:$0xff]
      %v3956 = vld [vmem:[%s2 + $0x178] sm:$0xff]
      %v3957 = vld [vmem:[%s2 + $0x180] sm:$0xff]
      %v3958 = vld [vmem:[%s2 + $0x188] sm:$0xff]
      %v3959 = vld [vmem:[%s2 + $0x190] sm:$0xff]
      %v3960 = vld [vmem:[%s2 + $0x198] sm:$0xff]
      %v3961 = vld [vmem:[%s2 + $0x1a0] sm:$0xff]
      %v3962 = vld [vmem:[%s2 + $0x1a8] sm:$0xff]
      %v3963 = vld [vmem:[%s2 + $0x1b0] sm:$0xff]
      %v3964 = vld [vmem:[%s2 + $0x1b8] sm:$0xff]
      %v3965 = vld [vmem:[%s2 + $0x1c0] sm:$0xff]
      %v3966 = vld [vmem:[%s2 + $0x1c8] sm:$0xff]
      %v3967 = vld [vmem:[%s2 + $0x1d0] sm:$0xff]
      %v3968 = vld [vmem:[%s2 + $0x1d8] sm:$0xff]
      %v3969 = vld [vmem:[%s2 + $0x1e0] sm:$0xff]
      %v3970 = vld [vmem:[%s2 + $0x1e8] sm:$0xff]
      %v3971 = vld [vmem:[%s2 + $0x1f0] sm:$0xff]
      %v3972 = vld [vmem:[%s2 + $0x1f8] sm:$0xff]
      %v3973 = vld [vmem:[%s2 + $0x200] sm:$0xff]
      %v3974 = vld [vmem:[%s2 + $0x208] sm:$0xff]
      %v3975 = vld [vmem:[%s2 + $0x210] sm:$0xff]
      %v3976 = vld [vmem:[%s2 + $0x218] sm:$0xff]
      %v3977 = vld [vmem:[%s2 + $0x220] sm:$0xff]
      %v3978 = vld [vmem:[%s2 + $0x228] sm:$0xff]
      %v3979 = vld [vmem:[%s2 + $0x230] sm:$0xff]
      %v3980 = vld [vmem:[%s2 + $0x238] sm:$0xff]
      %v3981 = vld [vmem:[%s2 + $0x240] sm:$0xff]
      %v3982 = vld [vmem:[%s2 + $0x248] sm:$0xff]
      %v3983 = vld [vmem:[%s2 + $0x250] sm:$0xff]
      %v3984 = vld [vmem:[%s2 + $0x258] sm:$0xff]
      %v3985 = vld [vmem:[%s2 + $0x260] sm:$0xff]
      %v3986 = vld [vmem:[%s2 + $0x268] sm:$0xff]
      %v3987 = vld [vmem:[%s2 + $0x270] sm:$0xff]
      %v3988 = vld [vmem:[%s2 + $0x278] sm:$0xff]
      %v3989 = vld [vmem:[%s2 + $0x280] sm:$0xff]
      %v3990 = vld [vmem:[%s2 + $0x288] sm:$0xff]
      %v3991 = vld [vmem:[%s2 + $0x290] sm:$0xff]
      %v3992 = vld [vmem:[%s2 + $0x298] sm:$0xff]
      %v3993 = vld [vmem:[%s2 + $0x2a0] sm:$0xff]
      %v3994 = vld [vmem:[%s2 + $0x2a8] sm:$0xff]
      %v3995 = vld [vmem:[%s2 + $0x2b0] sm:$0xff]
      %v3996 = vld [vmem:[%s2 + $0x2b8] sm:$0xff]
      %v3997 = vld [vmem:[%s2 + $0x2c0] sm:$0xff]
      %v3998 = vld [vmem:[%s2 + $0x2c8] sm:$0xff]
      %v3999 = vld [vmem:[%s2 + $0x2d0] sm:$0xff]
      %v4000 = vld [vmem:[%s2 + $0x2d8] sm:$0xff]
      %v4001 = vld [vmem:[%s2 + $0x2e0] sm:$0xff]
      %v4002 = vld [vmem:[%s2 + $0x2e8] sm:$0xff]
      %v4003 = vld [vmem:[%s2 + $0x2f0] sm:$0xff]
      %v4004 = vld [vmem:[%s2 + $0x2f8] sm:$0xff]
      %v4005 = vld [vmem:[%s2 + $0x300] sm:$0xff]
      %v4006 = vld [vmem:[%s2 + $0x308] sm:$0xff]
      %v4007 = vld [vmem:[%s2 + $0x310] sm:$0xff]
      %v4008 = vld [vmem:[%s2 + $0x318] sm:$0xff]
      %v4009 = vld [vmem:[%s2 + $0x320] sm:$0xff]
      %v4010 = vld [vmem:[%s2 + $0x328] sm:$0xff]
      %v4011 = vld [vmem:[%s2 + $0x330] sm:$0xff]
      %v4012 = vld [vmem:[%s2 + $0x338] sm:$0xff]
      %v4013 = vld [vmem:[%s2 + $0x340] sm:$0xff]
      %v4014 = vld [vmem:[%s2 + $0x348] sm:$0xff]
      %v4015 = vld [vmem:[%s2 + $0x350] sm:$0xff]
      %v4016 = vld [vmem:[%s2 + $0x358] sm:$0xff]
      %v4017 = vld [vmem:[%s2 + $0x360] sm:$0xff]
      %v4018 = vld [vmem:[%s2 + $0x368] sm:$0xff]
      %v4019 = vld [vmem:[%s2 + $0x370] sm:$0xff]
      %v4020 = vld [vmem:[%s2 + $0x378] sm:$0xff]
      %v4021 = vld [vmem:[%s2 + $0x380] sm:$0xff]
      %v4022 = vld [vmem:[%s2 + $0x388] sm:$0xff]
      %v4023 = vld [vmem:[%s2 + $0x390] sm:$0xff]
      %v4024 = vld [vmem:[%s2 + $0x398] sm:$0xff]
      %v4025 = vld [vmem:[%s2 + $0x3a0] sm:$0xff]
      %v4026 = vld [vmem:[%s2 + $0x3a8] sm:$0xff]
      %v4027 = vld [vmem:[%s2 + $0x3b0] sm:$0xff]
      %v4028 = vld [vmem:[%s2 + $0x3b8] sm:$0xff]
      %v4029 = vld [vmem:[%s2 + $0x3c0] sm:$0xff]
      %v4030 = vld [vmem:[%s2 + $0x3c8] sm:$0xff]
      %v4031 = vld [vmem:[%s2 + $0x3d0] sm:$0xff]
      %v4032 = vld [vmem:[%s2 + $0x3d8] sm:$0xff]
      %v4033 = vld [vmem:[%s2 + $0x3e0] sm:$0xff]
      %v4034 = vld [vmem:[%s2 + $0x3e8] sm:$0xff]
      %v4035 = vld [vmem:[%s2 + $0x3f0] sm:$0xff]
      %v4036 = vld [vmem:[%s2 + $0x3f8] sm:$0xff]
      %v4037 = vld [vmem:[%s2 + $0x400] sm:$0xff]
      %v4038 = vld [vmem:[%s2 + $0x408] sm:$0xff]
      %v4039 = vld [vmem:[%s2 + $0x410] sm:$0xff]
      %v4040 = vld [vmem:[%s2 + $0x418] sm:$0xff]
      %v4041 = vld [vmem:[%s2 + $0x420] sm:$0xff]
      %v4042 = vld [vmem:[%s2 + $0x428] sm:$0xff]
      %v4043 = vld [vmem:[%s2 + $0x430] sm:$0xff]
      %v4044 = vld [vmem:[%s2 + $0x438] sm:$0xff]
      %v4045 = vld [vmem:[%s2 + $0x440] sm:$0xff]
      %v4046 = vld [vmem:[%s2 + $0x448] sm:$0xff]
      %v4047 = vld [vmem:[%s2 + $0x450] sm:$0xff]
      %v4048 = vld [vmem:[%s2 + $0x458] sm:$0xff]
      %v4049 = vld [vmem:[%s2 + $0x460] sm:$0xff]
      %v4050 = vld [vmem:[%s2 + $0x468] sm:$0xff]
      %v4051 = vld [vmem:[%s2 + $0x470] sm:$0xff]
      %v4052 = vld [vmem:[%s2 + $0x478] sm:$0xff]
      %v4053 = vld [vmem:[%s11] sm:$0x3]
      %v4055 = vperm.slane %v4053, 0
      %v4056 = vperm.slane %v4053, 1
      %v4089 = vunpack.c.l.b16 %v3879
      %v4090 = vunpack.c.h.b16 %v3879
      %v4091 = vunpack.c.l.b16 %v3880
      %v4092 = vunpack.c.h.b16 %v3880
      %v4093 = vunpack.c.l.b16 %v3881
      %v4094 = vunpack.c.h.b16 %v3881
      %v4095 = vunpack.c.l.b16 %v3882
      %v4096 = vunpack.c.h.b16 %v3882
      %v4097 = vunpack.c.l.b16 %v3883
      %v4098 = vunpack.c.l.b16 %v3884
      %v4099 = vunpack.c.h.b16 %v3884
      %v4100 = vunpack.c.l.b16 %v3885
      %v4101 = vunpack.c.h.b16 %v3885
      %v4102 = vunpack.c.l.b16 %v3886
      %v4103 = vunpack.c.h.b16 %v3886
      %v4104 = vunpack.c.l.b16 %v3887
      %v4105 = vunpack.c.h.b16 %v3887
      %v4106 = vunpack.c.l.b16 %v3888
      %v4107 = vunpack.c.l.b16 %v3889
      %v4108 = vunpack.c.h.b16 %v3889
      %v4109 = vunpack.c.l.b16 %v3890
      %v4110 = vunpack.c.h.b16 %v3890
      %v4111 = vunpack.c.l.b16 %v3891
      %v4112 = vunpack.c.h.b16 %v3891
      %v4113 = vunpack.c.l.b16 %v3892
      %v4114 = vunpack.c.h.b16 %v3892
      %v4115 = vunpack.c.l.b16 %v3893
      %v4116 = vunpack.c.l.b16 %v3894
      %v4117 = vunpack.c.h.b16 %v3894
      %v4118 = vunpack.c.l.b16 %v3895
      %v4119 = vunpack.c.h.b16 %v3895
      %v4120 = vunpack.c.l.b16 %v3896
      %v4121 = vunpack.c.h.b16 %v3896
      %v4122 = vunpack.c.l.b16 %v3897
      %v4123 = vunpack.c.h.b16 %v3897
      %v4124 = vunpack.c.l.b16 %v3898
      %v4125 = vunpack.c.l.b16 %v3899
      %v4126 = vunpack.c.h.b16 %v3899
      %v4127 = vunpack.c.l.b16 %v3900
      %v4128 = vunpack.c.h.b16 %v3900
      %v4129 = vunpack.c.l.b16 %v3901
      %v4130 = vunpack.c.h.b16 %v3901
      %v4131 = vunpack.c.l.b16 %v3902
      %v4132 = vunpack.c.h.b16 %v3902
      %v4133 = vunpack.c.l.b16 %v3903
      %v4134 = vunpack.c.l.b16 %v3904
      %v4135 = vunpack.c.h.b16 %v3904
      %v4136 = vunpack.c.l.b16 %v3905
      %v4137 = vunpack.c.h.b16 %v3905
      %v4138 = vunpack.c.l.b16 %v3906
      %v4139 = vunpack.c.h.b16 %v3906
      %v4140 = vunpack.c.l.b16 %v3907
      %v4141 = vunpack.c.h.b16 %v3907
      %v4142 = vunpack.c.l.b16 %v3908
      %v4143 = vpack.c.b16 %v4098, %v4089
      %v4144 = vpack.c.b16 %v4099, %v4090
      %v4145 = vpack.c.b16 %v4100, %v4091
      %v4146 = vpack.c.b16 %v4101, %v4092
      %v4147 = vpack.c.b16 %v4102, %v4093
      %v4148 = vpack.c.b16 %v4103, %v4094
      %v4149 = vpack.c.b16 %v4104, %v4095
      %v4150 = vpack.c.b16 %v4105, %v4096
      %v4151 = vpack.c.b16 %v4106, %v4097
      %v4152 = vpack.c.b16 %v4116, %v4107
      %v4153 = vpack.c.b16 %v4117, %v4108
      %v4154 = vpack.c.b16 %v4118, %v4109
      %v4155 = vpack.c.b16 %v4119, %v4110
      %v4156 = vpack.c.b16 %v4120, %v4111
      %v4157 = vpack.c.b16 %v4121, %v4112
      %v4158 = vpack.c.b16 %v4122, %v4113
      %v4159 = vpack.c.b16 %v4123, %v4114
      %v4160 = vpack.c.b16 %v4124, %v4115
      %v4161 = vpack.c.b16 %v4134, %v4125
      %v4162 = vpack.c.b16 %v4135, %v4126
      %v4163 = vpack.c.b16 %v4136, %v4127
      %v4164 = vpack.c.b16 %v4137, %v4128
      %v4165 = vpack.c.b16 %v4138, %v4129
      %v4166 = vpack.c.b16 %v4139, %v4130
      %v4167 = vpack.c.b16 %v4140, %v4131
      %v4168 = vpack.c.b16 %v4141, %v4132
      %v4169 = vpack.c.b16 %v4142, %v4133
      %v4341 = vunpack.c.l.b16 %v3909
      %v4342 = vunpack.c.h.b16 %v3909
      %v4343 = vunpack.c.l.b16 %v3910
      %v4344 = vunpack.c.h.b16 %v3910
      %v4345 = vunpack.c.l.b16 %v3911
      %v4346 = vunpack.c.h.b16 %v3911
      %v4347 = vunpack.c.l.b16 %v3912
      %v4348 = vunpack.c.h.b16 %v3912
      %v4349 = vunpack.c.l.b16 %v3913
      %v4350 = vunpack.c.h.b16 %v3913
      %v4351 = vunpack.c.l.b16 %v3914
      %v4352 = vunpack.c.h.b16 %v3914
      %v4353 = vunpack.c.l.b16 %v3915
      %v4354 = vunpack.c.h.b16 %v3915
      %v4355 = vunpack.c.l.b16 %v3916
      %v4356 = vunpack.c.h.b16 %v3916
      %v4357 = vunpack.c.l.b16 %v3917
      %v4358 = vunpack.c.h.b16 %v3917
      %v4359 = vunpack.c.l.b16 %v3918
      %v4360 = vunpack.c.h.b16 %v3918
      %v4361 = vunpack.c.l.b16 %v3919
      %v4362 = vunpack.c.h.b16 %v3919
      %v4363 = vunpack.c.l.b16 %v3920
      %v4364 = vunpack.c.h.b16 %v3920
      %v4365 = vunpack.c.l.b16 %v3921
      %v4366 = vunpack.c.h.b16 %v3921
      %v4367 = vunpack.c.l.b16 %v3922
      %v4368 = vunpack.c.h.b16 %v3922
      %v4369 = vunpack.c.l.b16 %v3923
      %v4370 = vunpack.c.h.b16 %v3923
      %v4371 = vunpack.c.l.b16 %v3924
      %v4372 = vunpack.c.h.b16 %v3924
      %v4373 = vunpack.c.l.b16 %v3925
      %v4374 = vunpack.c.h.b16 %v3925
      %v4375 = vunpack.c.l.b16 %v3926
      %v4376 = vunpack.c.h.b16 %v3926
      %v4377 = vunpack.c.l.b16 %v3927
      %v4378 = vunpack.c.h.b16 %v3927
      %v4379 = vunpack.c.l.b16 %v3928
      %v4380 = vunpack.c.h.b16 %v3928
      %v4381 = vunpack.c.l.b16 %v3929
      %v4382 = vunpack.c.h.b16 %v3929
      %v4383 = vunpack.c.l.b16 %v3930
      %v4384 = vunpack.c.h.b16 %v3930
      %v4385 = vunpack.c.l.b16 %v3931
      %v4386 = vunpack.c.h.b16 %v3931
      %v4387 = vunpack.c.l.b16 %v3932
      %v4388 = vunpack.c.h.b16 %v3932
      %v4389 = vunpack.c.l.b16 %v3933
      %v4390 = vunpack.c.h.b16 %v3933
      %v4391 = vunpack.c.l.b16 %v3934
      %v4392 = vunpack.c.h.b16 %v3934
      %v4393 = vunpack.c.l.b16 %v3935
      %v4394 = vunpack.c.h.b16 %v3935
      %v4395 = vunpack.c.l.b16 %v3936
      %v4396 = vunpack.c.h.b16 %v3936
      %v4397 = vunpack.c.l.b16 %v3937
      %v4398 = vunpack.c.h.b16 %v3937
      %v4399 = vunpack.c.l.b16 %v3938
      %v4400 = vunpack.c.h.b16 %v3938
      %v4401 = vunpack.c.l.b16 %v3939
      %v4402 = vunpack.c.h.b16 %v3939
      %v4403 = vunpack.c.l.b16 %v3940
      %v4404 = vunpack.c.h.b16 %v3940
      %v4405 = vunpack.c.l.b16 %v3941
      %v4406 = vunpack.c.h.b16 %v3941
      %v4407 = vunpack.c.l.b16 %v3942
      %v4408 = vunpack.c.h.b16 %v3942
      %v4409 = vunpack.c.l.b16 %v3943
      %v4410 = vunpack.c.h.b16 %v3943
      %v4411 = vunpack.c.l.b16 %v3944
      %v4412 = vunpack.c.h.b16 %v3944
      %v4413 = vunpack.c.l.b16 %v3945
      %v4414 = vunpack.c.h.b16 %v3945
      %v4415 = vunpack.c.l.b16 %v3946
      %v4416 = vunpack.c.h.b16 %v3946
      %v4417 = vunpack.c.l.b16 %v3947
      %v4418 = vunpack.c.h.b16 %v3947
      %v4419 = vunpack.c.l.b16 %v3948
      %v4420 = vunpack.c.h.b16 %v3948
      %v4421 = vunpack.c.l.b16 %v3949
      %v4422 = vunpack.c.h.b16 %v3949
      %v4423 = vunpack.c.l.b16 %v3950
      %v4424 = vunpack.c.h.b16 %v3950
      %v4425 = vunpack.c.l.b16 %v3951
      %v4426 = vunpack.c.h.b16 %v3951
      %v4427 = vunpack.c.l.b16 %v3952
      %v4428 = vunpack.c.h.b16 %v3952
      %v4429 = vunpack.c.l.b16 %v3953
      %v4430 = vunpack.c.h.b16 %v3953
      %v4431 = vunpack.c.l.b16 %v3954
      %v4432 = vunpack.c.h.b16 %v3954
      %v4433 = vunpack.c.l.b16 %v3955
      %v4434 = vunpack.c.h.b16 %v3955
      %v4435 = vunpack.c.l.b16 %v3956
      %v4436 = vunpack.c.h.b16 %v3956
      %v4437 = vunpack.c.l.b16 %v3957
      %v4438 = vunpack.c.h.b16 %v3957
      %v4439 = vunpack.c.l.b16 %v3958
      %v4440 = vunpack.c.h.b16 %v3958
      %v4441 = vunpack.c.l.b16 %v3959
      %v4442 = vunpack.c.h.b16 %v3959
      %v4443 = vunpack.c.l.b16 %v3960
      %v4444 = vunpack.c.h.b16 %v3960
      %v4445 = vunpack.c.l.b16 %v3961
      %v4446 = vunpack.c.h.b16 %v3961
      %v4447 = vunpack.c.l.b16 %v3962
      %v4448 = vunpack.c.h.b16 %v3962
      %v4449 = vunpack.c.l.b16 %v3963
      %v4450 = vunpack.c.h.b16 %v3963
      %v4451 = vunpack.c.l.b16 %v3964
      %v4452 = vunpack.c.h.b16 %v3964
      %v4453 = vunpack.c.l.b16 %v3965
      %v4454 = vunpack.c.h.b16 %v3965
      %v4455 = vunpack.c.l.b16 %v3966
      %v4456 = vunpack.c.h.b16 %v3966
      %v4457 = vunpack.c.l.b16 %v3967
      %v4458 = vunpack.c.h.b16 %v3967
      %v4459 = vunpack.c.l.b16 %v3968
      %v4460 = vunpack.c.h.b16 %v3968
      %v4461 = vunpack.c.l.b16 %v3969
      %v4462 = vunpack.c.h.b16 %v3969
      %v4463 = vunpack.c.l.b16 %v3970
      %v4464 = vunpack.c.h.b16 %v3970
      %v4465 = vunpack.c.l.b16 %v3971
      %v4466 = vunpack.c.h.b16 %v3971
      %v4467 = vunpack.c.l.b16 %v3972
      %v4468 = vunpack.c.h.b16 %v3972
      %v4469 = vunpack.c.l.b16 %v3973
      %v4470 = vunpack.c.h.b16 %v3973
      %v4471 = vunpack.c.l.b16 %v3974
      %v4472 = vunpack.c.h.b16 %v3974
      %v4473 = vunpack.c.l.b16 %v3975
      %v4474 = vunpack.c.h.b16 %v3975
      %v4475 = vunpack.c.l.b16 %v3976
      %v4476 = vunpack.c.h.b16 %v3976
      %v4477 = vunpack.c.l.b16 %v3977
      %v4478 = vunpack.c.h.b16 %v3977
      %v4479 = vunpack.c.l.b16 %v3978
      %v4480 = vunpack.c.h.b16 %v3978
      %v4481 = vunpack.c.l.b16 %v3979
      %v4482 = vunpack.c.h.b16 %v3979
      %v4483 = vunpack.c.l.b16 %v3980
      %v4484 = vunpack.c.h.b16 %v3980
      %v4485 = vunpack.c.l.b16 %v3981
      %v4486 = vunpack.c.h.b16 %v3981
      %v4487 = vunpack.c.l.b16 %v3982
      %v4488 = vunpack.c.h.b16 %v3982
      %v4489 = vunpack.c.l.b16 %v3983
      %v4490 = vunpack.c.h.b16 %v3983
      %v4491 = vunpack.c.l.b16 %v3984
      %v4492 = vunpack.c.h.b16 %v3984
      %v4493 = vunpack.c.l.b16 %v3985
      %v4494 = vunpack.c.h.b16 %v3985
      %v4495 = vunpack.c.l.b16 %v3986
      %v4496 = vunpack.c.h.b16 %v3986
      %v4497 = vunpack.c.l.b16 %v3987
      %v4498 = vunpack.c.h.b16 %v3987
      %v4499 = vunpack.c.l.b16 %v3988
      %v4500 = vunpack.c.h.b16 %v3988
      %v4501 = vunpack.c.l.b16 %v3989
      %v4502 = vunpack.c.h.b16 %v3989
      %v4503 = vunpack.c.l.b16 %v3990
      %v4504 = vunpack.c.h.b16 %v3990
      %v4505 = vunpack.c.l.b16 %v3991
      %v4506 = vunpack.c.h.b16 %v3991
      %v4507 = vunpack.c.l.b16 %v3992
      %v4508 = vunpack.c.h.b16 %v3992
      %v4509 = vunpack.c.l.b16 %v3993
      %v4510 = vunpack.c.h.b16 %v3993
      %v4511 = vunpack.c.l.b16 %v3994
      %v4512 = vunpack.c.h.b16 %v3994
      %v4513 = vunpack.c.l.b16 %v3995
      %v4514 = vunpack.c.h.b16 %v3995
      %v4515 = vunpack.c.l.b16 %v3996
      %v4516 = vunpack.c.h.b16 %v3996
      %v4517 = vunpack.c.l.b16 %v3997
      %v4518 = vunpack.c.h.b16 %v3997
      %v4519 = vunpack.c.l.b16 %v3998
      %v4520 = vunpack.c.h.b16 %v3998
      %v4521 = vunpack.c.l.b16 %v3999
      %v4522 = vunpack.c.h.b16 %v3999
      %v4523 = vunpack.c.l.b16 %v4000
      %v4524 = vunpack.c.h.b16 %v4000
      %v4525 = vunpack.c.l.b16 %v4001
      %v4526 = vunpack.c.h.b16 %v4001
      %v4527 = vunpack.c.l.b16 %v4002
      %v4528 = vunpack.c.h.b16 %v4002
      %v4529 = vunpack.c.l.b16 %v4003
      %v4530 = vunpack.c.h.b16 %v4003
      %v4531 = vunpack.c.l.b16 %v4004
      %v4532 = vunpack.c.h.b16 %v4004
      %v4533 = vunpack.c.l.b16 %v4005
      %v4534 = vunpack.c.h.b16 %v4005
      %v4535 = vunpack.c.l.b16 %v4006
      %v4536 = vunpack.c.h.b16 %v4006
      %v4537 = vunpack.c.l.b16 %v4007
      %v4538 = vunpack.c.h.b16 %v4007
      %v4539 = vunpack.c.l.b16 %v4008
      %v4540 = vunpack.c.h.b16 %v4008
      %v4541 = vunpack.c.l.b16 %v4009
      %v4542 = vunpack.c.h.b16 %v4009
      %v4543 = vunpack.c.l.b16 %v4010
      %v4544 = vunpack.c.h.b16 %v4010
      %v4545 = vunpack.c.l.b16 %v4011
      %v4546 = vunpack.c.h.b16 %v4011
      %v4547 = vunpack.c.l.b16 %v4012
      %v4548 = vunpack.c.h.b16 %v4012
      %v4549 = vunpack.c.l.b16 %v4013
      %v4550 = vunpack.c.h.b16 %v4013
      %v4551 = vunpack.c.l.b16 %v4014
      %v4552 = vunpack.c.h.b16 %v4014
      %v4553 = vunpack.c.l.b16 %v4015
      %v4554 = vunpack.c.h.b16 %v4015
      %v4555 = vunpack.c.l.b16 %v4016
      %v4556 = vunpack.c.h.b16 %v4016
      %v4557 = vunpack.c.l.b16 %v4017
      %v4558 = vunpack.c.h.b16 %v4017
      %v4559 = vunpack.c.l.b16 %v4018
      %v4560 = vunpack.c.h.b16 %v4018
      %v4561 = vunpack.c.l.b16 %v4019
      %v4562 = vunpack.c.h.b16 %v4019
      %v4563 = vunpack.c.l.b16 %v4020
      %v4564 = vunpack.c.h.b16 %v4020
      %v4565 = vunpack.c.l.b16 %v4021
      %v4566 = vunpack.c.h.b16 %v4021
      %v4567 = vunpack.c.l.b16 %v4022
      %v4568 = vunpack.c.h.b16 %v4022
      %v4569 = vunpack.c.l.b16 %v4023
      %v4570 = vunpack.c.h.b16 %v4023
      %v4571 = vunpack.c.l.b16 %v4024
      %v4572 = vunpack.c.h.b16 %v4024
      %v4573 = vunpack.c.l.b16 %v4025
      %v4574 = vunpack.c.h.b16 %v4025
      %v4575 = vunpack.c.l.b16 %v4026
      %v4576 = vunpack.c.h.b16 %v4026
      %v4577 = vunpack.c.l.b16 %v4027
      %v4578 = vunpack.c.h.b16 %v4027
      %v4579 = vunpack.c.l.b16 %v4028
      %v4580 = vunpack.c.h.b16 %v4028
      %v4581 = vunpack.c.l.b16 %v4029
      %v4582 = vunpack.c.h.b16 %v4029
      %v4583 = vunpack.c.l.b16 %v4030
      %v4584 = vunpack.c.h.b16 %v4030
      %v4585 = vunpack.c.l.b16 %v4031
      %v4586 = vunpack.c.h.b16 %v4031
      %v4587 = vunpack.c.l.b16 %v4032
      %v4588 = vunpack.c.h.b16 %v4032
      %v4589 = vunpack.c.l.b16 %v4033
      %v4590 = vunpack.c.h.b16 %v4033
      %v4591 = vunpack.c.l.b16 %v4034
      %v4592 = vunpack.c.h.b16 %v4034
      %v4593 = vunpack.c.l.b16 %v4035
      %v4594 = vunpack.c.h.b16 %v4035
      %v4595 = vunpack.c.l.b16 %v4036
      %v4596 = vunpack.c.h.b16 %v4036
      %v4597 = vunpack.c.l.b16 %v4037
      %v4598 = vunpack.c.h.b16 %v4037
      %v4599 = vunpack.c.l.b16 %v4038
      %v4600 = vunpack.c.h.b16 %v4038
      %v4601 = vunpack.c.l.b16 %v4039
      %v4602 = vunpack.c.h.b16 %v4039
      %v4603 = vunpack.c.l.b16 %v4040
      %v4604 = vunpack.c.h.b16 %v4040
      %v4605 = vunpack.c.l.b16 %v4041
      %v4606 = vunpack.c.h.b16 %v4041
      %v4607 = vunpack.c.l.b16 %v4042
      %v4608 = vunpack.c.h.b16 %v4042
      %v4609 = vunpack.c.l.b16 %v4043
      %v4610 = vunpack.c.h.b16 %v4043
      %v4611 = vunpack.c.l.b16 %v4044
      %v4612 = vunpack.c.h.b16 %v4044
      %v4613 = vunpack.c.l.b16 %v4045
      %v4614 = vunpack.c.h.b16 %v4045
      %v4615 = vunpack.c.l.b16 %v4046
      %v4616 = vunpack.c.h.b16 %v4046
      %v4617 = vunpack.c.l.b16 %v4047
      %v4618 = vunpack.c.h.b16 %v4047
      %v4619 = vunpack.c.l.b16 %v4048
      %v4620 = vunpack.c.h.b16 %v4048
      %v4621 = vunpack.c.l.b16 %v4049
      %v4622 = vunpack.c.h.b16 %v4049
      %v4623 = vunpack.c.l.b16 %v4050
      %v4624 = vunpack.c.h.b16 %v4050
      %v4625 = vunpack.c.l.b16 %v4051
      %v4626 = vunpack.c.h.b16 %v4051
      %v4627 = vunpack.c.l.b16 %v4052
      %v4628 = vunpack.c.h.b16 %v4052
      %v4629 = vpack.c.b16 %v4343, %v4341
      %v4630 = vpack.c.b16 %v4344, %v4342
      %v4631 = vpack.c.b16 %v4347, %v4345
      %v4632 = vpack.c.b16 %v4348, %v4346
      %v4633 = vpack.c.b16 %v4351, %v4349
      %v4634 = vpack.c.b16 %v4352, %v4350
      %v4635 = vpack.c.b16 %v4355, %v4353
      %v4636 = vpack.c.b16 %v4356, %v4354
      %v4637 = vpack.c.b16 %v4359, %v4357
      %v4638 = vpack.c.b16 %v4360, %v4358
      %v4639 = vpack.c.b16 %v4363, %v4361
      %v4640 = vpack.c.b16 %v4364, %v4362
      %v4641 = vpack.c.b16 %v4367, %v4365
      %v4642 = vpack.c.b16 %v4368, %v4366
      %v4643 = vpack.c.b16 %v4371, %v4369
      %v4644 = vpack.c.b16 %v4372, %v4370
      %v4645 = vpack.c.b16 %v4375, %v4373
      %v4646 = vpack.c.b16 %v4376, %v4374
      %v4647 = vpack.c.b16 %v4379, %v4377
      %v4648 = vpack.c.b16 %v4380, %v4378
      %v4649 = vpack.c.b16 %v4383, %v4381
      %v4650 = vpack.c.b16 %v4384, %v4382
      %v4651 = vpack.c.b16 %v4387, %v4385
      %v4652 = vpack.c.b16 %v4388, %v4386
      %v4653 = vpack.c.b16 %v4391, %v4389
      %v4654 = vpack.c.b16 %v4392, %v4390
      %v4655 = vpack.c.b16 %v4395, %v4393
      %v4656 = vpack.c.b16 %v4396, %v4394
      %v4657 = vpack.c.b16 %v4399, %v4397
      %v4658 = vpack.c.b16 %v4400, %v4398
      %v4659 = vpack.c.b16 %v4403, %v4401
      %v4660 = vpack.c.b16 %v4404, %v4402
      %v4661 = vpack.c.b16 %v4407, %v4405
      %v4662 = vpack.c.b16 %v4408, %v4406
      %v4663 = vpack.c.b16 %v4411, %v4409
      %v4664 = vpack.c.b16 %v4412, %v4410
      %v4665 = vpack.c.b16 %v4415, %v4413
      %v4666 = vpack.c.b16 %v4416, %v4414
      %v4667 = vpack.c.b16 %v4419, %v4417
      %v4668 = vpack.c.b16 %v4420, %v4418
      %v4669 = vpack.c.b16 %v4423, %v4421
      %v4670 = vpack.c.b16 %v4424, %v4422
      %v4671 = vpack.c.b16 %v4427, %v4425
      %v4672 = vpack.c.b16 %v4428, %v4426
      %v4673 = vpack.c.b16 %v4431, %v4429
      %v4674 = vpack.c.b16 %v4432, %v4430
      %v4675 = vpack.c.b16 %v4435, %v4433
      %v4676 = vpack.c.b16 %v4436, %v4434
      %v4677 = vpack.c.b16 %v4439, %v4437
      %v4678 = vpack.c.b16 %v4440, %v4438
      %v4679 = vpack.c.b16 %v4443, %v4441
      %v4680 = vpack.c.b16 %v4444, %v4442
      %v4681 = vpack.c.b16 %v4447, %v4445
      %v4682 = vpack.c.b16 %v4448, %v4446
      %v4683 = vpack.c.b16 %v4451, %v4449
      %v4684 = vpack.c.b16 %v4452, %v4450
      %v4685 = vpack.c.b16 %v4455, %v4453
      %v4686 = vpack.c.b16 %v4456, %v4454
      %v4687 = vpack.c.b16 %v4459, %v4457
      %v4688 = vpack.c.b16 %v4460, %v4458
      %v4689 = vpack.c.b16 %v4463, %v4461
      %v4690 = vpack.c.b16 %v4464, %v4462
      %v4691 = vpack.c.b16 %v4467, %v4465
      %v4692 = vpack.c.b16 %v4468, %v4466
      %v4693 = vpack.c.b16 %v4471, %v4469
      %v4694 = vpack.c.b16 %v4472, %v4470
      %v4695 = vpack.c.b16 %v4475, %v4473
      %v4696 = vpack.c.b16 %v4476, %v4474
      %v4697 = vpack.c.b16 %v4479, %v4477
      %v4698 = vpack.c.b16 %v4480, %v4478
      %v4699 = vpack.c.b16 %v4483, %v4481
      %v4700 = vpack.c.b16 %v4484, %v4482
      %v4701 = vpack.c.b16 %v4487, %v4485
      %v4702 = vpack.c.b16 %v4488, %v4486
      %v4703 = vpack.c.b16 %v4491, %v4489
      %v4704 = vpack.c.b16 %v4492, %v4490
      %v4705 = vpack.c.b16 %v4495, %v4493
      %v4706 = vpack.c.b16 %v4496, %v4494
      %v4707 = vpack.c.b16 %v4499, %v4497
      %v4708 = vpack.c.b16 %v4500, %v4498
      %v4709 = vpack.c.b16 %v4503, %v4501
      %v4710 = vpack.c.b16 %v4504, %v4502
      %v4711 = vpack.c.b16 %v4507, %v4505
      %v4712 = vpack.c.b16 %v4508, %v4506
      %v4713 = vpack.c.b16 %v4511, %v4509
      %v4714 = vpack.c.b16 %v4512, %v4510
      %v4715 = vpack.c.b16 %v4515, %v4513
      %v4716 = vpack.c.b16 %v4516, %v4514
      %v4717 = vpack.c.b16 %v4519, %v4517
      %v4718 = vpack.c.b16 %v4520, %v4518
      %v4719 = vpack.c.b16 %v4523, %v4521
      %v4720 = vpack.c.b16 %v4524, %v4522
      %v4721 = vpack.c.b16 %v4527, %v4525
      %v4722 = vpack.c.b16 %v4528, %v4526
      %v4723 = vpack.c.b16 %v4531, %v4529
      %v4724 = vpack.c.b16 %v4532, %v4530
      %v4725 = vpack.c.b16 %v4535, %v4533
      %v4726 = vpack.c.b16 %v4536, %v4534
      %v4727 = vpack.c.b16 %v4539, %v4537
      %v4728 = vpack.c.b16 %v4540, %v4538
      %v4729 = vpack.c.b16 %v4543, %v4541
      %v4730 = vpack.c.b16 %v4544, %v4542
      %v4731 = vpack.c.b16 %v4547, %v4545
      %v4732 = vpack.c.b16 %v4548, %v4546
      %v4733 = vpack.c.b16 %v4551, %v4549
      %v4734 = vpack.c.b16 %v4552, %v4550
      %v4735 = vpack.c.b16 %v4555, %v4553
      %v4736 = vpack.c.b16 %v4556, %v4554
      %v4737 = vpack.c.b16 %v4559, %v4557
      %v4738 = vpack.c.b16 %v4560, %v4558
      %v4739 = vpack.c.b16 %v4563, %v4561
      %v4740 = vpack.c.b16 %v4564, %v4562
      %v4741 = vpack.c.b16 %v4567, %v4565
      %v4742 = vpack.c.b16 %v4568, %v4566
      %v4743 = vpack.c.b16 %v4571, %v4569
      %v4744 = vpack.c.b16 %v4572, %v4570
      %v4745 = vpack.c.b16 %v4575, %v4573
      %v4746 = vpack.c.b16 %v4576, %v4574
      %v4747 = vpack.c.b16 %v4579, %v4577
      %v4748 = vpack.c.b16 %v4580, %v4578
      %v4749 = vpack.c.b16 %v4583, %v4581
      %v4750 = vpack.c.b16 %v4584, %v4582
      %v4751 = vpack.c.b16 %v4587, %v4585
      %v4752 = vpack.c.b16 %v4588, %v4586
      %v4753 = vpack.c.b16 %v4591, %v4589
      %v4754 = vpack.c.b16 %v4592, %v4590
      %v4755 = vpack.c.b16 %v4595, %v4593
      %v4756 = vpack.c.b16 %v4596, %v4594
      %v4757 = vpack.c.b16 %v4599, %v4597
      %v4758 = vpack.c.b16 %v4600, %v4598
      %v4759 = vpack.c.b16 %v4603, %v4601
      %v4760 = vpack.c.b16 %v4604, %v4602
      %v4761 = vpack.c.b16 %v4607, %v4605
      %v4762 = vpack.c.b16 %v4608, %v4606
      %v4763 = vpack.c.b16 %v4611, %v4609
      %v4764 = vpack.c.b16 %v4612, %v4610
      %v4765 = vpack.c.b16 %v4615, %v4613
      %v4766 = vpack.c.b16 %v4616, %v4614
      %v4767 = vpack.c.b16 %v4619, %v4617
      %v4768 = vpack.c.b16 %v4620, %v4618
      %v4769 = vpack.c.b16 %v4623, %v4621
      %v4770 = vpack.c.b16 %v4624, %v4622
      %v4771 = vpack.c.b16 %v4627, %v4625
      %v4772 = vpack.c.b16 %v4628, %v4626
      %4917 = vmatpush.bf16.msra.mxu0 %v4643
      %4918 = vmatpush.bf16.msra.mxu0 %v4641
      %4919 = vmatpush.bf16.msra.mxu0 %v4639
      %4920 = vmatpush.bf16.msra.mxu0 %v4637
      %4921 = vmatpush.bf16.msra.mxu0 %v4635
      %4922 = vmatpush.bf16.msra.mxu0 %v4633
      %4923 = vmatpush.bf16.msra.mxu0 %v4631
      %4924 = vmatpush.bf16.msra.mxu0 %v4629
      %4925 = vmatmul.bf16.gmra.mxu0 %v4143
      %v4926 = vpop.f32.mrf.mxu0
      %v4927 = vadd.f32 %v4055, %v4926
      %v4928 = vpop.f32.mrf.mxu0
      %v4929 = vadd.f32 %v4055, %v4928
      %4930 = vmatmul.bf16.gmra.mxu0 %v4152
      %v4931 = vpop.f32.mrf.mxu0
      %v4932 = vadd.f32 %v4055, %v4931
      %v4933 = vpop.f32.mrf.mxu0
      %v4934 = vadd.f32 %v4055, %v4933
      %4935 = vmatmul.bf16.gmra.mxu0 %v4161
      %v4936 = vpop.f32.mrf.mxu0
      %v4937 = vadd.f32 %v4055, %v4936
      %v4938 = vpop.f32.mrf.mxu0
      %v4939 = vadd.f32 %v4055, %v4938
      %4940 = vdwg.mxu0
      %4941 = vmatpush.bf16.msra.mxu0 %v4659
      %4942 = vmatpush.bf16.msra.mxu0 %v4657
      %4943 = vmatpush.bf16.msra.mxu0 %v4655
      %4944 = vmatpush.bf16.msra.mxu0 %v4653
      %4945 = vmatpush.bf16.msra.mxu0 %v4651
      %4946 = vmatpush.bf16.msra.mxu0 %v4649
      %4947 = vmatpush.bf16.msra.mxu0 %v4647
      %4948 = vmatpush.bf16.msra.mxu0 %v4645
      %4949 = vmatmul.bf16.gmra.mxu0 %v4144
      %v4950 = vpop.f32.mrf.mxu0
      %v4951 = vadd.f32 %v4927, %v4950
      %v4952 = vpop.f32.mrf.mxu0
      %v4953 = vadd.f32 %v4929, %v4952
      %4954 = vmatmul.bf16.gmra.mxu0 %v4153
      %v4955 = vpop.f32.mrf.mxu0
      %v4956 = vadd.f32 %v4932, %v4955
      %v4957 = vpop.f32.mrf.mxu0
      %v4958 = vadd.f32 %v4934, %v4957
      %4959 = vmatmul.bf16.gmra.mxu0 %v4162
      %v4960 = vpop.f32.mrf.mxu0
      %v4961 = vadd.f32 %v4937, %v4960
      %v4962 = vpop.f32.mrf.mxu0
      %v4963 = vadd.f32 %v4939, %v4962
      %4964 = vdwg.mxu0
      %4965 = vmatpush.bf16.msra.mxu0 %v4675
      %4966 = vmatpush.bf16.msra.mxu0 %v4673
      %4967 = vmatpush.bf16.msra.mxu0 %v4671
      %4968 = vmatpush.bf16.msra.mxu0 %v4669
      %4969 = vmatpush.bf16.msra.mxu0 %v4667
      %4970 = vmatpush.bf16.msra.mxu0 %v4665
      %4971 = vmatpush.bf16.msra.mxu0 %v4663
      %4972 = vmatpush.bf16.msra.mxu0 %v4661
      %4973 = vmatmul.bf16.gmra.mxu0 %v4145
      %v4974 = vpop.f32.mrf.mxu0
      %v4975 = vadd.f32 %v4951, %v4974
      %v4976 = vpop.f32.mrf.mxu0
      %v4977 = vadd.f32 %v4953, %v4976
      %4978 = vmatmul.bf16.gmra.mxu0 %v4154
      %v4979 = vpop.f32.mrf.mxu0
      %v4980 = vadd.f32 %v4956, %v4979
      %v4981 = vpop.f32.mrf.mxu0
      %v4982 = vadd.f32 %v4958, %v4981
      %4983 = vmatmul.bf16.gmra.mxu0 %v4163
      %v4984 = vpop.f32.mrf.mxu0
      %v4985 = vadd.f32 %v4961, %v4984
      %v4986 = vpop.f32.mrf.mxu0
      %v4987 = vadd.f32 %v4963, %v4986
      %4988 = vdwg.mxu0
      %4989 = vmatpush.bf16.msra.mxu0 %v4691
      %4990 = vmatpush.bf16.msra.mxu0 %v4689
      %4991 = vmatpush.bf16.msra.mxu0 %v4687
      %4992 = vmatpush.bf16.msra.mxu0 %v4685
      %4993 = vmatpush.bf16.msra.mxu0 %v4683
      %4994 = vmatpush.bf16.msra.mxu0 %v4681
      %4995 = vmatpush.bf16.msra.mxu0 %v4679
      %4996 = vmatpush.bf16.msra.mxu0 %v4677
      %4997 = vmatmul.bf16.gmra.mxu0 %v4146
      %v4998 = vpop.f32.mrf.mxu0
      %v4999 = vadd.f32 %v4975, %v4998
      %v5000 = vpop.f32.mrf.mxu0
      %v5001 = vadd.f32 %v4977, %v5000
      %5002 = vmatmul.bf16.gmra.mxu0 %v4155
      %v5003 = vpop.f32.mrf.mxu0
      %v5004 = vadd.f32 %v4980, %v5003
      %v5005 = vpop.f32.mrf.mxu0
      %v5006 = vadd.f32 %v4982, %v5005
      %5007 = vmatmul.bf16.gmra.mxu0 %v4164
      %v5008 = vpop.f32.mrf.mxu0
      %v5009 = vadd.f32 %v4985, %v5008
      %v5010 = vpop.f32.mrf.mxu0
      %v5011 = vadd.f32 %v4987, %v5010
      %5012 = vdwg.mxu0
      %5013 = vmatpush.bf16.msra.mxu0 %v4707
      %5014 = vmatpush.bf16.msra.mxu0 %v4705
      %5015 = vmatpush.bf16.msra.mxu0 %v4703
      %5016 = vmatpush.bf16.msra.mxu0 %v4701
      %5017 = vmatpush.bf16.msra.mxu0 %v4699
      %5018 = vmatpush.bf16.msra.mxu0 %v4697
      %5019 = vmatpush.bf16.msra.mxu0 %v4695
      %5020 = vmatpush.bf16.msra.mxu0 %v4693
      %5021 = vmatmul.bf16.gmra.mxu0 %v4147
      %v5022 = vpop.f32.mrf.mxu0
      %v5023 = vadd.f32 %v4999, %v5022
      %v5024 = vpop.f32.mrf.mxu0
      %v5025 = vadd.f32 %v5001, %v5024
      %5026 = vmatmul.bf16.gmra.mxu0 %v4156
      %v5027 = vpop.f32.mrf.mxu0
      %v5028 = vadd.f32 %v5004, %v5027
      %v5029 = vpop.f32.mrf.mxu0
      %v5030 = vadd.f32 %v5006, %v5029
      %5031 = vmatmul.bf16.gmra.mxu0 %v4165
      %v5032 = vpop.f32.mrf.mxu0
      %v5033 = vadd.f32 %v5009, %v5032
      %v5034 = vpop.f32.mrf.mxu0
      %v5035 = vadd.f32 %v5011, %v5034
      %5036 = vdwg.mxu0
      %5037 = vmatpush.bf16.msra.mxu0 %v4723
      %5038 = vmatpush.bf16.msra.mxu0 %v4721
      %5039 = vmatpush.bf16.msra.mxu0 %v4719
      %5040 = vmatpush.bf16.msra.mxu0 %v4717
      %5041 = vmatpush.bf16.msra.mxu0 %v4715
      %5042 = vmatpush.bf16.msra.mxu0 %v4713
      %5043 = vmatpush.bf16.msra.mxu0 %v4711
      %5044 = vmatpush.bf16.msra.mxu0 %v4709
      %5045 = vmatmul.bf16.gmra.mxu0 %v4148
      %v5046 = vpop.f32.mrf.mxu0
      %v5047 = vadd.f32 %v5023, %v5046
      %v5048 = vpop.f32.mrf.mxu0
      %v5049 = vadd.f32 %v5025, %v5048
      %5050 = vmatmul.bf16.gmra.mxu0 %v4157
      %v5051 = vpop.f32.mrf.mxu0
      %v5052 = vadd.f32 %v5028, %v5051
      %v5053 = vpop.f32.mrf.mxu0
      %v5054 = vadd.f32 %v5030, %v5053
      %5055 = vmatmul.bf16.gmra.mxu0 %v4166
      %v5056 = vpop.f32.mrf.mxu0
      %v5057 = vadd.f32 %v5033, %v5056
      %v5058 = vpop.f32.mrf.mxu0
      %v5059 = vadd.f32 %v5035, %v5058
      %5060 = vdwg.mxu0
      %5061 = vmatpush.bf16.msra.mxu0 %v4739
      %5062 = vmatpush.bf16.msra.mxu0 %v4737
      %5063 = vmatpush.bf16.msra.mxu0 %v4735
      %5064 = vmatpush.bf16.msra.mxu0 %v4733
      %5065 = vmatpush.bf16.msra.mxu0 %v4731
      %5066 = vmatpush.bf16.msra.mxu0 %v4729
      %5067 = vmatpush.bf16.msra.mxu0 %v4727
      %5068 = vmatpush.bf16.msra.mxu0 %v4725
      %5069 = vmatmul.bf16.gmra.mxu0 %v4149
      %v5070 = vpop.f32.mrf.mxu0
      %v5071 = vadd.f32 %v5047, %v5070
      %v5072 = vpop.f32.mrf.mxu0
      %v5073 = vadd.f32 %v5049, %v5072
      %5074 = vmatmul.bf16.gmra.mxu0 %v4158
      %v5075 = vpop.f32.mrf.mxu0
      %v5076 = vadd.f32 %v5052, %v5075
      %v5077 = vpop.f32.mrf.mxu0
      %v5078 = vadd.f32 %v5054, %v5077
      %5079 = vmatmul.bf16.gmra.mxu0 %v4167
      %v5080 = vpop.f32.mrf.mxu0
      %v5081 = vadd.f32 %v5057, %v5080
      %v5082 = vpop.f32.mrf.mxu0
      %v5083 = vadd.f32 %v5059, %v5082
      %5084 = vdwg.mxu0
      %5085 = vmatpush.bf16.msra.mxu0 %v4755
      %5086 = vmatpush.bf16.msra.mxu0 %v4753
      %5087 = vmatpush.bf16.msra.mxu0 %v4751
      %5088 = vmatpush.bf16.msra.mxu0 %v4749
      %5089 = vmatpush.bf16.msra.mxu0 %v4747
      %5090 = vmatpush.bf16.msra.mxu0 %v4745
      %5091 = vmatpush.bf16.msra.mxu0 %v4743
      %5092 = vmatpush.bf16.msra.mxu0 %v4741
      %5093 = vmatmul.bf16.gmra.mxu0 %v4150
      %v5094 = vpop.f32.mrf.mxu0
      %v5095 = vadd.f32 %v5071, %v5094
      %v5096 = vpop.f32.mrf.mxu0
      %v5097 = vadd.f32 %v5073, %v5096
      %5098 = vmatmul.bf16.gmra.mxu0 %v4159
      %v5099 = vpop.f32.mrf.mxu0
      %v5100 = vadd.f32 %v5076, %v5099
      %v5101 = vpop.f32.mrf.mxu0
      %v5102 = vadd.f32 %v5078, %v5101
      %5103 = vmatmul.bf16.gmra.mxu0 %v4168
      %v5104 = vpop.f32.mrf.mxu0
      %v5105 = vadd.f32 %v5081, %v5104
      %v5106 = vpop.f32.mrf.mxu0
      %v5107 = vadd.f32 %v5083, %v5106
      %5108 = vdwg.mxu0
      %5109 = vmatpush.bf16.msra.mxu0 %v4771
      %5110 = vmatpush.bf16.msra.mxu0 %v4769
      %5111 = vmatpush.bf16.msra.mxu0 %v4767
      %5112 = vmatpush.bf16.msra.mxu0 %v4765
      %5113 = vmatpush.bf16.msra.mxu0 %v4763
      %5114 = vmatpush.bf16.msra.mxu0 %v4761
      %5115 = vmatpush.bf16.msra.mxu0 %v4759
      %5116 = vmatpush.bf16.msra.mxu0 %v4757
      %5117 = vmatmul.bf16.gmra.mxu0 %v4151
      %v5118 = vpop.f32.mrf.mxu0
      %v5119 = vadd.f32 %v5095, %v5118
      %v5120 = vpop.f32.mrf.mxu0
      %v5121 = vadd.f32 %v5097, %v5120
      %5122 = vmatmul.bf16.gmra.mxu0 %v4160
      %v5123 = vpop.f32.mrf.mxu0
      %v5124 = vadd.f32 %v5100, %v5123
      %v5125 = vpop.f32.mrf.mxu0
      %v5126 = vadd.f32 %v5102, %v5125
      %5127 = vmatmul.bf16.gmra.mxu0 %v4169
      %v5128 = vpop.f32.mrf.mxu0
      %v5129 = vadd.f32 %v5105, %v5128
      %v5130 = vpop.f32.mrf.mxu0
      %v5131 = vadd.f32 %v5107, %v5130
      %5132 = vdwg.mxu0
      %5133 = vmatpush.bf16.msra.mxu0 %v4644
      %5134 = vmatpush.bf16.msra.mxu0 %v4642
      %5135 = vmatpush.bf16.msra.mxu0 %v4640
      %5136 = vmatpush.bf16.msra.mxu0 %v4638
      %5137 = vmatpush.bf16.msra.mxu0 %v4636
      %5138 = vmatpush.bf16.msra.mxu0 %v4634
      %5139 = vmatpush.bf16.msra.mxu0 %v4632
      %5140 = vmatpush.bf16.msra.mxu0 %v4630
      %5141 = vmatmul.bf16.gmra.mxu0 %v4143
      %v5142 = vpop.f32.mrf.mxu0
      %v5143 = vadd.f32 %v4056, %v5142
      %v5144 = vpop.f32.mrf.mxu0
      %v5145 = vadd.f32 %v4056, %v5144
      %5146 = vmatmul.bf16.gmra.mxu0 %v4152
      %v5147 = vpop.f32.mrf.mxu0
      %v5148 = vadd.f32 %v4056, %v5147
      %v5149 = vpop.f32.mrf.mxu0
      %v5150 = vadd.f32 %v4056, %v5149
      %5151 = vmatmul.bf16.gmra.mxu0 %v4161
      %v5152 = vpop.f32.mrf.mxu0
      %v5153 = vadd.f32 %v4056, %v5152
      %v5154 = vpop.f32.mrf.mxu0
      %v5155 = vadd.f32 %v4056, %v5154
      %5156 = vdwg.mxu0
      %5157 = vmatpush.bf16.msra.mxu0 %v4660
      %5158 = vmatpush.bf16.msra.mxu0 %v4658
      %5159 = vmatpush.bf16.msra.mxu0 %v4656
      %5160 = vmatpush.bf16.msra.mxu0 %v4654
      %5161 = vmatpush.bf16.msra.mxu0 %v4652
      %5162 = vmatpush.bf16.msra.mxu0 %v4650
      %5163 = vmatpush.bf16.msra.mxu0 %v4648
      %5164 = vmatpush.bf16.msra.mxu0 %v4646
      %5165 = vmatmul.bf16.gmra.mxu0 %v4144
      %v5166 = vpop.f32.mrf.mxu0
      %v5167 = vadd.f32 %v5143, %v5166
      %v5168 = vpop.f32.mrf.mxu0
      %v5169 = vadd.f32 %v5145, %v5168
      %5170 = vmatmul.bf16.gmra.mxu0 %v4153
      %v5171 = vpop.f32.mrf.mxu0
      %v5172 = vadd.f32 %v5148, %v5171
      %v5173 = vpop.f32.mrf.mxu0
      %v5174 = vadd.f32 %v5150, %v5173
      %5175 = vmatmul.bf16.gmra.mxu0 %v4162
      %v5176 = vpop.f32.mrf.mxu0
      %v5177 = vadd.f32 %v5153, %v5176
      %v5178 = vpop.f32.mrf.mxu0
      %v5179 = vadd.f32 %v5155, %v5178
      %5180 = vdwg.mxu0
      %5181 = vmatpush.bf16.msra.mxu0 %v4676
      %5182 = vmatpush.bf16.msra.mxu0 %v4674
      %5183 = vmatpush.bf16.msra.mxu0 %v4672
      %5184 = vmatpush.bf16.msra.mxu0 %v4670
      %5185 = vmatpush.bf16.msra.mxu0 %v4668
      %5186 = vmatpush.bf16.msra.mxu0 %v4666
      %5187 = vmatpush.bf16.msra.mxu0 %v4664
      %5188 = vmatpush.bf16.msra.mxu0 %v4662
      %5189 = vmatmul.bf16.gmra.mxu0 %v4145
      %v5190 = vpop.f32.mrf.mxu0
      %v5191 = vadd.f32 %v5167, %v5190
      %v5192 = vpop.f32.mrf.mxu0
      %v5193 = vadd.f32 %v5169, %v5192
      %5194 = vmatmul.bf16.gmra.mxu0 %v4154
      %v5195 = vpop.f32.mrf.mxu0
      %v5196 = vadd.f32 %v5172, %v5195
      %v5197 = vpop.f32.mrf.mxu0
      %v5198 = vadd.f32 %v5174, %v5197
      %5199 = vmatmul.bf16.gmra.mxu0 %v4163
      %v5200 = vpop.f32.mrf.mxu0
      %v5201 = vadd.f32 %v5177, %v5200
      %v5202 = vpop.f32.mrf.mxu0
      %v5203 = vadd.f32 %v5179, %v5202
      %5204 = vdwg.mxu0
      %5205 = vmatpush.bf16.msra.mxu0 %v4692
      %5206 = vmatpush.bf16.msra.mxu0 %v4690
      %5207 = vmatpush.bf16.msra.mxu0 %v4688
      %5208 = vmatpush.bf16.msra.mxu0 %v4686
      %5209 = vmatpush.bf16.msra.mxu0 %v4684
      %5210 = vmatpush.bf16.msra.mxu0 %v4682
      %5211 = vmatpush.bf16.msra.mxu0 %v4680
      %5212 = vmatpush.bf16.msra.mxu0 %v4678
      %5213 = vmatmul.bf16.gmra.mxu0 %v4146
      %v5214 = vpop.f32.mrf.mxu0
      %v5215 = vadd.f32 %v5191, %v5214
      %v5216 = vpop.f32.mrf.mxu0
      %v5217 = vadd.f32 %v5193, %v5216
      %5218 = vmatmul.bf16.gmra.mxu0 %v4155
      %v5219 = vpop.f32.mrf.mxu0
      %v5220 = vadd.f32 %v5196, %v5219
      %v5221 = vpop.f32.mrf.mxu0
      %v5222 = vadd.f32 %v5198, %v5221
      %5223 = vmatmul.bf16.gmra.mxu0 %v4164
      %v5224 = vpop.f32.mrf.mxu0
      %v5225 = vadd.f32 %v5201, %v5224
      %v5226 = vpop.f32.mrf.mxu0
      %v5227 = vadd.f32 %v5203, %v5226
      %5228 = vdwg.mxu0
      %5229 = vmatpush.bf16.msra.mxu0 %v4708
      %5230 = vmatpush.bf16.msra.mxu0 %v4706
      %5231 = vmatpush.bf16.msra.mxu0 %v4704
      %5232 = vmatpush.bf16.msra.mxu0 %v4702
      %5233 = vmatpush.bf16.msra.mxu0 %v4700
      %5234 = vmatpush.bf16.msra.mxu0 %v4698
      %5235 = vmatpush.bf16.msra.mxu0 %v4696
      %5236 = vmatpush.bf16.msra.mxu0 %v4694
      %5237 = vmatmul.bf16.gmra.mxu0 %v4147
      %v5238 = vpop.f32.mrf.mxu0
      %v5239 = vadd.f32 %v5215, %v5238
      %v5240 = vpop.f32.mrf.mxu0
      %v5241 = vadd.f32 %v5217, %v5240
      %5242 = vmatmul.bf16.gmra.mxu0 %v4156
      %v5243 = vpop.f32.mrf.mxu0
      %v5244 = vadd.f32 %v5220, %v5243
      %v5245 = vpop.f32.mrf.mxu0
      %v5246 = vadd.f32 %v5222, %v5245
      %5247 = vmatmul.bf16.gmra.mxu0 %v4165
      %v5248 = vpop.f32.mrf.mxu0
      %v5249 = vadd.f32 %v5225, %v5248
      %v5250 = vpop.f32.mrf.mxu0
      %v5251 = vadd.f32 %v5227, %v5250
      %5252 = vdwg.mxu0
      %5253 = vmatpush.bf16.msra.mxu0 %v4724
      %5254 = vmatpush.bf16.msra.mxu0 %v4722
      %5255 = vmatpush.bf16.msra.mxu0 %v4720
      %5256 = vmatpush.bf16.msra.mxu0 %v4718
      %5257 = vmatpush.bf16.msra.mxu0 %v4716
      %5258 = vmatpush.bf16.msra.mxu0 %v4714
      %5259 = vmatpush.bf16.msra.mxu0 %v4712
      %5260 = vmatpush.bf16.msra.mxu0 %v4710
      %5261 = vmatmul.bf16.gmra.mxu0 %v4148
      %v5262 = vpop.f32.mrf.mxu0
      %v5263 = vadd.f32 %v5239, %v5262
      %v5264 = vpop.f32.mrf.mxu0
      %v5265 = vadd.f32 %v5241, %v5264
      %5266 = vmatmul.bf16.gmra.mxu0 %v4157
      %v5267 = vpop.f32.mrf.mxu0
      %v5268 = vadd.f32 %v5244, %v5267
      %v5269 = vpop.f32.mrf.mxu0
      %v5270 = vadd.f32 %v5246, %v5269
      %5271 = vmatmul.bf16.gmra.mxu0 %v4166
      %v5272 = vpop.f32.mrf.mxu0
      %v5273 = vadd.f32 %v5249, %v5272
      %v5274 = vpop.f32.mrf.mxu0
      %v5275 = vadd.f32 %v5251, %v5274
      %5276 = vdwg.mxu0
      %5277 = vmatpush.bf16.msra.mxu0 %v4740
      %5278 = vmatpush.bf16.msra.mxu0 %v4738
      %5279 = vmatpush.bf16.msra.mxu0 %v4736
      %5280 = vmatpush.bf16.msra.mxu0 %v4734
      %5281 = vmatpush.bf16.msra.mxu0 %v4732
      %5282 = vmatpush.bf16.msra.mxu0 %v4730
      %5283 = vmatpush.bf16.msra.mxu0 %v4728
      %5284 = vmatpush.bf16.msra.mxu0 %v4726
      %5285 = vmatmul.bf16.gmra.mxu0 %v4149
      %v5286 = vpop.f32.mrf.mxu0
      %v5287 = vadd.f32 %v5263, %v5286
      %v5288 = vpop.f32.mrf.mxu0
      %v5289 = vadd.f32 %v5265, %v5288
      %5290 = vmatmul.bf16.gmra.mxu0 %v4158
      %v5291 = vpop.f32.mrf.mxu0
      %v5292 = vadd.f32 %v5268, %v5291
      %v5293 = vpop.f32.mrf.mxu0
      %v5294 = vadd.f32 %v5270, %v5293
      %5295 = vmatmul.bf16.gmra.mxu0 %v4167
      %v5296 = vpop.f32.mrf.mxu0
      %v5297 = vadd.f32 %v5273, %v5296
      %v5298 = vpop.f32.mrf.mxu0
      %v5299 = vadd.f32 %v5275, %v5298
      %5300 = vdwg.mxu0
      %5301 = vmatpush.bf16.msra.mxu0 %v4756
      %5302 = vmatpush.bf16.msra.mxu0 %v4754
      %5303 = vmatpush.bf16.msra.mxu0 %v4752
      %5304 = vmatpush.bf16.msra.mxu0 %v4750
      %5305 = vmatpush.bf16.msra.mxu0 %v4748
      %5306 = vmatpush.bf16.msra.mxu0 %v4746
      %5307 = vmatpush.bf16.msra.mxu0 %v4744
      %5308 = vmatpush.bf16.msra.mxu0 %v4742
      %5309 = vmatmul.bf16.gmra.mxu0 %v4150
      %v5310 = vpop.f32.mrf.mxu0
      %v5311 = vadd.f32 %v5287, %v5310
      %v5312 = vpop.f32.mrf.mxu0
      %v5313 = vadd.f32 %v5289, %v5312
      %5314 = vmatmul.bf16.gmra.mxu0 %v4159
      %v5315 = vpop.f32.mrf.mxu0
      %v5316 = vadd.f32 %v5292, %v5315
      %v5317 = vpop.f32.mrf.mxu0
      %v5318 = vadd.f32 %v5294, %v5317
      %5319 = vmatmul.bf16.gmra.mxu0 %v4168
      %v5320 = vpop.f32.mrf.mxu0
      %v5321 = vadd.f32 %v5297, %v5320
      %v5322 = vpop.f32.mrf.mxu0
      %v5323 = vadd.f32 %v5299, %v5322
      %5324 = vdwg.mxu0
      %5325 = vmatpush.bf16.msra.mxu0 %v4772
      %5326 = vmatpush.bf16.msra.mxu0 %v4770
      %5327 = vmatpush.bf16.msra.mxu0 %v4768
      %5328 = vmatpush.bf16.msra.mxu0 %v4766
      %5329 = vmatpush.bf16.msra.mxu0 %v4764
      %5330 = vmatpush.bf16.msra.mxu0 %v4762
      %5331 = vmatpush.bf16.msra.mxu0 %v4760
      %5332 = vmatpush.bf16.msra.mxu0 %v4758
      %5333 = vmatmul.bf16.gmra.mxu0 %v4151
      %v5334 = vpop.f32.mrf.mxu0
      %v5335 = vadd.f32 %v5311, %v5334
      %v5336 = vpop.f32.mrf.mxu0
      %v5337 = vadd.f32 %v5313, %v5336
      %5338 = vmatmul.bf16.gmra.mxu0 %v4160
      %v5339 = vpop.f32.mrf.mxu0
      %v5340 = vadd.f32 %v5316, %v5339
      %v5341 = vpop.f32.mrf.mxu0
      %v5342 = vadd.f32 %v5318, %v5341
      %5343 = vmatmul.bf16.gmra.mxu0 %v4169
      %v5344 = vpop.f32.mrf.mxu0
      %v5345 = vadd.f32 %v5321, %v5344
      %v5346 = vpop.f32.mrf.mxu0
      %v5347 = vadd.f32 %v5323, %v5346
      %5348 = vdwg.mxu0
      %v5349 = vmul.f32 %v5119, 0.2
      %v5350 = vmul.f32 %v5335, 0.2
      %v5351 = vmul.f32 %v5121, 0.2
      %v5352 = vmul.f32 %v5337, 0.2
      %v5353 = vmul.f32 %v5124, 0.2
      %v5354 = vmul.f32 %v5340, 0.2
      %v5355 = vmul.f32 %v5126, 0.2
      %v5356 = vmul.f32 %v5342, 0.2
      %v5357 = vmul.f32 %v5129, 0.2
      %v5358 = vmul.f32 %v5345, 0.2
      %v5359 = vmul.f32 %v5131, 0.2
      %v5360 = vmul.f32 %v5347, 0.2
      %v5361 = vmax.f32 %v5119, %v5349
      %v5362 = vmax.f32 %v5335, %v5350
      %v5363 = vmax.f32 %v5121, %v5351
      %v5364 = vmax.f32 %v5337, %v5352
      %v5365 = vmax.f32 %v5124, %v5353
      %v5366 = vmax.f32 %v5340, %v5354
      %v5367 = vmax.f32 %v5126, %v5355
      %v5368 = vmax.f32 %v5342, %v5356
      %v5369 = vmax.f32 %v5129, %v5357
      %v5370 = vmax.f32 %v5345, %v5358
      %v5371 = vmax.f32 %v5131, %v5359
      %v5372 = vmax.f32 %v5347, %v5360
      %5373 = vst [vmem:[%s513] sm:$0xff] %v5361
      %vm5374 = vcmask 523264
      %5375 = vst.msk [vmem:[%s513 + $0x8] sm:$0xff] %vm5374, %v5362
      %5376 = vst [vmem:[%s513 + $0x10] sm:$0xff] %v5363
      %5377 = vst.msk [vmem:[%s513 + $0x18] sm:$0xff] %vm5374, %v5364
      %5378 = vst [vmem:[%s513 + $0x20] sm:$0xff] %v5365
      %5379 = vst.msk [vmem:[%s513 + $0x28] sm:$0xff] %vm5374, %v5366
      %5380 = vst [vmem:[%s513 + $0x30] sm:$0xff] %v5367
      %5381 = vst.msk [vmem:[%s513 + $0x38] sm:$0xff] %vm5374, %v5368
      %5382 = vst [vmem:[%s513 + $0x40] sm:$0xff] %v5369
      %5383 = vst.msk [vmem:[%s513 + $0x48] sm:$0xff] %vm5374, %v5370
      %5384 = vst [vmem:[%s513 + $0x50] sm:$0xff] %v5371
      %5385 = vst.msk [vmem:[%s513 + $0x58] sm:$0xff] %vm5374, %v5372
      %v5386 = vld [vmem:[%s513] sm:$0xff]
      %v5387 = vld [vmem:[%s513 + $0x8] sm:$0xff]
      %v5388 = vld [vmem:[%s513 + $0x10] sm:$0xff]
      %v5389 = vld [vmem:[%s513 + $0x18] sm:$0xff]
      %v5390 = vld [vmem:[%s513 + $0x20] sm:$0xff]
      %v5391 = vld [vmem:[%s513 + $0x28] sm:$0xff]
      %v5392 = vld [vmem:[%s513 + $0x30] sm:$0xff]
      %v5393 = vld [vmem:[%s513 + $0x38] sm:$0xff]
      %v5394 = vld [vmem:[%s513 + $0x40] sm:$0x1f]
      %v5395 = vld [vmem:[%s513 + $0x48] sm:$0x1f]
      %v5396 = vld [vmem:[%s513] sm:$0xfe]
      %v5397 = vld [vmem:[%s513 + $0x8] sm:$0xfe]
      %v5398 = vld [vmem:[%s513 + $0x40] sm:$0x3f]
      %v5399 = vld [vmem:[%s513 + $0x48] sm:$0x3f]
      %v5410 = vrot.slane %v5396, 1
      %v5411 = vrot.slane %v5388, 1
      %v5412 = vsel %vm1663, %v5410, %v5411
      %v5413 = vrot.slane %v5397, 1
      %v5414 = vrot.slane %v5389, 1
      %v5415 = vsel %vm1663, %v5413, %v5414
      %v5416 = vrot.slane %v5390, 1
      %v5417 = vsel %vm1663, %v5411, %v5416
      %v5418 = vrot.slane %v5391, 1
      %v5419 = vsel %vm1663, %v5414, %v5418
      %v5420 = vrot.slane %v5392, 1
      %v5421 = vsel %vm1663, %v5416, %v5420
      %v5422 = vrot.slane %v5393, 1
      %v5423 = vsel %vm1663, %v5418, %v5422
      %v5424 = vrot.slane %v5398, 1
      %v5425 = vsel %vm1663, %v5420, %v5424
      %v5426 = vrot.slane %v5399, 1
      %v5427 = vsel %vm1663, %v5422, %v5426
      %v5438 = vmax.f32 %v5386, %v5412
      %v5439 = vmax.f32 %v5387, %v5415
      %v5440 = vmax.f32 %v5388, %v5417
      %v5441 = vmax.f32 %v5389, %v5419
      %v5442 = vmax.f32 %v5390, %v5421
      %v5443 = vmax.f32 %v5391, %v5423
      %v5444 = vmax.f32 %v5392, %v5425
      %v5445 = vmax.f32 %v5393, %v5427
      %v5446 = vmax.f32 %v5394, %v5424
      %v5447 = vmax.f32 %v5395, %v5426
      %v5448 = vld [vmem:[%s513 + $0x40] sm:$0xff]
      %v5449 = vld [vmem:[%s513 + $0x48] sm:$0xff]
      %v5450 = vld [vmem:[%s513 + $0x50] sm:$0x1f]
      %v5451 = vld [vmem:[%s513 + $0x58] sm:$0x1f]
      %v5452 = vld [vmem:[%s513 + $0x10] sm:$0xfe]
      %v5453 = vld [vmem:[%s513 + $0x18] sm:$0xfe]
      %v5454 = vld [vmem:[%s513 + $0x50] sm:$0x3f]
      %v5455 = vld [vmem:[%s513 + $0x58] sm:$0x3f]
      %v5462 = vrot.slane %v5452, 1
      %v5463 = vsel %vm1663, %v5462, %v5416
      %v5464 = vrot.slane %v5453, 1
      %v5465 = vsel %vm1663, %v5464, %v5418
      %v5466 = vrot.slane %v5448, 1
      %v5467 = vsel %vm1663, %v5420, %v5466
      %v5468 = vrot.slane %v5449, 1
      %v5469 = vsel %vm1663, %v5422, %v5468
      %v5470 = vrot.slane %v5454, 1
      %v5471 = vsel %vm1663, %v5466, %v5470
      %v5472 = vrot.slane %v5455, 1
      %v5473 = vsel %vm1663, %v5468, %v5472
      %v5482 = vmax.f32 %v5388, %v5463
      %v5483 = vmax.f32 %v5389, %v5465
      %v5484 = vmax.f32 %v5392, %v5467
      %v5485 = vmax.f32 %v5393, %v5469
      %v5486 = vmax.f32 %v5448, %v5471
      %v5487 = vmax.f32 %v5449, %v5473
      %v5488 = vmax.f32 %v5450, %v5470
      %v5489 = vmax.f32 %v5451, %v5472
      %v5490 = vmax.f32 %v5438, %v5482
      %v5491 = vmax.f32 %v5439, %v5483
      %v5492 = vmax.f32 %v5440, %v5442
      %v5493 = vmax.f32 %v5441, %v5443
      %v5494 = vmax.f32 %v5442, %v5484
      %v5495 = vmax.f32 %v5443, %v5485
      %v5496 = vmax.f32 %v5444, %v5486
      %v5497 = vmax.f32 %v5445, %v5487
      %v5498 = vmax.f32 %v5446, %v5488
      %v5499 = vmax.f32 %v5447, %v5489
      %v5500 = vld [vmem:[%s7] sm:$0xf]
      %v5501 = vld [vmem:[%s7 + $0x4] sm:$0xf]
      %v5502 = vpack.c.bf16 %v5492, %v5490
      %v5503 = vpack.c.bf16 %v5493, %v5491
      %v5504 = vpack.c.bf16 %v5496, %v5494
      %v5505 = vpack.c.bf16 %v5497, %v5495
      %v5506 = vpack.c.bf16 %v5498, %v5498
      %v5507 = vpack.c.bf16 %v5499, %v5499
      %v5510 = vunpack.c.l.b16 %v5500
      %v5511 = vunpack.c.l.b16 %v5501
      %v5512 = vpack.c.b16 %v5511, %v5510
      %vm5513 = vcmask 302080
      %v5515 = vsel %vm5513, %v5512, 0
      %vm5517 = vcmask 1041408
      %vm5518 = vcmask 1042432
      %v5519 = vsel %vm5517, 4294967295, 65535
      %v5520 = vsel %vm5518, %v5519, 0
      %v5522 = vand.u32 %v5506, %v5520
      %v5525 = vand.u32 %v5507, %v5520
      %5527 = vmatpush.bf16.msra.mxu0 0
      %5528 = vmatpush.bf16.msra.mxu0 0
      %5529 = vmatpush.bf16.msra.mxu0 0
      %5530 = vmatpush.bf16.msra.mxu0 0
      %5531 = vmatpush.bf16.msra.mxu0 0
      %5532 = vmatpush.bf16.msra.mxu0 %v5522
      %5533 = vmatpush.bf16.msra.mxu0 %v5504
      %5534 = vmatpush.bf16.msra.mxu0 %v5502
      %5535 = vmatmul.bf16.gmra.mxu0 %v5515
      %v5536 = vpop.f32.mrf.mxu0
      %v5537 = vadd.f32 0.0, %v5536
      %v5538 = vpop.f32.mrf.mxu0
      %v5539 = vadd.f32 0.0, %v5538
      %5540 = vdwg.mxu0
      %5541 = vmatpush.bf16.msra.mxu0 0
      %5542 = vmatpush.bf16.msra.mxu0 0
      %5543 = vmatpush.bf16.msra.mxu0 0
      %5544 = vmatpush.bf16.msra.mxu0 0
      %5545 = vmatpush.bf16.msra.mxu0 0
      %5546 = vmatpush.bf16.msra.mxu0 %v5525
      %5547 = vmatpush.bf16.msra.mxu0 %v5505
      %5548 = vmatpush.bf16.msra.mxu0 %v5503
      %5549 = vmatmul.bf16.gmra.mxu0 %v5515
      %v5550 = vpop.f32.mrf.mxu0
      %v5551 = vadd.f32 0.0, %v5550
      %v5552 = vpop.f32.mrf.mxu0
      %v5553 = vadd.f32 0.0, %v5552
      %5554 = vdwg.mxu0
      %v5555 = vpack.c.bf16 %v5539, %v5537
      %v5556 = vpack.c.bf16 %v5553, %v5551
      %v5557 = vld [vmem:[%s8] sm:$0xf]
      %v5558 = vld [vmem:[%s8 + $0x4] sm:$0xf]
      %v5559 = vld [vmem:[%s8 + $0x8] sm:$0xf]
      %v5560 = vld [vmem:[%s8 + $0xc] sm:$0xf]
      %v5561 = vld [vmem:[%s8 + $0x10] sm:$0xf]
      %v5562 = vld [vmem:[%s8 + $0x14] sm:$0xf]
      %v5563 = vld [vmem:[%s8 + $0x18] sm:$0xf]
      %v5564 = vld [vmem:[%s8 + $0x1c] sm:$0xf]
      %v5565 = vld [vmem:[%s8 + $0x20] sm:$0xf]
      %v5566 = vld [vmem:[%s8 + $0x24] sm:$0xf]
      %v5567 = vld [vmem:[%s8 + $0x28] sm:$0xf]
      %v5568 = vld [vmem:[%s8 + $0x2c] sm:$0xf]
      %v5569 = vld [vmem:[%s8 + $0x30] sm:$0xf]
      %v5570 = vld [vmem:[%s8 + $0x34] sm:$0xf]
      %v5571 = vld [vmem:[%s8 + $0x38] sm:$0xf]
      %v5572 = vld [vmem:[%s8 + $0x3c] sm:$0xf]
      %v5573 = vld [vmem:[%s8 + $0x40] sm:$0xf]
      %v5574 = vld [vmem:[%s8 + $0x44] sm:$0xf]
      %v5575 = vld [vmem:[%s8 + $0x48] sm:$0xf]
      %v5576 = vld [vmem:[%s8 + $0x4c] sm:$0xf]
      %v5577 = vld [vmem:[%s8 + $0x50] sm:$0xf]
      %v5578 = vld [vmem:[%s8 + $0x54] sm:$0xf]
      %v5579 = vld [vmem:[%s8 + $0x58] sm:$0xf]
      %v5580 = vld [vmem:[%s8 + $0x5c] sm:$0xf]
      %v5605 = vunpack.c.l.b16 %v5557
      %v5606 = vunpack.c.l.b16 %v5558
      %v5607 = vunpack.c.l.b16 %v5559
      %v5608 = vunpack.c.l.b16 %v5560
      %v5609 = vunpack.c.l.b16 %v5561
      %v5610 = vunpack.c.l.b16 %v5562
      %v5611 = vunpack.c.l.b16 %v5563
      %v5612 = vunpack.c.l.b16 %v5564
      %v5613 = vunpack.c.l.b16 %v5565
      %v5614 = vunpack.c.l.b16 %v5566
      %v5615 = vunpack.c.l.b16 %v5567
      %v5616 = vunpack.c.l.b16 %v5568
      %v5617 = vunpack.c.l.b16 %v5569
      %v5618 = vunpack.c.l.b16 %v5570
      %v5619 = vunpack.c.l.b16 %v5571
      %v5620 = vunpack.c.l.b16 %v5572
      %v5621 = vunpack.c.l.b16 %v5573
      %v5622 = vunpack.c.l.b16 %v5574
      %v5623 = vunpack.c.l.b16 %v5575
      %v5624 = vunpack.c.l.b16 %v5576
      %v5625 = vunpack.c.l.b16 %v5577
      %v5626 = vunpack.c.l.b16 %v5578
      %v5627 = vunpack.c.l.b16 %v5579
      %v5628 = vunpack.c.l.b16 %v5580
      %v5629 = vpack.c.b16 %v5606, %v5605
      %v5630 = vpack.c.b16 %v5608, %v5607
      %v5631 = vpack.c.b16 %v5610, %v5609
      %v5632 = vpack.c.b16 %v5612, %v5611
      %v5633 = vpack.c.b16 %v5614, %v5613
      %v5634 = vpack.c.b16 %v5616, %v5615
      %v5635 = vpack.c.b16 %v5618, %v5617
      %v5636 = vpack.c.b16 %v5620, %v5619
      %v5637 = vpack.c.b16 %v5622, %v5621
      %v5638 = vpack.c.b16 %v5624, %v5623
      %v5639 = vpack.c.b16 %v5626, %v5625
      %v5640 = vpack.c.b16 %v5628, %v5627
      %v5654 = vsel %vm5374, %v5556, 0
      %5656 = vmatpush.bf16.msra.mxu0 %v5636
      %5657 = vmatpush.bf16.msra.mxu0 %v5635
      %5658 = vmatpush.bf16.msra.mxu0 %v5634
      %5659 = vmatpush.bf16.msra.mxu0 %v5633
      %5660 = vmatpush.bf16.msra.mxu0 %v5632
      %5661 = vmatpush.bf16.msra.mxu0 %v5631
      %5662 = vmatpush.bf16.msra.mxu0 %v5630
      %5663 = vmatpush.bf16.msra.mxu0 %v5629
      %5664 = vmatmul.bf16.gmra.mxu0 %v5555
      %v5665 = vpop.f32.mrf.mxu0
      %v5666 = vadd.f32 0.0, %v5665
      %v5667 = vpop.f32.mrf.mxu0
      %v5668 = vadd.f32 0.0, %v5667
      %5669 = vdwg.mxu0
      %5670 = vmatpush.bf16.msra.mxu0 0
      %5671 = vmatpush.bf16.msra.mxu0 0
      %5672 = vmatpush.bf16.msra.mxu0 0
      %5673 = vmatpush.bf16.msra.mxu0 0
      %5674 = vmatpush.bf16.msra.mxu0 %v5640
      %5675 = vmatpush.bf16.msra.mxu0 %v5639
      %5676 = vmatpush.bf16.msra.mxu0 %v5638
      %5677 = vmatpush.bf16.msra.mxu0 %v5637
      %5678 = vmatmul.bf16.gmra.mxu0 %v5654
      %v5679 = vpop.f32.mrf.mxu0
      %v5680 = vadd.f32 %v5666, %v5679
      %v5681 = vpop.f32.mrf.mxu0
      %v5682 = vadd.f32 %v5668, %v5681
      %5683 = vdwg.mxu0
      %v5684 = vld [vmem:[%s9] sm:$0xf]
      %v5685 = vld [vmem:[%s9 + $0x4] sm:$0xf]
      %v5686 = vld [vmem:[%s9 + $0x8] sm:$0xf]
      %v5687 = vld [vmem:[%s9 + $0xc] sm:$0xf]
      %v5688 = vld [vmem:[%s9 + $0x10] sm:$0xf]
      %v5689 = vld [vmem:[%s9 + $0x14] sm:$0xf]
      %v5690 = vld [vmem:[%s9 + $0x18] sm:$0xf]
      %v5691 = vld [vmem:[%s9 + $0x1c] sm:$0xf]
      %v5692 = vld [vmem:[%s9 + $0x20] sm:$0xf]
      %v5693 = vld [vmem:[%s9 + $0x24] sm:$0xf]
      %v5694 = vld [vmem:[%s9 + $0x28] sm:$0xf]
      %v5695 = vld [vmem:[%s9 + $0x2c] sm:$0xf]
      %v5696 = vld [vmem:[%s9 + $0x30] sm:$0xf]
      %v5697 = vld [vmem:[%s9 + $0x34] sm:$0xf]
      %v5698 = vld [vmem:[%s9 + $0x38] sm:$0xf]
      %v5699 = vld [vmem:[%s9 + $0x3c] sm:$0xf]
      %v5700 = vld [vmem:[%s9 + $0x40] sm:$0xf]
      %v5701 = vld [vmem:[%s9 + $0x44] sm:$0xf]
      %v5702 = vld [vmem:[%s9 + $0x48] sm:$0xf]
      %v5703 = vld [vmem:[%s9 + $0x4c] sm:$0xf]
      %v5704 = vld [vmem:[%s9 + $0x50] sm:$0xf]
      %v5705 = vld [vmem:[%s9 + $0x54] sm:$0xf]
      %v5706 = vld [vmem:[%s9 + $0x58] sm:$0xf]
      %v5707 = vld [vmem:[%s9 + $0x5c] sm:$0xf]
      %v5732 = vunpack.c.l.b16 %v5684
      %v5733 = vunpack.c.l.b16 %v5685
      %v5734 = vunpack.c.l.b16 %v5686
      %v5735 = vunpack.c.l.b16 %v5687
      %v5736 = vunpack.c.l.b16 %v5688
      %v5737 = vunpack.c.l.b16 %v5689
      %v5738 = vunpack.c.l.b16 %v5690
      %v5739 = vunpack.c.l.b16 %v5691
      %v5740 = vunpack.c.l.b16 %v5692
      %v5741 = vunpack.c.l.b16 %v5693
      %v5742 = vunpack.c.l.b16 %v5694
      %v5743 = vunpack.c.l.b16 %v5695
      %v5744 = vunpack.c.l.b16 %v5696
      %v5745 = vunpack.c.l.b16 %v5697
      %v5746 = vunpack.c.l.b16 %v5698
      %v5747 = vunpack.c.l.b16 %v5699
      %v5748 = vunpack.c.l.b16 %v5700
      %v5749 = vunpack.c.l.b16 %v5701
      %v5750 = vunpack.c.l.b16 %v5702
      %v5751 = vunpack.c.l.b16 %v5703
      %v5752 = vunpack.c.l.b16 %v5704
      %v5753 = vunpack.c.l.b16 %v5705
      %v5754 = vunpack.c.l.b16 %v5706
      %v5755 = vunpack.c.l.b16 %v5707
      %v5756 = vpack.c.b16 %v5733, %v5732
      %v5757 = vpack.c.b16 %v5735, %v5734
      %v5758 = vpack.c.b16 %v5737, %v5736
      %v5759 = vpack.c.b16 %v5739, %v5738
      %v5760 = vpack.c.b16 %v5741, %v5740
      %v5761 = vpack.c.b16 %v5743, %v5742
      %v5762 = vpack.c.b16 %v5745, %v5744
      %v5763 = vpack.c.b16 %v5747, %v5746
      %v5764 = vpack.c.b16 %v5749, %v5748
      %v5765 = vpack.c.b16 %v5751, %v5750
      %v5766 = vpack.c.b16 %v5753, %v5752
      %v5767 = vpack.c.b16 %v5755, %v5754
      %5780 = vmatpush.bf16.msra.mxu0 %v5763
      %5781 = vmatpush.bf16.msra.mxu0 %v5762
      %5782 = vmatpush.bf16.msra.mxu0 %v5761
      %5783 = vmatpush.bf16.msra.mxu0 %v5760
      %5784 = vmatpush.bf16.msra.mxu0 %v5759
      %5785 = vmatpush.bf16.msra.mxu0 %v5758
      %5786 = vmatpush.bf16.msra.mxu0 %v5757
      %5787 = vmatpush.bf16.msra.mxu0 %v5756
      %5788 = vmatmul.bf16.gmra.mxu0 %v5555
      %v5789 = vpop.f32.mrf.mxu0
      %v5790 = vadd.f32 0.0, %v5789
      %v5791 = vpop.f32.mrf.mxu0
      %v5792 = vadd.f32 0.0, %v5791
      %5793 = vdwg.mxu0
      %5794 = vmatpush.bf16.msra.mxu0 0
      %5795 = vmatpush.bf16.msra.mxu0 0
      %5796 = vmatpush.bf16.msra.mxu0 0
      %5797 = vmatpush.bf16.msra.mxu0 0
      %5798 = vmatpush.bf16.msra.mxu0 %v5767
      %5799 = vmatpush.bf16.msra.mxu0 %v5766
      %5800 = vmatpush.bf16.msra.mxu0 %v5765
      %5801 = vmatpush.bf16.msra.mxu0 %v5764
      %5802 = vmatmul.bf16.gmra.mxu0 %v5654
      %v5803 = vpop.f32.mrf.mxu0
      %v5804 = vadd.f32 %v5790, %v5803
      %v5805 = vpop.f32.mrf.mxu0
      %v5806 = vadd.f32 %v5792, %v5805
      %5807 = vdwg.mxu0
      %v5808 = vmax.f32 %v5680, %v5804
      %v5809 = vmax.f32 %v5682, %v5806
      %v5810 = vpack.c.bf16 %v5808, %v5808
      %v5811 = vpack.c.bf16 %v5809, %v5809
      %5812 = vst [vmem:[#allocation4] sm:$0xf] %v5810
      %5813 = vst [vmem:[#allocation4 + $0x4] sm:$0xf] %v5811
      %v5814 = vld [vmem:[#allocation4] sm:$0x3]
      %vm5815 = vcmask 1041408
      %vm5816 = vsmask.f32 1280
      %vm5817 = vmand %vm5815, %vm5816
      %v5818 = vld [vmem:[#allocation5] sm:$0x3]
      %v5819 = vsel %vm5817, %v5814, %v5818
      %5820 = vst [vmem:[#allocation5] sm:$0x3] %v5819
      %v5821 = vld [vmem:[#allocation4] sm:$0x3]
      %v5823 = vrot.slane %v5821, 2
      %v5826 = vsel %vm5517, %v5821, %v5823
      %v5827 = vshrl.u32 %v5826, 16
      %v5829 = vrot.slane %v5827, 6
      %v5830 = vshll.u32 %v5826, 16
      %v5832 = vrot.slane %v5830, 7
      %v5833 = vor.u32 %v5829, %v5832
      %v5834 = vrot.slane %v5833, 2
      %v5836 = vld [vmem:[#allocation5 + $0x2] sm:$0x3]
      %v5837 = vsel %vm5817, %v5834, %v5836
      %5838 = vst [vmem:[#allocation5 + $0x2] sm:$0x3] %v5837
      %v5839 = vld [vmem:[#allocation4] sm:$0x6]
      %v5841 = vrot.slane %v5839, 2
      %v5844 = vsel %vm5517, %v5839, %v5841
      %vm5846 = vcmask 1043458
      %v5847 = vsel %vm5846, %v5839, %v5841
      %v5849 = vrot.slane %v5847, 2
      %vm5850 = vcmask 1040384
      %vm5851 = vcmask 1042434
      %vm5852 = vmor %vm5850, %vm5851
      %vm5853 = vcmask 1044484
      %vm5854 = vmor %vm5852, %vm5853
      %vm5855 = vcmask 1046534
      %vm5856 = vmor %vm5854, %vm5855
      %v5857 = vrot.slane %v5844, 7
      %v5858 = vrot.slane %v5857, 2
      %v5859 = vrot.slane %v5849, 7
      %v5860 = vsel %vm5856, %v5858, %v5859
      %v5862 = vld [vmem:[#allocation5 + $0x4] sm:$0x3]
      %v5863 = vsel %vm5817, %v5860, %v5862
      %5864 = vst [vmem:[#allocation5 + $0x4] sm:$0x3] %v5863
      %v5865 = vld [vmem:[#allocation4] sm:$0x6]
      %v5867 = vrot.slane %v5865, 2
      %v5870 = vsel %vm5517, %v5865, %v5867
      %v5871 = vsel %vm5846, %v5865, %v5867
      %v5873 = vrot.slane %v5871, 2
      %vm5874 = vsmask.f32 256
      %vm5875 = vsmask.f32 2312
      %vm5876 = vmor %vm5874, %vm5875
      %vm5877 = vsmask.f32 4368
      %vm5878 = vmor %vm5876, %vm5877
      %vm5879 = vsmask.f32 6424
      %vm5880 = vmor %vm5878, %vm5879
      %v5881 = vshrl.u32 %v5870, 16
      %v5883 = vrot.slane %v5881, 7
      %v5884 = vrot.slane %v5883, 2
      %v5886 = vshrl.u32 %v5873, 16
      %v5888 = vrot.slane %v5886, 7
      %v5889 = vshll.u32 %v5873, 16
      %v5891 = vor.u32 %v5888, %v5889
      %v5892 = vsel %vm5880, %v5884, %v5891
      %v5894 = vld [vmem:[#allocation5 + $0x6] sm:$0x3]
      %v5895 = vsel %vm5817, %v5892, %v5894
      %5896 = vst [vmem:[#allocation5 + $0x6] sm:$0x3] %v5895
      %v5897 = vld [vmem:[#allocation4] sm:$0xc]
      %5899 = vst.sshfl [vmem:[#allocation1] sm:$0xff pattern:$0x75643120] %v5897
      %s5900 = scalar_lea.vmem [#allocation1], 1
      %v5901 = vld [vmem:[%s5900] ss:$2 sm:$0xff]
      %v5903 = vld [vmem:[#allocation5 + $0x8] sm:$0x3]
      %v5904 = vsel %vm5817, %v5901, %v5903
      %5905 = vst [vmem:[#allocation5 + $0x8] sm:$0x3] %v5904
      %v5906 = vld [vmem:[#allocation4] sm:$0xc]
      %5908 = vst.sshfl [vmem:[#allocation1] sm:$0xff pattern:$0x75643120] %v5906
      %s5909 = scalar_lea.vmem [#allocation1], 1
      %v5910 = vld [vmem:[%s5909] ss:$2 sm:$0xff]
      %v5911 = vshrl.u32 %v5910, 16
      %v5913 = vrot.slane %v5911, 6
      %v5914 = vshll.u32 %v5910, 16
      %v5916 = vrot.slane %v5914, 7
      %v5917 = vor.u32 %v5913, %v5916
      %v5918 = vrot.slane %v5917, 2
      %v5920 = vld [vmem:[#allocation5 + $0xa] sm:$0x3]
      %v5921 = vsel %vm5817, %v5918, %v5920
      %5922 = vst [vmem:[#allocation5 + $0xa] sm:$0x3] %v5921
      %v5923 = vld [vmem:[#allocation4] sm:$0x8]
      %v5924 = vld [vmem:[#allocation4 + $0x4] sm:$0x1]
      %5926 = vst.sshfl [vmem:[#allocation1] sm:$0xff pattern:$0x75643120] %v5923
      %5928 = vst.sshfl [vmem:[#allocation1 + $0x10] sm:$0xff pattern:$0x75643120] %v5924
      %s5929 = scalar_lea.vmem [#allocation1], 1
      %v5930 = vld [vmem:[%s5929] ss:$2 sm:$0xff]
      %s5932 = scalar_lea.vmem [#allocation1], 16
      %v5933 = vld [vmem:[%s5932] ss:$2 sm:$0xff]
      %v5935 = vrot.slane %v5930, 7
      %v5936 = vrot.slane %v5935, 2
      %v5937 = vrot.slane %v5933, 7
      %v5938 = vsel %vm5856, %v5936, %v5937
      %v5940 = vld [vmem:[#allocation5 + $0xc] sm:$0x3]
      %v5941 = vsel %vm5817, %v5938, %v5940
      %5942 = vst [vmem:[#allocation5 + $0xc] sm:$0x3] %v5941
      %v5943 = vld [vmem:[#allocation4] sm:$0x8]
      %v5944 = vld [vmem:[#allocation4 + $0x4] sm:$0x1]
      %5946 = vst.sshfl [vmem:[#allocation1] sm:$0xff pattern:$0x75643120] %v5943
      %5948 = vst.sshfl [vmem:[#allocation1 + $0x10] sm:$0xff pattern:$0x75643120] %v5944
      %s5949 = scalar_lea.vmem [#allocation1], 1
      %v5950 = vld [vmem:[%s5949] ss:$2 sm:$0xff]
      %s5951 = scalar_lea.vmem [#allocation1], 16
      %v5952 = vld [vmem:[%s5951] ss:$2 sm:$0xff]
      %v5953 = vshrl.u32 %v5950, 16
      %v5955 = vrot.slane %v5953, 7
      %v5956 = vrot.slane %v5955, 2
      %v5957 = vshrl.u32 %v5952, 16
      %v5959 = vrot.slane %v5957, 7
      %v5960 = vshll.u32 %v5952, 16
      %v5962 = vor.u32 %v5959, %v5960
      %v5963 = vsel %vm5880, %v5956, %v5962
      %v5965 = vld [vmem:[#allocation5 + $0xe] sm:$0x3]
      %v5966 = vsel %vm5817, %v5963, %v5965
      %5967 = vst [vmem:[#allocation5 + $0xe] sm:$0x3] %v5966
      %v5968 = vld [vmem:[#allocation4 + $0x4] sm:$0x3]
      %v5969 = vld [vmem:[#allocation5 + $0x10] sm:$0x3]
      %v5970 = vsel %vm5817, %v5968, %v5969
      %5971 = vst [vmem:[#allocation5 + $0x10] sm:$0x3] %v5970
      %v5972 = vld [vmem:[#allocation5] sm:$0xff]
      %v5973 = vld [vmem:[#allocation5 + $0x8] sm:$0xff]
      %v5974 = vld [vmem:[#allocation5 + $0x10] sm:$0x3]
      %v5975 = vld [vmem:[%s3] sm:$0xf]
      %v5976 = vld [vmem:[%s3 + $0x4] sm:$0xf]
      %v5977 = vld [vmem:[%s3 + $0x8] sm:$0xf]
      %v5978 = vld [vmem:[%s3 + $0xc] sm:$0xf]
      %v5979 = vld [vmem:[%s3 + $0x10] sm:$0xf]
      %v5980 = vld [vmem:[%s3 + $0x14] sm:$0xf]
      %v5981 = vld [vmem:[%s3 + $0x18] sm:$0xf]
      %v5982 = vld [vmem:[%s3 + $0x1c] sm:$0xf]
      %v5983 = vld [vmem:[%s3 + $0x20] sm:$0xf]
      %v5984 = vld [vmem:[%s3 + $0x24] sm:$0xf]
      %v5985 = vld [vmem:[%s3 + $0x28] sm:$0xf]
      %v5986 = vld [vmem:[%s3 + $0x2c] sm:$0xf]
      %v5987 = vld [vmem:[%s3 + $0x30] sm:$0xf]
      %v5988 = vld [vmem:[%s3 + $0x34] sm:$0xf]
      %v5989 = vld [vmem:[%s3 + $0x38] sm:$0xf]
      %v5990 = vld [vmem:[%s3 + $0x3c] sm:$0xf]
      %v5991 = vld [vmem:[%s3 + $0x40] sm:$0xf]
      %v5992 = vld [vmem:[%s3 + $0x44] sm:$0xf]
      %v5993 = vld [vmem:[%s3 + $0x48] sm:$0xf]
      %v5994 = vld [vmem:[%s3 + $0x4c] sm:$0xf]
      %v5995 = vld [vmem:[%s3 + $0x50] sm:$0xf]
      %v5996 = vld [vmem:[%s3 + $0x54] sm:$0xf]
      %v5997 = vld [vmem:[%s3 + $0x58] sm:$0xf]
      %v5998 = vld [vmem:[%s3 + $0x5c] sm:$0xf]
      %v5999 = vld [vmem:[%s3 + $0x60] sm:$0xf]
      %v6000 = vld [vmem:[%s3 + $0x64] sm:$0xf]
      %v6001 = vld [vmem:[%s3 + $0x68] sm:$0xf]
      %v6002 = vld [vmem:[%s3 + $0x6c] sm:$0xf]
      %v6003 = vld [vmem:[%s3 + $0x70] sm:$0xf]
      %v6004 = vld [vmem:[%s3 + $0x74] sm:$0xf]
      %v6005 = vld [vmem:[%s3 + $0x78] sm:$0xf]
      %v6006 = vld [vmem:[%s3 + $0x7c] sm:$0xf]
      %v6007 = vld [vmem:[%s3 + $0x80] sm:$0xf]
      %v6008 = vld [vmem:[%s3 + $0x84] sm:$0xf]
      %v6009 = vld [vmem:[%s3 + $0x88] sm:$0xf]
      %v6010 = vld [vmem:[%s3 + $0x8c] sm:$0xf]
      %v6011 = vld [vmem:[%s3 + $0x90] sm:$0xf]
      %v6012 = vld [vmem:[%s3 + $0x94] sm:$0xf]
      %v6013 = vld [vmem:[%s3 + $0x98] sm:$0xf]
      %v6014 = vld [vmem:[%s3 + $0x9c] sm:$0xf]
      %v6015 = vld [vmem:[%s3 + $0xa0] sm:$0xf]
      %v6016 = vld [vmem:[%s3 + $0xa4] sm:$0xf]
      %v6017 = vld [vmem:[%s3 + $0xa8] sm:$0xf]
      %v6018 = vld [vmem:[%s3 + $0xac] sm:$0xf]
      %v6019 = vld [vmem:[%s3 + $0xb0] sm:$0xf]
      %v6020 = vld [vmem:[%s3 + $0xb4] sm:$0xf]
      %v6021 = vld [vmem:[%s3 + $0xb8] sm:$0xf]
      %v6022 = vld [vmem:[%s3 + $0xbc] sm:$0xf]
      %v6023 = vld [vmem:[%s3 + $0xc0] sm:$0xf]
      %v6024 = vld [vmem:[%s3 + $0xc4] sm:$0xf]
      %v6025 = vld [vmem:[%s3 + $0xc8] sm:$0xf]
      %v6026 = vld [vmem:[%s3 + $0xcc] sm:$0xf]
      %v6027 = vld [vmem:[%s3 + $0xd0] sm:$0xf]
      %v6028 = vld [vmem:[%s3 + $0xd4] sm:$0xf]
      %v6029 = vld [vmem:[%s3 + $0xd8] sm:$0xf]
      %v6030 = vld [vmem:[%s3 + $0xdc] sm:$0xf]
      %v6031 = vld [vmem:[%s3 + $0xe0] sm:$0xf]
      %v6032 = vld [vmem:[%s3 + $0xe4] sm:$0xf]
      %v6033 = vld [vmem:[%s3 + $0xe8] sm:$0xf]
      %v6034 = vld [vmem:[%s3 + $0xec] sm:$0xf]
      %v6035 = vld [vmem:[%s3 + $0xf0] sm:$0xf]
      %v6036 = vld [vmem:[%s3 + $0xf4] sm:$0xf]
      %v6037 = vld [vmem:[%s3 + $0xf8] sm:$0xf]
      %v6038 = vld [vmem:[%s3 + $0xfc] sm:$0xf]
      %v6039 = vld [vmem:[%s3 + $0x100] sm:$0xf]
      %v6040 = vld [vmem:[%s3 + $0x104] sm:$0xf]
      %v6041 = vld [vmem:[%s3 + $0x108] sm:$0xf]
      %v6042 = vld [vmem:[%s3 + $0x10c] sm:$0xf]
      %v6043 = vld [vmem:[%s3 + $0x110] sm:$0xf]
      %v6044 = vld [vmem:[%s3 + $0x114] sm:$0xf]
      %v6045 = vld [vmem:[%s3 + $0x118] sm:$0xf]
      %v6046 = vld [vmem:[%s3 + $0x11c] sm:$0xf]
      %v6047 = vld [vmem:[%s3 + $0x120] sm:$0xf]
      %v6048 = vld [vmem:[%s3 + $0x124] sm:$0xf]
      %v6049 = vld [vmem:[%s3 + $0x128] sm:$0xf]
      %v6050 = vld [vmem:[%s3 + $0x12c] sm:$0xf]
      %v6051 = vld [vmem:[%s3 + $0x130] sm:$0xf]
      %v6052 = vld [vmem:[%s3 + $0x134] sm:$0xf]
      %v6053 = vld [vmem:[%s3 + $0x138] sm:$0xf]
      %v6054 = vld [vmem:[%s3 + $0x13c] sm:$0xf]
      %v6055 = vld [vmem:[%s3 + $0x140] sm:$0xf]
      %v6056 = vld [vmem:[%s3 + $0x144] sm:$0xf]
      %v6057 = vld [vmem:[%s3 + $0x148] sm:$0xf]
      %v6058 = vld [vmem:[%s3 + $0x14c] sm:$0xf]
      %v6059 = vld [vmem:[%s3 + $0x150] sm:$0xf]
      %v6060 = vld [vmem:[%s3 + $0x154] sm:$0xf]
      %v6061 = vld [vmem:[%s3 + $0x158] sm:$0xf]
      %v6062 = vld [vmem:[%s3 + $0x15c] sm:$0xf]
      %v6063 = vld [vmem:[%s3 + $0x160] sm:$0xf]
      %v6064 = vld [vmem:[%s3 + $0x164] sm:$0xf]
      %v6065 = vld [vmem:[%s3 + $0x168] sm:$0xf]
      %v6066 = vld [vmem:[%s3 + $0x16c] sm:$0xf]
      %v6067 = vld [vmem:[%s3 + $0x170] sm:$0xf]
      %v6068 = vld [vmem:[%s3 + $0x174] sm:$0xf]
      %v6069 = vld [vmem:[%s3 + $0x178] sm:$0xf]
      %v6070 = vld [vmem:[%s3 + $0x17c] sm:$0xf]
      %v6071 = vld [vmem:[%s3 + $0x180] sm:$0xf]
      %v6072 = vld [vmem:[%s3 + $0x184] sm:$0xf]
      %v6073 = vld [vmem:[%s3 + $0x188] sm:$0xf]
      %v6074 = vld [vmem:[%s3 + $0x18c] sm:$0xf]
      %v6075 = vld [vmem:[%s3 + $0x190] sm:$0xf]
      %v6076 = vld [vmem:[%s3 + $0x194] sm:$0xf]
      %v6077 = vld [vmem:[%s3 + $0x198] sm:$0xf]
      %v6078 = vld [vmem:[%s3 + $0x19c] sm:$0xf]
      %v6079 = vld [vmem:[%s3 + $0x1a0] sm:$0xf]
      %v6080 = vld [vmem:[%s3 + $0x1a4] sm:$0xf]
      %v6081 = vld [vmem:[%s3 + $0x1a8] sm:$0xf]
      %v6082 = vld [vmem:[%s3 + $0x1ac] sm:$0xf]
      %v6083 = vld [vmem:[%s3 + $0x1b0] sm:$0xf]
      %v6084 = vld [vmem:[%s3 + $0x1b4] sm:$0xf]
      %v6085 = vld [vmem:[%s3 + $0x1b8] sm:$0xf]
      %v6086 = vld [vmem:[%s3 + $0x1bc] sm:$0xf]
      %v6087 = vld [vmem:[%s3 + $0x1c0] sm:$0xf]
      %v6088 = vld [vmem:[%s3 + $0x1c4] sm:$0xf]
      %v6089 = vld [vmem:[%s3 + $0x1c8] sm:$0xf]
      %v6090 = vld [vmem:[%s3 + $0x1cc] sm:$0xf]
      %v6091 = vld [vmem:[%s3 + $0x1d0] sm:$0xf]
      %v6092 = vld [vmem:[%s3 + $0x1d4] sm:$0xf]
      %v6093 = vld [vmem:[%s3 + $0x1d8] sm:$0xf]
      %v6094 = vld [vmem:[%s3 + $0x1dc] sm:$0xf]
      %v6095 = vld [vmem:[%s3 + $0x1e0] sm:$0xf]
      %v6096 = vld [vmem:[%s3 + $0x1e4] sm:$0xf]
      %v6097 = vld [vmem:[%s3 + $0x1e8] sm:$0xf]
      %v6098 = vld [vmem:[%s3 + $0x1ec] sm:$0xf]
      %v6099 = vld [vmem:[%s3 + $0x1f0] sm:$0xf]
      %v6100 = vld [vmem:[%s3 + $0x1f4] sm:$0xf]
      %v6101 = vld [vmem:[%s3 + $0x1f8] sm:$0xf]
      %v6102 = vld [vmem:[%s3 + $0x1fc] sm:$0xf]
      %v6103 = vld [vmem:[%s3 + $0x200] sm:$0xf]
      %v6104 = vld [vmem:[%s3 + $0x204] sm:$0xf]
      %v6105 = vld [vmem:[%s3 + $0x208] sm:$0xf]
      %v6106 = vld [vmem:[%s3 + $0x20c] sm:$0xf]
      %v6107 = vld [vmem:[%s3 + $0x210] sm:$0xf]
      %v6108 = vld [vmem:[%s3 + $0x214] sm:$0xf]
      %v6109 = vld [vmem:[%s3 + $0x218] sm:$0xf]
      %v6110 = vld [vmem:[%s3 + $0x21c] sm:$0xf]
      %v6111 = vld [vmem:[%s3 + $0x220] sm:$0xf]
      %v6112 = vld [vmem:[%s3 + $0x224] sm:$0xf]
      %v6113 = vld [vmem:[%s3 + $0x228] sm:$0xf]
      %v6114 = vld [vmem:[%s3 + $0x22c] sm:$0xf]
      %v6115 = vld [vmem:[%s3 + $0x230] sm:$0xf]
      %v6116 = vld [vmem:[%s3 + $0x234] sm:$0xf]
      %v6117 = vld [vmem:[%s3 + $0x238] sm:$0xf]
      %v6118 = vld [vmem:[%s3 + $0x23c] sm:$0xf]
      %v6119 = vld [vmem:[%s12] sm:$0x1]
      %v6121 = vperm.slane %v6119, 0
      %6124 = vst [vmem:[#allocation1] ss:$4 sm:$0xff] %v5972
      %s6126 = scalar_lea.vmem [#allocation1], 32
      %6127 = vst [vmem:[%s6126] ss:$4 sm:$0xff] %v5973
      %v6128 = vld.sshfl [vmem:[#allocation1] sm:$0xff pattern:$0x73625140]
      %v6129 = vld.sshfl [vmem:[#allocation1 + $0x8] sm:$0xff pattern:$0x73625140]
      %v6130 = vld.sshfl [vmem:[#allocation1 + $0x10] sm:$0xff pattern:$0x73625140]
      %v6131 = vld.sshfl [vmem:[#allocation1 + $0x18] sm:$0xff pattern:$0x73625140]
      %v6132 = vld.sshfl [vmem:[#allocation1 + $0x20] sm:$0xff pattern:$0x73625140]
      %v6133 = vld.sshfl [vmem:[#allocation1 + $0x28] sm:$0xff pattern:$0x73625140]
      %v6134 = vld.sshfl [vmem:[#allocation1 + $0x30] sm:$0xff pattern:$0x73625140]
      %v6135 = vld.sshfl [vmem:[#allocation1 + $0x38] sm:$0xff pattern:$0x73625140]
      %6137 = vst [vmem:[#allocation1] ss:$4 sm:$0xff] %v5974
      %v6138 = vld.sshfl [vmem:[#allocation1] sm:$0xff pattern:$0x73625140]
      %v6292 = vunpack.c.l.b16 %v5975
      %v6293 = vunpack.c.l.b16 %v5976
      %v6294 = vunpack.c.l.b16 %v5977
      %v6295 = vunpack.c.l.b16 %v5978
      %v6296 = vunpack.c.l.b16 %v5979
      %v6297 = vunpack.c.l.b16 %v5980
      %v6298 = vunpack.c.l.b16 %v5981
      %v6299 = vunpack.c.l.b16 %v5982
      %v6300 = vunpack.c.l.b16 %v5983
      %v6301 = vunpack.c.l.b16 %v5984
      %v6302 = vunpack.c.l.b16 %v5985
      %v6303 = vunpack.c.l.b16 %v5986
      %v6304 = vunpack.c.l.b16 %v5987
      %v6305 = vunpack.c.l.b16 %v5988
      %v6306 = vunpack.c.l.b16 %v5989
      %v6307 = vunpack.c.l.b16 %v5990
      %v6308 = vunpack.c.l.b16 %v5991
      %v6309 = vunpack.c.l.b16 %v5992
      %v6310 = vunpack.c.l.b16 %v5993
      %v6311 = vunpack.c.l.b16 %v5994
      %v6312 = vunpack.c.l.b16 %v5995
      %v6313 = vunpack.c.l.b16 %v5996
      %v6314 = vunpack.c.l.b16 %v5997
      %v6315 = vunpack.c.l.b16 %v5998
      %v6316 = vunpack.c.l.b16 %v5999
      %v6317 = vunpack.c.l.b16 %v6000
      %v6318 = vunpack.c.l.b16 %v6001
      %v6319 = vunpack.c.l.b16 %v6002
      %v6320 = vunpack.c.l.b16 %v6003
      %v6321 = vunpack.c.l.b16 %v6004
      %v6322 = vunpack.c.l.b16 %v6005
      %v6323 = vunpack.c.l.b16 %v6006
      %v6324 = vunpack.c.l.b16 %v6007
      %v6325 = vunpack.c.l.b16 %v6008
      %v6326 = vunpack.c.l.b16 %v6009
      %v6327 = vunpack.c.l.b16 %v6010
      %v6328 = vunpack.c.l.b16 %v6011
      %v6329 = vunpack.c.l.b16 %v6012
      %v6330 = vunpack.c.l.b16 %v6013
      %v6331 = vunpack.c.l.b16 %v6014
      %v6332 = vunpack.c.l.b16 %v6015
      %v6333 = vunpack.c.l.b16 %v6016
      %v6334 = vunpack.c.l.b16 %v6017
      %v6335 = vunpack.c.l.b16 %v6018
      %v6336 = vunpack.c.l.b16 %v6019
      %v6337 = vunpack.c.l.b16 %v6020
      %v6338 = vunpack.c.l.b16 %v6021
      %v6339 = vunpack.c.l.b16 %v6022
      %v6340 = vunpack.c.l.b16 %v6023
      %v6341 = vunpack.c.l.b16 %v6024
      %v6342 = vunpack.c.l.b16 %v6025
      %v6343 = vunpack.c.l.b16 %v6026
      %v6344 = vunpack.c.l.b16 %v6027
      %v6345 = vunpack.c.l.b16 %v6028
      %v6346 = vunpack.c.l.b16 %v6029
      %v6347 = vunpack.c.l.b16 %v6030
      %v6348 = vunpack.c.l.b16 %v6031
      %v6349 = vunpack.c.l.b16 %v6032
      %v6350 = vunpack.c.l.b16 %v6033
      %v6351 = vunpack.c.l.b16 %v6034
      %v6352 = vunpack.c.l.b16 %v6035
      %v6353 = vunpack.c.l.b16 %v6036
      %v6354 = vunpack.c.l.b16 %v6037
      %v6355 = vunpack.c.l.b16 %v6038
      %v6356 = vunpack.c.l.b16 %v6039
      %v6357 = vunpack.c.l.b16 %v6040
      %v6358 = vunpack.c.l.b16 %v6041
      %v6359 = vunpack.c.l.b16 %v6042
      %v6360 = vunpack.c.l.b16 %v6043
      %v6361 = vunpack.c.l.b16 %v6044
      %v6362 = vunpack.c.l.b16 %v6045
      %v6363 = vunpack.c.l.b16 %v6046
      %v6364 = vunpack.c.l.b16 %v6047
      %v6365 = vunpack.c.l.b16 %v6048
      %v6366 = vunpack.c.l.b16 %v6049
      %v6367 = vunpack.c.l.b16 %v6050
      %v6368 = vunpack.c.l.b16 %v6051
      %v6369 = vunpack.c.l.b16 %v6052
      %v6370 = vunpack.c.l.b16 %v6053
      %v6371 = vunpack.c.l.b16 %v6054
      %v6372 = vunpack.c.l.b16 %v6055
      %v6373 = vunpack.c.l.b16 %v6056
      %v6374 = vunpack.c.l.b16 %v6057
      %v6375 = vunpack.c.l.b16 %v6058
      %v6376 = vunpack.c.l.b16 %v6059
      %v6377 = vunpack.c.l.b16 %v6060
      %v6378 = vunpack.c.l.b16 %v6061
      %v6379 = vunpack.c.l.b16 %v6062
      %v6380 = vunpack.c.l.b16 %v6063
      %v6381 = vunpack.c.l.b16 %v6064
      %v6382 = vunpack.c.l.b16 %v6065
      %v6383 = vunpack.c.l.b16 %v6066
      %v6384 = vunpack.c.l.b16 %v6067
      %v6385 = vunpack.c.l.b16 %v6068
      %v6386 = vunpack.c.l.b16 %v6069
      %v6387 = vunpack.c.l.b16 %v6070
      %v6388 = vunpack.c.l.b16 %v6071
      %v6389 = vunpack.c.l.b16 %v6072
      %v6390 = vunpack.c.l.b16 %v6073
      %v6391 = vunpack.c.l.b16 %v6074
      %v6392 = vunpack.c.l.b16 %v6075
      %v6393 = vunpack.c.l.b16 %v6076
      %v6394 = vunpack.c.l.b16 %v6077
      %v6395 = vunpack.c.l.b16 %v6078
      %v6396 = vunpack.c.l.b16 %v6079
      %v6397 = vunpack.c.l.b16 %v6080
      %v6398 = vunpack.c.l.b16 %v6081
      %v6399 = vunpack.c.l.b16 %v6082
      %v6400 = vunpack.c.l.b16 %v6083
      %v6401 = vunpack.c.l.b16 %v6084
      %v6402 = vunpack.c.l.b16 %v6085
      %v6403 = vunpack.c.l.b16 %v6086
      %v6404 = vunpack.c.l.b16 %v6087
      %v6405 = vunpack.c.l.b16 %v6088
      %v6406 = vunpack.c.l.b16 %v6089
      %v6407 = vunpack.c.l.b16 %v6090
      %v6408 = vunpack.c.l.b16 %v6091
      %v6409 = vunpack.c.l.b16 %v6092
      %v6410 = vunpack.c.l.b16 %v6093
      %v6411 = vunpack.c.l.b16 %v6094
      %v6412 = vunpack.c.l.b16 %v6095
      %v6413 = vunpack.c.l.b16 %v6096
      %v6414 = vunpack.c.l.b16 %v6097
      %v6415 = vunpack.c.l.b16 %v6098
      %v6416 = vunpack.c.l.b16 %v6099
      %v6417 = vunpack.c.l.b16 %v6100
      %v6418 = vunpack.c.l.b16 %v6101
      %v6419 = vunpack.c.l.b16 %v6102
      %v6420 = vunpack.c.l.b16 %v6103
      %v6421 = vunpack.c.l.b16 %v6104
      %v6422 = vunpack.c.l.b16 %v6105
      %v6423 = vunpack.c.l.b16 %v6106
      %v6424 = vunpack.c.l.b16 %v6107
      %v6425 = vunpack.c.l.b16 %v6108
      %v6426 = vunpack.c.l.b16 %v6109
      %v6427 = vunpack.c.l.b16 %v6110
      %v6428 = vunpack.c.l.b16 %v6111
      %v6429 = vunpack.c.l.b16 %v6112
      %v6430 = vunpack.c.l.b16 %v6113
      %v6431 = vunpack.c.l.b16 %v6114
      %v6432 = vunpack.c.l.b16 %v6115
      %v6433 = vunpack.c.l.b16 %v6116
      %v6434 = vunpack.c.l.b16 %v6117
      %v6435 = vunpack.c.l.b16 %v6118
      %v6436 = vpack.c.b16 %v6293, %v6292
      %v6437 = vpack.c.b16 %v6295, %v6294
      %v6438 = vpack.c.b16 %v6297, %v6296
      %v6439 = vpack.c.b16 %v6299, %v6298
      %v6440 = vpack.c.b16 %v6301, %v6300
      %v6441 = vpack.c.b16 %v6303, %v6302
      %v6442 = vpack.c.b16 %v6305, %v6304
      %v6443 = vpack.c.b16 %v6307, %v6306
      %v6444 = vpack.c.b16 %v6309, %v6308
      %v6445 = vpack.c.b16 %v6311, %v6310
      %v6446 = vpack.c.b16 %v6313, %v6312
      %v6447 = vpack.c.b16 %v6315, %v6314
      %v6448 = vpack.c.b16 %v6317, %v6316
      %v6449 = vpack.c.b16 %v6319, %v6318
      %v6450 = vpack.c.b16 %v6321, %v6320
      %v6451 = vpack.c.b16 %v6323, %v6322
      %v6452 = vpack.c.b16 %v6325, %v6324
      %v6453 = vpack.c.b16 %v6327, %v6326
      %v6454 = vpack.c.b16 %v6329, %v6328
      %v6455 = vpack.c.b16 %v6331, %v6330
      %v6456 = vpack.c.b16 %v6333, %v6332
      %v6457 = vpack.c.b16 %v6335, %v6334
      %v6458 = vpack.c.b16 %v6337, %v6336
      %v6459 = vpack.c.b16 %v6339, %v6338
      %v6460 = vpack.c.b16 %v6341, %v6340
      %v6461 = vpack.c.b16 %v6343, %v6342
      %v6462 = vpack.c.b16 %v6345, %v6344
      %v6463 = vpack.c.b16 %v6347, %v6346
      %v6464 = vpack.c.b16 %v6349, %v6348
      %v6465 = vpack.c.b16 %v6351, %v6350
      %v6466 = vpack.c.b16 %v6353, %v6352
      %v6467 = vpack.c.b16 %v6355, %v6354
      %v6468 = vpack.c.b16 %v6357, %v6356
      %v6469 = vpack.c.b16 %v6359, %v6358
      %v6470 = vpack.c.b16 %v6361, %v6360
      %v6471 = vpack.c.b16 %v6363, %v6362
      %v6472 = vpack.c.b16 %v6365, %v6364
      %v6473 = vpack.c.b16 %v6367, %v6366
      %v6474 = vpack.c.b16 %v6369, %v6368
      %v6475 = vpack.c.b16 %v6371, %v6370
      %v6476 = vpack.c.b16 %v6373, %v6372
      %v6477 = vpack.c.b16 %v6375, %v6374
      %v6478 = vpack.c.b16 %v6377, %v6376
      %v6479 = vpack.c.b16 %v6379, %v6378
      %v6480 = vpack.c.b16 %v6381, %v6380
      %v6481 = vpack.c.b16 %v6383, %v6382
      %v6482 = vpack.c.b16 %v6385, %v6384
      %v6483 = vpack.c.b16 %v6387, %v6386
      %v6484 = vpack.c.b16 %v6389, %v6388
      %v6485 = vpack.c.b16 %v6391, %v6390
      %v6486 = vpack.c.b16 %v6393, %v6392
      %v6487 = vpack.c.b16 %v6395, %v6394
      %v6488 = vpack.c.b16 %v6397, %v6396
      %v6489 = vpack.c.b16 %v6399, %v6398
      %v6490 = vpack.c.b16 %v6401, %v6400
      %v6491 = vpack.c.b16 %v6403, %v6402
      %v6492 = vpack.c.b16 %v6405, %v6404
      %v6493 = vpack.c.b16 %v6407, %v6406
      %v6494 = vpack.c.b16 %v6409, %v6408
      %v6495 = vpack.c.b16 %v6411, %v6410
      %v6496 = vpack.c.b16 %v6413, %v6412
      %v6497 = vpack.c.b16 %v6415, %v6414
      %v6498 = vpack.c.b16 %v6417, %v6416
      %v6499 = vpack.c.b16 %v6419, %v6418
      %v6500 = vpack.c.b16 %v6421, %v6420
      %v6501 = vpack.c.b16 %v6423, %v6422
      %v6502 = vpack.c.b16 %v6425, %v6424
      %v6503 = vpack.c.b16 %v6427, %v6426
      %v6504 = vpack.c.b16 %v6429, %v6428
      %v6505 = vpack.c.b16 %v6431, %v6430
      %v6506 = vpack.c.b16 %v6433, %v6432
      %v6507 = vpack.c.b16 %v6435, %v6434
      %6580 = vmatpush.bf16.msra.mxu0 %v6443
      %6581 = vmatpush.bf16.msra.mxu0 %v6442
      %6582 = vmatpush.bf16.msra.mxu0 %v6441
      %6583 = vmatpush.bf16.msra.mxu0 %v6440
      %6584 = vmatpush.bf16.msra.mxu0 %v6439
      %6585 = vmatpush.bf16.msra.mxu0 %v6438
      %6586 = vmatpush.bf16.msra.mxu0 %v6437
      %6587 = vmatpush.bf16.msra.mxu0 %v6436
      %6588 = vmatmul.bf16.gmra.mxu0 %v6128
      %v6589 = vpop.f32.mrf.mxu0
      %v6590 = vadd.f32 %v6121, %v6589
      %v6591 = vpop.f32.mrf.mxu0
      %6592 = vdwg.mxu0
      %6593 = vmatpush.bf16.msra.mxu0 %v6451
      %6594 = vmatpush.bf16.msra.mxu0 %v6450
      %6595 = vmatpush.bf16.msra.mxu0 %v6449
      %6596 = vmatpush.bf16.msra.mxu0 %v6448
      %6597 = vmatpush.bf16.msra.mxu0 %v6447
      %6598 = vmatpush.bf16.msra.mxu0 %v6446
      %6599 = vmatpush.bf16.msra.mxu0 %v6445
      %6600 = vmatpush.bf16.msra.mxu0 %v6444
      %6601 = vmatmul.bf16.gmra.mxu0 %v6129
      %v6602 = vpop.f32.mrf.mxu0
      %v6603 = vadd.f32 %v6590, %v6602
      %v6604 = vpop.f32.mrf.mxu0
      %6605 = vdwg.mxu0
      %6606 = vmatpush.bf16.msra.mxu0 %v6459
      %6607 = vmatpush.bf16.msra.mxu0 %v6458
      %6608 = vmatpush.bf16.msra.mxu0 %v6457
      %6609 = vmatpush.bf16.msra.mxu0 %v6456
      %6610 = vmatpush.bf16.msra.mxu0 %v6455
      %6611 = vmatpush.bf16.msra.mxu0 %v6454
      %6612 = vmatpush.bf16.msra.mxu0 %v6453
      %6613 = vmatpush.bf16.msra.mxu0 %v6452
      %6614 = vmatmul.bf16.gmra.mxu0 %v6130
      %v6615 = vpop.f32.mrf.mxu0
      %v6616 = vadd.f32 %v6603, %v6615
      %v6617 = vpop.f32.mrf.mxu0
      %6618 = vdwg.mxu0
      %6619 = vmatpush.bf16.msra.mxu0 %v6467
      %6620 = vmatpush.bf16.msra.mxu0 %v6466
      %6621 = vmatpush.bf16.msra.mxu0 %v6465
      %6622 = vmatpush.bf16.msra.mxu0 %v6464
      %6623 = vmatpush.bf16.msra.mxu0 %v6463
      %6624 = vmatpush.bf16.msra.mxu0 %v6462
      %6625 = vmatpush.bf16.msra.mxu0 %v6461
      %6626 = vmatpush.bf16.msra.mxu0 %v6460
      %6627 = vmatmul.bf16.gmra.mxu0 %v6131
      %v6628 = vpop.f32.mrf.mxu0
      %v6629 = vadd.f32 %v6616, %v6628
      %v6630 = vpop.f32.mrf.mxu0
      %6631 = vdwg.mxu0
      %6632 = vmatpush.bf16.msra.mxu0 %v6475
      %6633 = vmatpush.bf16.msra.mxu0 %v6474
      %6634 = vmatpush.bf16.msra.mxu0 %v6473
      %6635 = vmatpush.bf16.msra.mxu0 %v6472
      %6636 = vmatpush.bf16.msra.mxu0 %v6471
      %6637 = vmatpush.bf16.msra.mxu0 %v6470
      %6638 = vmatpush.bf16.msra.mxu0 %v6469
      %6639 = vmatpush.bf16.msra.mxu0 %v6468
      %6640 = vmatmul.bf16.gmra.mxu0 %v6132
      %v6641 = vpop.f32.mrf.mxu0
      %v6642 = vadd.f32 %v6629, %v6641
      %v6643 = vpop.f32.mrf.mxu0
      %6644 = vdwg.mxu0
      %6645 = vmatpush.bf16.msra.mxu0 %v6483
      %6646 = vmatpush.bf16.msra.mxu0 %v6482
      %6647 = vmatpush.bf16.msra.mxu0 %v6481
      %6648 = vmatpush.bf16.msra.mxu0 %v6480
      %6649 = vmatpush.bf16.msra.mxu0 %v6479
      %6650 = vmatpush.bf16.msra.mxu0 %v6478
      %6651 = vmatpush.bf16.msra.mxu0 %v6477
      %6652 = vmatpush.bf16.msra.mxu0 %v6476
      %6653 = vmatmul.bf16.gmra.mxu0 %v6133
      %v6654 = vpop.f32.mrf.mxu0
      %v6655 = vadd.f32 %v6642, %v6654
      %v6656 = vpop.f32.mrf.mxu0
      %6657 = vdwg.mxu0
      %6658 = vmatpush.bf16.msra.mxu0 %v6491
      %6659 = vmatpush.bf16.msra.mxu0 %v6490
      %6660 = vmatpush.bf16.msra.mxu0 %v6489
      %6661 = vmatpush.bf16.msra.mxu0 %v6488
      %6662 = vmatpush.bf16.msra.mxu0 %v6487
      %6663 = vmatpush.bf16.msra.mxu0 %v6486
      %6664 = vmatpush.bf16.msra.mxu0 %v6485
      %6665 = vmatpush.bf16.msra.mxu0 %v6484
      %6666 = vmatmul.bf16.gmra.mxu0 %v6134
      %v6667 = vpop.f32.mrf.mxu0
      %v6668 = vadd.f32 %v6655, %v6667
      %v6669 = vpop.f32.mrf.mxu0
      %6670 = vdwg.mxu0
      %6671 = vmatpush.bf16.msra.mxu0 %v6499
      %6672 = vmatpush.bf16.msra.mxu0 %v6498
      %6673 = vmatpush.bf16.msra.mxu0 %v6497
      %6674 = vmatpush.bf16.msra.mxu0 %v6496
      %6675 = vmatpush.bf16.msra.mxu0 %v6495
      %6676 = vmatpush.bf16.msra.mxu0 %v6494
      %6677 = vmatpush.bf16.msra.mxu0 %v6493
      %6678 = vmatpush.bf16.msra.mxu0 %v6492
      %6679 = vmatmul.bf16.gmra.mxu0 %v6135
      %v6680 = vpop.f32.mrf.mxu0
      %v6681 = vadd.f32 %v6668, %v6680
      %v6682 = vpop.f32.mrf.mxu0
      %6683 = vdwg.mxu0
      %6684 = vmatpush.bf16.msra.mxu0 %v6507
      %6685 = vmatpush.bf16.msra.mxu0 %v6506
      %6686 = vmatpush.bf16.msra.mxu0 %v6505
      %6687 = vmatpush.bf16.msra.mxu0 %v6504
      %6688 = vmatpush.bf16.msra.mxu0 %v6503
      %6689 = vmatpush.bf16.msra.mxu0 %v6502
      %6690 = vmatpush.bf16.msra.mxu0 %v6501
      %6691 = vmatpush.bf16.msra.mxu0 %v6500
      %6692 = vmatmul.bf16.gmra.mxu0 %v6138
      %v6693 = vpop.f32.mrf.mxu0
      %v6694 = vadd.f32 %v6681, %v6693
      %v6695 = vpop.f32.mrf.mxu0
      %6696 = vdwg.mxu0
      %v6697 = vmul.f32 %v6694, 0.2
      %v6698 = vmax.f32 %v6694, %v6697
      %vm6699 = vcmask 370688
      %6700 = vst.msk [vmem:[%s517] sm:$0x7] %vm6699, %v6698
      %p6701 = scmp.lt.s32.totalorder %s27, 1
      %s6702 = scalar_select %p6701, %s27, 1
      %s6703 = smul.addr %s6702, 72
      %s6704 = smul.addr %s6703, 8
      %s6705 = scalar_lea.vmem %s13, %s6704
      %p6706 = scmp.lt.s32.totalorder %s27, 1
      %s6707 = scalar_select %p6706, %s27, 1
      %s6708 = smul.addr %s6707, 12
      %s6709 = smul.addr %s6708, 8
      %s6710 = scalar_lea.vmem %s14, %s6709
      %p6711 = scmp.lt.s32.totalorder %s27, 1
      %s6712 = scalar_select %p6711, %s27, 1
      %s6713 = smul.addr %s6712, 4
      %s6714 = scalar_lea.vmem %s15, %s6713
      // Predicated region
      $region73: #{metric_forward.1} parent=71 // pred_check
        %p6715 = pneg %p323
      $region74: #{metric_forward.1} parent=71 // pred_check_branch
        %6717 = sbr.rel (%p6715) target = $region76
      $region75: #{metric_forward.1} parent=71 // pred_region
        _
      $region76: #{metric_forward.1} parent=71 // pred_fallthru
        _
      // Predicated region
      $region77: #{metric_forward.1} parent=71 // pred_check
        %p6718 = pneg %p349
      $region78: #{metric_forward.1} parent=71 // pred_check_branch
        %6720 = sbr.rel (%p6718) target = $region80
      $region79: #{metric_forward.1} parent=71 // pred_region
        _
      $region80: #{metric_forward.1} parent=71 // pred_fallthru
        _
      // Predicated region
      $region81: #{metric_forward.1} parent=71 // pred_check
        %p6721 = pneg %p375
      $region82: #{metric_forward.1} parent=71 // pred_check_branch
        %6723 = sbr.rel (%p6721) target = $region84
      $region83: #{metric_forward.1} parent=71 // pred_region
        _
      $region84: #{metric_forward.1} parent=71 // pred_fallthru
        _
    $region72: #{metric_forward.1} parent=5 // pred_fallthru
      _
    %p6724 = scmp.le.s32.totalorder 2, %s22
    // Predicated region
    $region85: #{metric_forward.1} parent=5 // pred_check
      %p6725 = pneg %p6724
    $region86: #{metric_forward.1} parent=5 // pred_check_branch
      %6727 = sbr.rel (%p6725) target = $region88
    $region87: #{metric_forward.1} parent=5 // pred_region
      %s6728 = ssub.s32 %s22, 2
      // Predicated region
      $region89: #{metric_forward.1} parent=87 // pred_check
        %p6729 = pneg %p329
      $region90: #{metric_forward.1} parent=87 // pred_check_branch
        %6731 = sbr.rel (%p6729) target = $region92
      $region91: #{metric_forward.1} parent=87 // pred_region
        %p6732 = scmp.lt.s32.totalorder %s28, 1
        %s6733 = scalar_select %p6732, %s28, 1
        %s6734 = smul.addr %s6733, 72
        %s6735 = smul.addr %s6734, 8
        %s6736 = scalar_lea.vmem %s13, %s6735
      $region92: #{metric_forward.1} parent=87 // pred_fallthru
        _
      // Predicated region
      $region93: #{metric_forward.1} parent=87 // pred_check
        %p6737 = pneg %p355
      $region94: #{metric_forward.1} parent=87 // pred_check_branch
        %6739 = sbr.rel (%p6737) target = $region96
      $region95: #{metric_forward.1} parent=87 // pred_region
        %p6740 = scmp.lt.s32.totalorder %s28, 1
        %s6741 = scalar_select %p6740, %s28, 1
        %s6742 = smul.addr %s6741, 12
        %s6743 = smul.addr %s6742, 8
        %s6744 = scalar_lea.vmem %s14, %s6743
      $region96: #{metric_forward.1} parent=87 // pred_fallthru
        _
      // Predicated region
      $region97: #{metric_forward.1} parent=87 // pred_check
        %p6745 = pneg %p381
      $region98: #{metric_forward.1} parent=87 // pred_check_branch
        %6747 = sbr.rel (%p6745) target = $region100
      $region99: #{metric_forward.1} parent=87 // pred_region
        %p6748 = scmp.lt.s32.totalorder %s28, 1
        %s6749 = scalar_select %p6748, %s28, 1
        %s6750 = smul.addr %s6749, 4
        %s6751 = scalar_lea.vmem %s15, %s6750
      $region100: #{metric_forward.1} parent=87 // pred_fallthru
        _
    $region88: #{metric_forward.1} parent=5 // pred_fallthru
      _
  $region6: #{metric_forward.1} parent=0 // loop_footer
    %s26 = sadd.s32 1, %s22
  $region7: #{metric_forward.1} parent=0 // loop_footer_branch
    %21 = sbr.rel target = $region3
  $region8: #{metric_forward.1} parent=0 // loop_exit
    _

</llo_original>
